<compile_context>
chip_gen: v6e
topology: v6e:2x2x1
jax: 0.10.0
libtpu: 0.0.40
codegen_flags: <defaults>
</compile_context>

<pallas_src>
import functools

import numpy as np
import jax
import jax.numpy as jnp
from jax import lax
from jax.experimental import pallas as pl
from jax.experimental.pallas import tpu as pltpu

WINDOW_SIZE = 11


# --------------------------------------------------------------------------
# Parameter setup (deterministic, mirrors create_window / gaussian)
# --------------------------------------------------------------------------
def _gaussian_1d(window_size):
    sigma = window_size / 6.0
    x = np.arange(window_size, dtype=np.float64)
    g = np.exp(-((x - window_size // 2) ** 2) / (2.0 * sigma ** 2))
    return (g / g.sum()).astype(np.float32)


def _band_matrix(n, g):
    """B[i, j] = g[j - i + pad]: zero-padded 'same' 1D conv along a full axis."""
    ws = g.shape[0]
    p = ws // 2
    i = np.arange(n)[:, None]
    j = np.arange(n)[None, :]
    d = j - i + p
    valid = (d >= 0) & (d < ws)
    return np.where(valid, g[np.clip(d, 0, ws - 1)], 0.0).astype(np.float32)


def _band_halo_matrix(t, rel, g):
    """B[r, c] = g[rel[c] - r + pad]: halo-row contribution to output row r."""
    ws = g.shape[0]
    p = ws // 2
    r = np.arange(t)[:, None]
    q = np.asarray(rel)[None, :]
    d = q - r + p
    valid = (d >= 0) & (d < ws)
    return np.where(valid, g[np.clip(d, 0, ws - 1)], 0.0).astype(np.float32)


def _pick_tile_h(H, max_tile=256):
    """Largest row tile <= max_tile that divides H and keeps 8-row alignment."""
    if H <= max_tile:
        return H
    for t in range(max_tile, 7, -1):
        if H % t == 0 and t % 8 == 0:
            return t
    return H


# --------------------------------------------------------------------------
# Pallas kernel
# --------------------------------------------------------------------------
def _mef_ssim_kernel(out_main_ref, out_halo_ref, bunch_main_ref, bunch_halo_ref,
                     bhm_ref, bhh_ref, bwt_ref, part_ref,
                     muX_s, sigX_s, best_sig, best_cs,
                     *, C2, inv_C):
    # grid = (row_tiles, K); k is the exposure index (inner, "arbitrary") axis.
    k = pl.program_id(1)
    T, W = muX_s.shape
    S = out_halo_ref.shape[1]                 # halo-strip rows (8-aligned)
    bhm = bhm_ref[...]                        # (T, T) vertical band (in-tile rows)
    bhh = bhh_ref[...]                        # (T, S) vertical band (halo rows)
    bwt = bwt_ref[...]                        # (W, W) horizontal band (transposed)

    def blur(mains, halos):
        # Batched separable 11x11 zero-padded Gaussian blur.  All planes go
        # through ONE horizontal MXU matmul; the vertical pass is a main-band
        # plus halo-band matmul, so every slice/concat is 8-sublane aligned.
        n = len(mains)
        rows = jnp.concatenate(mains + halos, axis=0)            # (n*T + n*S, W)
        hz = jnp.dot(rows, bwt, preferred_element_type=jnp.float32)
        if n == 1:
            mcols, hcols = hz[:T], hz[T:]
        else:
            mcols = jnp.concatenate(
                [hz[b * T:(b + 1) * T] for b in range(n)], axis=1)     # (T, n*W)
            off = n * T
            hcols = jnp.concatenate(
                [hz[off + b * S:off + (b + 1) * S] for b in range(n)],
                axis=1)                                                 # (S, n*W)
        vt = (jnp.dot(bhm, mcols, preferred_element_type=jnp.float32)
              + jnp.dot(bhh, hcols, preferred_element_type=jnp.float32))
        return [vt[:, b * W:(b + 1) * W] for b in range(n)]

    xm = out_main_ref[...]                                       # (C, T, W)
    xh = out_halo_ref[...]                                       # (C, S, W)

    @pl.when(k == 0)
    def _init():
        # Fused-image statistics are computed once per row tile and kept in
        # VMEM scratch across the K exposures.
        xs_m = jnp.sum(xm, axis=0) * inv_C
        x2_m = jnp.sum(xm * xm, axis=0) * inv_C
        xs_h = jnp.sum(xh, axis=0) * inv_C
        x2_h = jnp.sum(xh * xh, axis=0) * inv_C
        muX, eX2 = blur([xs_m, x2_m], [xs_h, x2_h])
        muX_s[...] = muX
        sigX_s[...] = eX2 - muX * muX
        best_sig[...] = jnp.full((T, W), -jnp.inf, jnp.float32)
        best_cs[...] = jnp.zeros((T, W), jnp.float32)

    # Per-exposure statistics for this row tile.
    ym = bunch_main_ref[...]                                     # (C, T, W)
    yh = bunch_halo_ref[...]                                     # (C, S, W)
    ys_m = jnp.sum(ym, axis=0) * inv_C
    y2_m = jnp.sum(ym * ym, axis=0) * inv_C
    xy_m = jnp.sum(xm * ym, axis=0) * inv_C
    ys_h = jnp.sum(yh, axis=0) * inv_C
    y2_h = jnp.sum(yh * yh, axis=0) * inv_C
    xy_h = jnp.sum(xh * yh, axis=0) * inv_C
    muY, eY2, eXY = blur([ys_m, y2_m, xy_m], [ys_h, y2_h, xy_h])

    muX = muX_s[...]
    sigY = eY2 - muY * muY
    sigXY = eXY - muX * muY
    # Divide -> EUP approximate reciprocal (frees VALU slots).
    cs = (2.0 * sigXY + C2) * pl.reciprocal(
        jnp.maximum(sigX_s[...] + sigY + C2, 1e-6), approx=True)

    # Running per-pixel argmax of sigmaY_sq over exposures (== torch.max +
    # gather; strict '>' keeps the first maximal exposure on ties).
    take = sigY > best_sig[...]
    best_cs[...] = jnp.where(take, cs, best_cs[...])
    best_sig[...] = jnp.where(take, sigY, best_sig[...])

    @pl.when(k == pl.num_programs(1) - 1)
    def _finalize():
        # is_lum=False (module default): l_map == 1.0, levels=1, beta=[1]
        #   => score = mean(cs_map); emit this tile's partial sum.
        part_ref[...] = jnp.zeros((8, 128), jnp.float32) + jnp.sum(best_cs[...])


# --------------------------------------------------------------------------
# Wrapper
# --------------------------------------------------------------------------
def mef_msssim_pallas(output, bunch, window_size=WINDOW_SIZE, c1=0.01, c2=0.03,
                      tile_h=None):
    """output: (1, C, H, W) f32, bunch: (K, C, H, W) f32 (NCHW like torch)."""
    output = jnp.asarray(output, jnp.float32)
    bunch = jnp.asarray(bunch, jnp.float32)
    assert output.ndim == 4 and output.shape[0] == 1
    K, C, H, W = bunch.shape
    assert output.shape[1:] == (C, H, W)
    pad = window_size // 2

    T = tile_h if (tile_h is not None and H % tile_h == 0
                   and (tile_h == H or tile_h % 8 == 0)) else _pick_tile_h(H)
    nt = H // T
    extra = (-(2 * pad)) % 8            # align the halo strip to 8 sublanes
    S = 2 * pad + extra                 # rows carried in the halo-strip arrays

    g = _gaussian_1d(window_size)
    # Halo-strip relative rows: `pad` rows above / below each T-row tile plus
    # alignment rows that receive zero weight in the halo band matrix.
    rel = np.concatenate([np.arange(-pad, 0), T + np.arange(pad + extra)])
    bhm = jnp.asarray(_band_matrix(T, g))             # (T, T) vertical, in-tile
    bhh = jnp.asarray(_band_halo_matrix(T, rel, g))   # (T, S) vertical, halo rows
    bwt = jnp.asarray(_band_matrix(W, g).T)           # (W, W) horizontal blur

    # Gather halo strips in the wrapper; rows outside the image are zeroed,
    # reproducing the zero-padded 'same' convolution at the borders.
    rows = (np.arange(nt) * T)[:, None] + rel[None, :]                 # (nt, S)
    mask = jnp.asarray(((rows >= 0) & (rows < H)).astype(np.float32))
    rows_j = jnp.asarray(np.clip(rows, 0, H - 1))

    out_chw = output[0]
    out_halo = jnp.transpose(out_chw[:, rows_j, :], (1, 0, 2, 3)) \
        * mask[:, None, :, None]                                       # (nt, C, S, W)
    bunch_halo = jnp.transpose(bunch[:, :, rows_j, :], (2, 0, 1, 3, 4)) \
        * mask[:, None, None, :, None]                                 # (nt, K, C, S, W)

    kernel = functools.partial(_mef_ssim_kernel, C2=float(c2) ** 2, inv_C=1.0 / C)

    n_planes = 2 + 3 * K
    mm_flops = 2 * nt * n_planes * ((T + S) * W * W + T * (T + S) * W)
    cost = pl.CostEstimate(
        flops=int(mm_flops + 12 * (K + 1) * C * H * W),
        transcendentals=int(K * H * W),
        bytes_accessed=int(4 * ((K + 1) * C * (H + nt * S) * W
                                + T * T + T * S + W * W + nt * 8 * 128)))

    vmem_est = 4 * (4 * C * (T + S) * W          # double-buffered out/bunch blocks
                    + T * T + T * S + W * W      # band matrices
                    + 4 * T * W                  # scratch accumulators
                    + 16 * (T + S) * W)          # concat / matmul temporaries
    vmem_limit = int(min(64 * 1024 * 1024, max(32 * 1024 * 1024, vmem_est)))

    part = pl.pallas_call(
        kernel,
        out_shape=jax.ShapeDtypeStruct((nt, 8, 128), jnp.float32),
        grid=(nt, K),
        in_specs=[
            pl.BlockSpec((C, T, W), lambda i, k: (0, i, 0)),              # fused tile
            pl.BlockSpec((None, C, S, W), lambda i, k: (i, 0, 0, 0)),     # fused halo
            pl.BlockSpec((None, C, T, W), lambda i, k: (k, 0, i, 0)),     # exposure tile
            pl.BlockSpec((None, None, C, S, W),
                         lambda i, k: (i, k, 0, 0, 0)),                   # exposure halo
            pl.BlockSpec((T, T), lambda i, k: (0, 0)),                    # vertical band, main
            pl.BlockSpec((T, S), lambda i, k: (0, 0)),                    # vertical band, halo
            pl.BlockSpec((W, W), lambda i, k: (0, 0)),                    # horizontal band
        ],
        out_specs=pl.BlockSpec((None, 8, 128), lambda i, k: (i, 0, 0)),
        scratch_shapes=[
            pltpu.VMEM((T, W), jnp.float32),        # muX
            pltpu.VMEM((T, W), jnp.float32),        # sigmaX_sq
            pltpu.VMEM((T, W), jnp.float32),        # running max sigmaY_sq
            pltpu.VMEM((T, W), jnp.float32),        # cs of argmax exposure
        ],
        compiler_params=pltpu.CompilerParams(
            dimension_semantics=("parallel", "arbitrary"),
            vmem_limit_bytes=vmem_limit),
        cost_estimate=cost,
    )(out_chw, out_halo, bunch, bunch_halo, bhm, bhh, bwt)

    # levels == 1, beta == [1], is_lum == False  =>  score = mean(cs_map).
    # (The trailing avg_pool2d in mef_msssim never affects the result.)
    # TODO(synk): is_lum / is_variance_lum luminance branches not implemented
    #             (unused with module defaults).
    return jnp.sum(part[:, 0, 0]) / jnp.float32(H * W)


# --------------------------------------------------------------------------
# Pure-JAX reference mirroring the torch math (for correctness check)
# --------------------------------------------------------------------------
def _reference_jax(output, bunch, window_size=WINDOW_SIZE, c2=0.03):
    K, C, H, W = bunch.shape
    g = _gaussian_1d(window_size)
    w2d = (np.outer(g, g) / C).astype(np.float32)
    window = jnp.asarray(np.broadcast_to(w2d, (1, C, window_size, window_size)).copy())
    pad = window_size // 2

    def conv(x):  # (N, C, H, W) -> (N, H, W)
        y = lax.conv_general_dilated(
            x, window, (1, 1), [(pad, pad), (pad, pad)],
            dimension_numbers=("NCHW", "OIHW", "NCHW"),
            precision=lax.Precision.HIGHEST)
        return y[:, 0]

    C2 = c2 ** 2
    muY = conv(bunch)                              # (K, H, W)
    sigY = conv(bunch * bunch) - muY * muY
    muX = conv(output)[0]                          # (H, W)
    sigX = conv(output * output)[0] - muX * muX
    sigXY = conv(output * bunch) - muX[None] * muY
    cs_seq = (2.0 * sigXY + C2) / jnp.maximum(sigX[None] + sigY + C2, 1e-6)
    idx = jnp.argmax(sigY, axis=0)
    cs_map = jnp.take_along_axis(cs_seq, idx[None], axis=0)[0]
    return jnp.mean(cs_map)  # l == 1 for is_lum=False, levels == 1


if __name__ == "__main__":
    key = jax.random.PRNGKey(0)
    k1, k2, k3, k4 = jax.random.split(key, 4)

    # Config A: exercises row tiling (nt=2), halo strips, K-axis pipelining.
    K, C, H, W = 4, 3, 256, 128
    output = jax.random.uniform(k1, (1, C, H, W), dtype=jnp.float32)
    bunch = jax.random.uniform(k2, (K, C, H, W), dtype=jnp.float32)
    q = jax.block_until_ready(mef_msssim_pallas(output, bunch, tile_h=128))
    ref = jax.block_until_ready(_reference_jax(output, bunch))
    if not np.isfinite(float(q)):
        raise AssertionError("non-finite kernel result (config A)")
    if not np.allclose(float(q), float(ref), rtol=2e-2, atol=2e-3):
        raise AssertionError(f"mismatch A: pallas={float(q)} ref={float(ref)}")

    # Config B: single row tile (nt=1), different K, auto tile selection.
    K2, H2, W2 = 3, 128, 128
    output2 = jax.random.uniform(k3, (1, C, H2, W2), dtype=jnp.float32)
    bunch2 = jax.random.uniform(k4, (K2, C, H2, W2), dtype=jnp.float32)
    q2 = jax.block_until_ready(mef_msssim_pallas(output2, bunch2))
    ref2 = jax.block_until_ready(_reference_jax(output2, bunch2))
    if not np.isfinite(float(q2)):
        raise AssertionError("non-finite kernel result (config B)")
    if not np.allclose(float(q2), float(ref2), rtol=2e-2, atol=2e-3):
        raise AssertionError(f"mismatch B: pallas={float(q2)} ref={float(ref2)}")

    print("KERNEL_OK")
</pallas_src>

<mosaic_0001>
module attributes {stable_mosaic.version = 11 : i64} {
  func.func @_mef_ssim_kernel(%arg0: i32, %arg1: i32, %arg2: memref<3x128x128xf32, #tpu.memory_space<vmem>>, %arg3: memref<1x3x16x128xf32, #tpu.memory_space<vmem>>, %arg4: memref<1x3x128x128xf32, #tpu.memory_space<vmem>>, %arg5: memref<1x1x3x16x128xf32, #tpu.memory_space<vmem>>, %arg6: memref<128x128xf32, #tpu.memory_space<vmem>>, %arg7: memref<128x16xf32, #tpu.memory_space<vmem>>, %arg8: memref<128x128xf32, #tpu.memory_space<vmem>>, %arg9: memref<1x8x128xf32, #tpu.memory_space<vmem>>, %arg10: memref<128x128xf32, #tpu.memory_space<vmem>>, %arg11: memref<128x128xf32, #tpu.memory_space<vmem>>, %arg12: memref<128x128xf32, #tpu.memory_space<vmem>>, %arg13: memref<128x128xf32, #tpu.memory_space<vmem>>) attributes {dimension_semantics = [#tpu.dimension_semantics<parallel>, #tpu.dimension_semantics<arbitrary>], iteration_bounds = array<i64: 2, 4>, scalar_prefetch = 0 : i64, scratch_operands = 4 : i64, tpu.core_type = #tpu.core_type<tc>, window_params = [{transform_indices = @transform_0, window_bounds = array<i64: 3, 128, 128>}, {transform_indices = @transform_1, window_bounds = array<i64: 1, 3, 16, 128>}, {transform_indices = @transform_2, window_bounds = array<i64: 1, 3, 128, 128>}, {transform_indices = @transform_3, window_bounds = array<i64: 1, 1, 3, 16, 128>}, {pipeline_mode = #tpu.pipeline_mode<synchronous>, transform_indices = @transform_4, window_bounds = array<i64: 128, 128>}, {pipeline_mode = #tpu.pipeline_mode<synchronous>, transform_indices = @transform_5, window_bounds = array<i64: 128, 16>}, {pipeline_mode = #tpu.pipeline_mode<synchronous>, transform_indices = @transform_6, window_bounds = array<i64: 128, 128>}, {transform_indices = @transform_7, window_bounds = array<i64: 1, 8, 128>}]} {
    %c0 = arith.constant 0 : index
    %c0_0 = arith.constant 0 : index
    %0 = vector.load %arg6[%c0, %c0_0] : memref<128x128xf32, #tpu.memory_space<vmem>>, vector<128x128xf32>
    %c0_1 = arith.constant 0 : index
    %c0_2 = arith.constant 0 : index
    %1 = vector.load %arg7[%c0_1, %c0_2] : memref<128x16xf32, #tpu.memory_space<vmem>>, vector<128x16xf32>
    %c0_3 = arith.constant 0 : index
    %c0_4 = arith.constant 0 : index
    %2 = vector.load %arg8[%c0_3, %c0_4] : memref<128x128xf32, #tpu.memory_space<vmem>>, vector<128x128xf32>
    %c0_5 = arith.constant 0 : index
    %c0_6 = arith.constant 0 : index
    %c0_7 = arith.constant 0 : index
    %3 = vector.load %arg2[%c0_5, %c0_6, %c0_7] : memref<3x128x128xf32, #tpu.memory_space<vmem>>, vector<3x128x128xf32>
    %c0_8 = arith.constant 0 : index
    %c0_9 = arith.constant 0 : index
    %c0_10 = arith.constant 0 : index
    %c0_11 = arith.constant 0 : index
    %4 = vector.load %arg3[%c0_8, %c0_9, %c0_10, %c0_11] : memref<1x3x16x128xf32, #tpu.memory_space<vmem>>, vector<1x3x16x128xf32>
    %5 = vector.shape_cast %4 : vector<1x3x16x128xf32> to vector<3x16x128xf32>
    %c0_i32 = arith.constant 0 : i32
    %6 = arith.cmpi eq, %arg1, %c0_i32 : i32
    %7 = arith.extui %6 : i1 to i32
    %c0_i32_12 = arith.constant 0 : i32
    %8 = arith.cmpi ne, %7, %c0_i32_12 : i32
    scf.if %8 {
      %cst_55 = arith.constant dense<0.000000e+00> : vector<128x128xf32>
      %79 = vector.multi_reduction <add>, %3, %cst_55 [0] : vector<3x128x128xf32> to vector<128x128xf32>
      %cst_56 = arith.constant 0.333333343 : f32
      %80 = vector.broadcast %cst_56 : f32 to vector<128x128xf32>
      %81 = arith.mulf %79, %80 : vector<128x128xf32>
      %82 = arith.mulf %3, %3 : vector<3x128x128xf32>
      %cst_57 = arith.constant dense<0.000000e+00> : vector<128x128xf32>
      %83 = vector.multi_reduction <add>, %82, %cst_57 [0] : vector<3x128x128xf32> to vector<128x128xf32>
      %cst_58 = arith.constant 0.333333343 : f32
      %84 = vector.broadcast %cst_58 : f32 to vector<128x128xf32>
      %85 = arith.mulf %83, %84 : vector<128x128xf32>
      %cst_59 = arith.constant dense<0.000000e+00> : vector<16x128xf32>
      %86 = vector.multi_reduction <add>, %5, %cst_59 [0] : vector<3x16x128xf32> to vector<16x128xf32>
      %cst_60 = arith.constant 0.333333343 : f32
      %87 = vector.broadcast %cst_60 : f32 to vector<16x128xf32>
      %88 = arith.mulf %86, %87 : vector<16x128xf32>
      %89 = arith.mulf %5, %5 : vector<3x16x128xf32>
      %cst_61 = arith.constant dense<0.000000e+00> : vector<16x128xf32>
      %90 = vector.multi_reduction <add>, %89, %cst_61 [0] : vector<3x16x128xf32> to vector<16x128xf32>
      %cst_62 = arith.constant 0.333333343 : f32
      %91 = vector.broadcast %cst_62 : f32 to vector<16x128xf32>
      %92 = arith.mulf %90, %91 : vector<16x128xf32>
      %93 = tpu.concatenate %81, %85, %88, %92 in 0 : vector<128x128xf32>, vector<128x128xf32>, vector<16x128xf32>, vector<16x128xf32> -> vector<288x128xf32>
      %cst_63 = arith.constant dense<0.000000e+00> : vector<288x128xf32>
      %94 = tpu.matmul %93, %2, %cst_63 {dimension_numbers = #tpu.dot_dimension_numbers<[1], [0], [0], [1], [0, 0, 1, 1], [], []>} : vector<288x128xf32>, vector<128x128xf32>, vector<288x128xf32> -> vector<288x128xf32>
      %95 = vector.extract_strided_slice %94 {offsets = [0, 0], sizes = [128, 128], strides = [1, 1]} : vector<288x128xf32> to vector<128x128xf32>
      %96 = vector.extract_strided_slice %94 {offsets = [128, 0], sizes = [128, 128], strides = [1, 1]} : vector<288x128xf32> to vector<128x128xf32>
      %97 = tpu.concatenate %95, %96 in 1 : vector<128x128xf32>, vector<128x128xf32> -> vector<128x256xf32>
      %98 = vector.extract_strided_slice %94 {offsets = [256, 0], sizes = [16, 128], strides = [1, 1]} : vector<288x128xf32> to vector<16x128xf32>
      %99 = vector.extract_strided_slice %94 {offsets = [272, 0], sizes = [16, 128], strides = [1, 1]} : vector<288x128xf32> to vector<16x128xf32>
      %100 = tpu.concatenate %98, %99 in 1 : vector<16x128xf32>, vector<16x128xf32> -> vector<16x256xf32>
      %cst_64 = arith.constant dense<0.000000e+00> : vector<128x256xf32>
      %101 = tpu.matmul %0, %97, %cst_64 {dimension_numbers = #tpu.dot_dimension_numbers<[1], [0], [0], [1], [0, 0, 1, 1], [], []>} : vector<128x128xf32>, vector<128x256xf32>, vector<128x256xf32> -> vector<128x256xf32>
      %cst_65 = arith.constant dense<0.000000e+00> : vector<128x256xf32>
      %102 = tpu.matmul %1, %100, %cst_65 {dimension_numbers = #tpu.dot_dimension_numbers<[1], [0], [0], [1], [0, 0, 1, 1], [], []>} : vector<128x16xf32>, vector<16x256xf32>, vector<128x256xf32> -> vector<128x256xf32>
      %103 = arith.addf %101, %102 : vector<128x256xf32>
      %104 = vector.extract_strided_slice %103 {offsets = [0, 0], sizes = [128, 128], strides = [1, 1]} : vector<128x256xf32> to vector<128x128xf32>
      %105 = vector.extract_strided_slice %103 {offsets = [0, 128], sizes = [128, 128], strides = [1, 1]} : vector<128x256xf32> to vector<128x128xf32>
      %c0_66 = arith.constant 0 : index
      %c0_67 = arith.constant 0 : index
      %106 = vector.load %arg10[%c0_66, %c0_67] : memref<128x128xf32, #tpu.memory_space<vmem>>, vector<128x128xf32>
      tpu.vector_store %arg10[%c0_66, %c0_67], %104 {strides = array<i32>} : memref<128x128xf32, #tpu.memory_space<vmem>>, vector<128x128xf32>,
      %107 = arith.mulf %104, %104 : vector<128x128xf32>
      %108 = arith.subf %105, %107 : vector<128x128xf32>
      %c0_68 = arith.constant 0 : index
      %c0_69 = arith.constant 0 : index
      %109 = vector.load %arg11[%c0_68, %c0_69] : memref<128x128xf32, #tpu.memory_space<vmem>>, vector<128x128xf32>
      tpu.vector_store %arg11[%c0_68, %c0_69], %108 {strides = array<i32>} : memref<128x128xf32, #tpu.memory_space<vmem>>, vector<128x128xf32>,
      %cst_70 = arith.constant 0xFF800000 : f32
      %110 = vector.broadcast %cst_70 : f32 to vector<128x128xf32>
      %c0_71 = arith.constant 0 : index
      %c0_72 = arith.constant 0 : index
      %111 = vector.load %arg12[%c0_71, %c0_72] : memref<128x128xf32, #tpu.memory_space<vmem>>, vector<128x128xf32>
      tpu.vector_store %arg12[%c0_71, %c0_72], %110 {strides = array<i32>} : memref<128x128xf32, #tpu.memory_space<vmem>>, vector<128x128xf32>,
      %cst_73 = arith.constant 0.000000e+00 : f32
      %112 = vector.broadcast %cst_73 : f32 to vector<128x128xf32>
      %c0_74 = arith.constant 0 : index
      %c0_75 = arith.constant 0 : index
      %113 = vector.load %arg13[%c0_74, %c0_75] : memref<128x128xf32, #tpu.memory_space<vmem>>, vector<128x128xf32>
      tpu.vector_store %arg13[%c0_74, %c0_75], %112 {strides = array<i32>} : memref<128x128xf32, #tpu.memory_space<vmem>>, vector<128x128xf32>,
    } else {
    }
    %c0_13 = arith.constant 0 : index
    %c0_14 = arith.constant 0 : index
    %c0_15 = arith.constant 0 : index
    %c0_16 = arith.constant 0 : index
    %9 = vector.load %arg4[%c0_13, %c0_14, %c0_15, %c0_16] : memref<1x3x128x128xf32, #tpu.memory_space<vmem>>, vector<1x3x128x128xf32>
    %10 = vector.shape_cast %9 : vector<1x3x128x128xf32> to vector<3x128x128xf32>
    %c0_17 = arith.constant 0 : index
    %c0_18 = arith.constant 0 : index
    %c0_19 = arith.constant 0 : index
    %c0_20 = arith.constant 0 : index
    %c0_21 = arith.constant 0 : index
    %11 = vector.load %arg5[%c0_17, %c0_18, %c0_19, %c0_20, %c0_21] : memref<1x1x3x16x128xf32, #tpu.memory_space<vmem>>, vector<1x1x3x16x128xf32>
    %12 = vector.shape_cast %11 : vector<1x1x3x16x128xf32> to vector<3x16x128xf32>
    %cst = arith.constant dense<0.000000e+00> : vector<128x128xf32>
    %13 = vector.multi_reduction <add>, %10, %cst [0] : vector<3x128x128xf32> to vector<128x128xf32>
    %cst_22 = arith.constant 0.333333343 : f32
    %14 = vector.broadcast %cst_22 : f32 to vector<128x128xf32>
    %15 = arith.mulf %13, %14 : vector<128x128xf32>
    %16 = arith.mulf %10, %10 : vector<3x128x128xf32>
    %cst_23 = arith.constant dense<0.000000e+00> : vector<128x128xf32>
    %17 = vector.multi_reduction <add>, %16, %cst_23 [0] : vector<3x128x128xf32> to vector<128x128xf32>
    %cst_24 = arith.constant 0.333333343 : f32
    %18 = vector.broadcast %cst_24 : f32 to vector<128x128xf32>
    %19 = arith.mulf %17, %18 : vector<128x128xf32>
    %20 = arith.mulf %3, %10 : vector<3x128x128xf32>
    %cst_25 = arith.constant dense<0.000000e+00> : vector<128x128xf32>
    %21 = vector.multi_reduction <add>, %20, %cst_25 [0] : vector<3x128x128xf32> to vector<128x128xf32>
    %cst_26 = arith.constant 0.333333343 : f32
    %22 = vector.broadcast %cst_26 : f32 to vector<128x128xf32>
    %23 = arith.mulf %21, %22 : vector<128x128xf32>
    %cst_27 = arith.constant dense<0.000000e+00> : vector<16x128xf32>
    %24 = vector.multi_reduction <add>, %12, %cst_27 [0] : vector<3x16x128xf32> to vector<16x128xf32>
    %cst_28 = arith.constant 0.333333343 : f32
    %25 = vector.broadcast %cst_28 : f32 to vector<16x128xf32>
    %26 = arith.mulf %24, %25 : vector<16x128xf32>
    %27 = arith.mulf %12, %12 : vector<3x16x128xf32>
    %cst_29 = arith.constant dense<0.000000e+00> : vector<16x128xf32>
    %28 = vector.multi_reduction <add>, %27, %cst_29 [0] : vector<3x16x128xf32> to vector<16x128xf32>
    %cst_30 = arith.constant 0.333333343 : f32
    %29 = vector.broadcast %cst_30 : f32 to vector<16x128xf32>
    %30 = arith.mulf %28, %29 : vector<16x128xf32>
    %31 = arith.mulf %5, %12 : vector<3x16x128xf32>
    %cst_31 = arith.constant dense<0.000000e+00> : vector<16x128xf32>
    %32 = vector.multi_reduction <add>, %31, %cst_31 [0] : vector<3x16x128xf32> to vector<16x128xf32>
    %cst_32 = arith.constant 0.333333343 : f32
    %33 = vector.broadcast %cst_32 : f32 to vector<16x128xf32>
    %34 = arith.mulf %32, %33 : vector<16x128xf32>
    %35 = tpu.concatenate %15, %19, %23, %26, %30, %34 in 0 : vector<128x128xf32>, vector<128x128xf32>, vector<128x128xf32>, vector<16x128xf32>, vector<16x128xf32>, vector<16x128xf32> -> vector<432x128xf32>
    %cst_33 = arith.constant dense<0.000000e+00> : vector<432x128xf32>
    %36 = tpu.matmul %35, %2, %cst_33 {dimension_numbers = #tpu.dot_dimension_numbers<[1], [0], [0], [1], [0, 0, 1, 1], [], []>} : vector<432x128xf32>, vector<128x128xf32>, vector<432x128xf32> -> vector<432x128xf32>
    %37 = vector.extract_strided_slice %36 {offsets = [0, 0], sizes = [128, 128], strides = [1, 1]} : vector<432x128xf32> to vector<128x128xf32>
    %38 = vector.extract_strided_slice %36 {offsets = [128, 0], sizes = [128, 128], strides = [1, 1]} : vector<432x128xf32> to vector<128x128xf32>
    %39 = vector.extract_strided_slice %36 {offsets = [256, 0], sizes = [128, 128], strides = [1, 1]} : vector<432x128xf32> to vector<128x128xf32>
    %40 = tpu.concatenate %37, %38, %39 in 1 : vector<128x128xf32>, vector<128x128xf32>, vector<128x128xf32> -> vector<128x384xf32>
    %41 = vector.extract_strided_slice %36 {offsets = [384, 0], sizes = [16, 128], strides = [1, 1]} : vector<432x128xf32> to vector<16x128xf32>
    %42 = vector.extract_strided_slice %36 {offsets = [400, 0], sizes = [16, 128], strides = [1, 1]} : vector<432x128xf32> to vector<16x128xf32>
    %43 = vector.extract_strided_slice %36 {offsets = [416, 0], sizes = [16, 128], strides = [1, 1]} : vector<432x128xf32> to vector<16x128xf32>
    %44 = tpu.concatenate %41, %42, %43 in 1 : vector<16x128xf32>, vector<16x128xf32>, vector<16x128xf32> -> vector<16x384xf32>
    %cst_34 = arith.constant dense<0.000000e+00> : vector<128x384xf32>
    %45 = tpu.matmul %0, %40, %cst_34 {dimension_numbers = #tpu.dot_dimension_numbers<[1], [0], [0], [1], [0, 0, 1, 1], [], []>} : vector<128x128xf32>, vector<128x384xf32>, vector<128x384xf32> -> vector<128x384xf32>
    %cst_35 = arith.constant dense<0.000000e+00> : vector<128x384xf32>
    %46 = tpu.matmul %1, %44, %cst_35 {dimension_numbers = #tpu.dot_dimension_numbers<[1], [0], [0], [1], [0, 0, 1, 1], [], []>} : vector<128x16xf32>, vector<16x384xf32>, vector<128x384xf32> -> vector<128x384xf32>
    %47 = arith.addf %45, %46 : vector<128x384xf32>
    %48 = vector.extract_strided_slice %47 {offsets = [0, 0], sizes = [128, 128], strides = [1, 1]} : vector<128x384xf32> to vector<128x128xf32>
    %49 = vector.extract_strided_slice %47 {offsets = [0, 128], sizes = [128, 128], strides = [1, 1]} : vector<128x384xf32> to vector<128x128xf32>
    %50 = vector.extract_strided_slice %47 {offsets = [0, 256], sizes = [128, 128], strides = [1, 1]} : vector<128x384xf32> to vector<128x128xf32>
    %c0_36 = arith.constant 0 : index
    %c0_37 = arith.constant 0 : index
    %51 = vector.load %arg10[%c0_36, %c0_37] : memref<128x128xf32, #tpu.memory_space<vmem>>, vector<128x128xf32>
    %52 = arith.mulf %48, %48 : vector<128x128xf32>
    %53 = arith.subf %49, %52 : vector<128x128xf32>
    %54 = arith.mulf %51, %48 : vector<128x128xf32>
    %55 = arith.subf %50, %54 : vector<128x128xf32>
    %cst_38 = arith.constant 2.000000e+00 : f32
    %56 = vector.broadcast %cst_38 : f32 to vector<128x128xf32>
    %57 = arith.mulf %56, %55 : vector<128x128xf32>
    %cst_39 = arith.constant 8.99999984E-4 : f32
    %58 = vector.broadcast %cst_39 : f32 to vector<128x128xf32>
    %59 = arith.addf %57, %58 : vector<128x128xf32>
    %c0_40 = arith.constant 0 : index
    %c0_41 = arith.constant 0 : index
    %60 = vector.load %arg11[%c0_40, %c0_41] : memref<128x128xf32, #tpu.memory_space<vmem>>, vector<128x128xf32>
    %61 = arith.addf %60, %53 : vector<128x128xf32>
    %cst_42 = arith.constant 8.99999984E-4 : f32
    %62 = vector.broadcast %cst_42 : f32 to vector<128x128xf32>
    %63 = arith.addf %61, %62 : vector<128x128xf32>
    %cst_43 = arith.constant 9.99999997E-7 : f32
    %64 = vector.broadcast %cst_43 : f32 to vector<128x128xf32>
    %65 = arith.maximumf %63, %64 : vector<128x128xf32>
    %66 = tpu.reciprocal %65 {approx = true} : vector<128x128xf32> -> vector<128x128xf32>
    %67 = arith.mulf %59, %66 : vector<128x128xf32>
    %c0_44 = arith.constant 0 : index
    %c0_45 = arith.constant 0 : index
    %68 = vector.load %arg12[%c0_44, %c0_45] : memref<128x128xf32, #tpu.memory_space<vmem>>, vector<128x128xf32>
    %69 = arith.cmpf ogt, %53, %68 : vector<128x128xf32>
    %c0_46 = arith.constant 0 : index
    %c0_47 = arith.constant 0 : index
    %70 = vector.load %arg13[%c0_46, %c0_47] : memref<128x128xf32, #tpu.memory_space<vmem>>, vector<128x128xf32>
    %71 = arith.select %69, %67, %70 : vector<128x128xi1>, vector<128x128xf32>
    %c0_48 = arith.constant 0 : index
    %c0_49 = arith.constant 0 : index
    %72 = vector.load %arg13[%c0_48, %c0_49] : memref<128x128xf32, #tpu.memory_space<vmem>>, vector<128x128xf32>
    tpu.vector_store %arg13[%c0_48, %c0_49], %71 {strides = array<i32>} : memref<128x128xf32, #tpu.memory_space<vmem>>, vector<128x128xf32>,
    %c0_50 = arith.constant 0 : index
    %c0_51 = arith.constant 0 : index
    %73 = vector.load %arg12[%c0_50, %c0_51] : memref<128x128xf32, #tpu.memory_space<vmem>>, vector<128x128xf32>
    %74 = arith.select %69, %53, %73 : vector<128x128xi1>, vector<128x128xf32>
    %c0_52 = arith.constant 0 : index
    %c0_53 = arith.constant 0 : index
    %75 = vector.load %arg12[%c0_52, %c0_53] : memref<128x128xf32, #tpu.memory_space<vmem>>, vector<128x128xf32>
    tpu.vector_store %arg12[%c0_52, %c0_53], %74 {strides = array<i32>} : memref<128x128xf32, #tpu.memory_space<vmem>>, vector<128x128xf32>,
    %c3_i32 = arith.constant 3 : i32
    %76 = arith.cmpi eq, %arg1, %c3_i32 : i32
    %77 = arith.extui %76 : i1 to i32
    %c0_i32_54 = arith.constant 0 : i32
    %78 = arith.cmpi ne, %77, %c0_i32_54 : i32
    scf.if %78 {
      %cst_55 = arith.constant 0.000000e+00 : f32
      %79 = vector.broadcast %cst_55 : f32 to vector<8x128xf32>
      %c0_56 = arith.constant 0 : index
      %c0_57 = arith.constant 0 : index
      %80 = vector.load %arg13[%c0_56, %c0_57] : memref<128x128xf32, #tpu.memory_space<vmem>>, vector<128x128xf32>
      %81 = vector.shape_cast %80 : vector<128x128xf32> to vector<1x128x128xf32>
      %cst_58 = arith.constant dense<0.000000e+00> : vector<1xf32>
      %82 = vector.multi_reduction <add>, %81, %cst_58 [1, 2] : vector<1x128x128xf32> to vector<1xf32>
      %83 = vector.shape_cast %82 : vector<1xf32> to vector<1x1x1xf32>
      %84 = vector.extract %83[0, 0, 0] : f32 from vector<1x1x1xf32>
      %85 = vector.broadcast %84 : f32 to vector<8x128xf32>
      %86 = arith.addf %79, %85 : vector<8x128xf32>
      %c0_59 = arith.constant 0 : index
      %c0_60 = arith.constant 0 : index
      %c0_61 = arith.constant 0 : index
      %87 = vector.load %arg9[%c0_59, %c0_60, %c0_61] : memref<1x8x128xf32, #tpu.memory_space<vmem>>, vector<1x8x128xf32>
      %88 = vector.shape_cast %87 : vector<1x8x128xf32> to vector<8x128xf32>
      %89 = vector.shape_cast %86 : vector<8x128xf32> to vector<1x8x128xf32>
      tpu.vector_store %arg9[%c0_59, %c0_60, %c0_61], %89 {strides = array<i32>} : memref<1x8x128xf32, #tpu.memory_space<vmem>>, vector<1x8x128xf32>,
    } else {
    }
    return
  }
  func.func @transform_0(%arg0: i32, %arg1: i32) -> (i32, i32, i32) {
    %c0_i32 = arith.constant 0 : i32
    %c0_i32_0 = arith.constant 0 : i32
    %c0_i32_1 = arith.constant 0 : i32
    return %c0_i32, %arg0, %c0_i32_0 : i32, i32, i32
  }
  func.func @transform_1(%arg0: i32, %arg1: i32) -> (i32, i32, i32, i32) {
    %c0_i32 = arith.constant 0 : i32
    %c0_i32_0 = arith.constant 0 : i32
    %c0_i32_1 = arith.constant 0 : i32
    %c0_i32_2 = arith.constant 0 : i32
    return %arg0, %c0_i32, %c0_i32_0, %c0_i32_1 : i32, i32, i32, i32
  }
  func.func @transform_2(%arg0: i32, %arg1: i32) -> (i32, i32, i32, i32) {
    %c0_i32 = arith.constant 0 : i32
    %c0_i32_0 = arith.constant 0 : i32
    %c0_i32_1 = arith.constant 0 : i32
    return %arg1, %c0_i32, %arg0, %c0_i32_0 : i32, i32, i32, i32
  }
  func.func @transform_3(%arg0: i32, %arg1: i32) -> (i32, i32, i32, i32, i32) {
    %c0_i32 = arith.constant 0 : i32
    %c0_i32_0 = arith.constant 0 : i32
    %c0_i32_1 = arith.constant 0 : i32
    %c0_i32_2 = arith.constant 0 : i32
    return %arg0, %arg1, %c0_i32, %c0_i32_0, %c0_i32_1 : i32, i32, i32, i32, i32
  }
  func.func @transform_4(%arg0: i32, %arg1: i32) -> (i32, i32) {
    %c0_i32 = arith.constant 0 : i32
    %c0_i32_0 = arith.constant 0 : i32
    %c0_i32_1 = arith.constant 0 : i32
    return %c0_i32, %c0_i32_0 : i32, i32
  }
  func.func @transform_5(%arg0: i32, %arg1: i32) -> (i32, i32) {
    %c0_i32 = arith.constant 0 : i32
    %c0_i32_0 = arith.constant 0 : i32
    %c0_i32_1 = arith.constant 0 : i32
    return %c0_i32, %c0_i32_0 : i32, i32
  }
  func.func @transform_6(%arg0: i32, %arg1: i32) -> (i32, i32) {
    %c0_i32 = arith.constant 0 : i32
    %c0_i32_0 = arith.constant 0 : i32
    %c0_i32_1 = arith.constant 0 : i32
    return %c0_i32, %c0_i32_0 : i32, i32
  }
  func.func @transform_7(%arg0: i32, %arg1: i32) -> (i32, i32, i32) {
    %c0_i32 = arith.constant 0 : i32
    %c0_i32_0 = arith.constant 0 : i32
    %c0_i32_1 = arith.constant 0 : i32
    return %arg0, %c0_i32, %c0_i32_0 : i32, i32, i32
  }
}

</mosaic_0001>

<llo_original>
// kernel: tpu_custom_call.1
$region0: #{tpu_custom_call.1}
  #allocation0 [shape = 'u32[]', space=smem, size = 0x4, offset = 0x4, fixed_abs, tag = 'smem constant byte address 0x4 - core index']
  #allocation1 [shape = 'u32[144,128]{1,0:T(1,128)}', space=vmem, size = 0x12000, scoped, tag = 'internal scratch']
  #allocation2 [shape = 'f32[128,128]{1,0:T(8,128)}', space=vmem, size = 0x10000, scoped, tag = 'scratch operand']
  #allocation3 [shape = 'f32[128,128]{1,0:T(8,128)}', space=vmem, size = 0x10000, scoped, tag = 'scratch operand']
  #allocation4 [shape = 'f32[128,128]{1,0:T(8,128)}', space=vmem, size = 0x10000, scoped, tag = 'scratch operand']
  #allocation5 [shape = 'f32[128,128]{1,0:T(8,128)}', space=vmem, size = 0x10000, scoped, tag = 'scratch operand']
  #allocation18 [shape = 's32[]', space=sflag, size = 0x4, offset = 0, fixed_abs, tag = 'sflag constant byte address 0x0 - dummy sync flag']
  #allocation20 [shape = 's32[]', space=sflag, size = 0x4, offset = 0, fixed_abs, tag = 'sflag constant byte address 0x0 - dummy sync flag']
  %s0 = inlined_call_operand.hbm [shape: f32[3,256,128], index: 0, kind: input, shape index: {}]
  %s1 = inlined_call_operand.hbm [shape: f32[2,3,16,128], index: 1, kind: input, shape index: {}]
  %s2 = inlined_call_operand.hbm [shape: f32[4,3,256,128], index: 2, kind: input, shape index: {}]
  %s3 = inlined_call_operand.hbm [shape: f32[2,4,3,16,128], index: 3, kind: input, shape index: {}]
  %s4 = inlined_call_operand.hbm [shape: f32[128,128], index: 4, kind: input, shape index: {}]
  %s5 = inlined_call_operand.vmem [shape: f32[128,16], index: 5, kind: input, shape index: {}]
  %s6 = inlined_call_operand.hbm [shape: f32[128,128], index: 6, kind: input, shape index: {}]
  %s7 = inlined_call_operand.hbm [shape: f32[2,8,128], index: 7, kind: output, shape index: {}]
  %s8 = sld [smem:[#allocation0]]
  $region93: #{tpu_custom_call.1} parent=0
    _
  %s10 = ssub.s32 1, %s8
  %s11 = scalar_select 0, %s10, %s8
  $region1: #{tpu_custom_call.1} parent=0
    #allocation6 [shape = 'u8[393216]{0}', space=vmem, size = 0x60000, scoped, tag = 'input window, operand 0']
    #allocation7 [shape = 's32[2]{0}', space=sflag, size = 0x8, scoped, tag = 'scoped memory for tpu_custom_call.1']
    #allocation8 [shape = 's32[2]{0}', space=sflag, size = 0x8, scoped, tag = 'scoped memory for tpu_custom_call.1']
    #allocation9 [shape = 'u8[49152]{0}', space=vmem, size = 0xc000, scoped, tag = 'input window, operand 1']
    #allocation10 [shape = 's32[2]{0}', space=sflag, size = 0x8, scoped, tag = 'scoped memory for tpu_custom_call.1']
    #allocation11 [shape = 'u8[393216]{0}', space=vmem, size = 0x60000, scoped, tag = 'input window, operand 2']
    #allocation12 [shape = 'u8[49152]{0}', space=vmem, size = 0xc000, scoped, tag = 'input window, operand 3']
    #allocation13 [shape = 's32[2]{0}', space=sflag, size = 0x8, scoped, tag = 'scoped memory for tpu_custom_call.1']
    #allocation14 [shape = 'u8[65536]{0}', space=vmem, size = 0x10000, scoped, tag = 'input window, operand 4, single buffered']
    #allocation15 [shape = 'u8[65536]{0}', space=vmem, size = 0x10000, scoped, tag = 'input window, operand 6, single buffered']
    #allocation16 [shape = 's32[1]{0}', space=sflag, size = 0x4, scoped, tag = 'scoped memory for tpu_custom_call.1']
    #allocation17 [shape = 'u8[8192]{0}', space=vmem, size = 0x2000, scoped, tag = 'output window, operand 0']
    %12 = vsyncpa [#allocation7], 0
    %s13 = scalar_lea.sflag [#allocation7], 1
    %14 = vsyncpa %s13, 0
    %15 = vsyncpa [#allocation10], 0
    %s16 = scalar_lea.sflag [#allocation10], 1
    %17 = vsyncpa %s16, 0
    %18 = vsyncpa [#allocation13], 0
    %s19 = scalar_lea.sflag [#allocation13], 1
    %20 = vsyncpa %s19, 0
    %21 = vsyncpa [#allocation16], 0
    %22 = vsyncpa [#allocation8], 0
    %s23 = scalar_lea.sflag [#allocation8], 1
    %24 = vsyncpa %s23, 0
    loop: start=0, step=1, limit=10
    $region2: #{tpu_custom_call.1} parent=1 // loop_pre_header
      _
    $region3: #{tpu_custom_call.1} parent=1 // loop_header
      %s26 = sphi 0, %s30
      %p27 = scmp.ge.s32.totalorder %s26, 10
      %s33 = sphi 0, %s45
      %s34 = sphi 0, %s41
      %s35 = sphi 0, %s33
      %s36 = sphi 0, %s34
      %s37 = sphi 0, %s35
      %s38 = sphi 0, %s36
      %s48 = sphi 0, %s50
      %s51 = sphi 0, %s48
      %s52 = sphi 0, %s51
      %s68 = sphi 0, %s52
      %s74 = sphi 0, %s76
      %s77 = sphi 0, %s74
      %s78 = sphi 0, %s77
      %s94 = sphi 0, %s78
      %s102 = sphi 0, %s104
      %s105 = sphi 0, %s102
      %s106 = sphi 0, %s105
      %s122 = sphi 0, %s106
      %s130 = sphi 0, %s132
      %s133 = sphi 0, %s130
      %s134 = sphi 0, %s133
      %s150 = sphi 0, %s134
      %s154 = sphi 0, %s154
      %s156 = sphi 0, %s154
      %s157 = sphi 0, %s156
      %s171 = sphi 0, %s157
      %s175 = sphi 0, %s175
      %s177 = sphi 0, %s175
      %s178 = sphi 0, %s177
      %s192 = sphi 0, %s178
      %s196 = sphi 0, %s196
      %s198 = sphi 0, %s196
      %s199 = sphi 0, %s198
      %s213 = sphi 0, %s199
      %s219 = sphi 0, %s221
      %s222 = sphi 0, %s219
      %s223 = sphi 0, %s222
      %s239 = sphi 0, %s223
    $region4: #{tpu_custom_call.1} parent=1 // loop_header_branch
      %29 = sbr.rel (%p27) target = $region8
    $region5: #{tpu_custom_call.1} parent=1 // loop_body
      %s31 = ssub.s32 %s26, 1
      %s32 = ssub.s32 %s26, 2
      %s39 = sadd.s32 1, %s34
      %p40 = scmp.ge.s32.totalorder %s39, 4
      %s41 = scalar_select %p40, 0, %s39
      %s42 = sadd.s32 1, %s33
      %s43 = scalar_select %p40, %s42, %s33
      %p44 = scmp.ge.s32.totalorder %s43, 2
      %s45 = scalar_select %p44, 0, %s43
      %s46 = ssub.s32 %s33, %s45
      %p47 = scmp.eq.s32.totalorder %s46, 0
      %s49 = sadd.s32 %s48, 1
      %s50 = scalar_select %p47, %s48, %s49
      %p53 = pneg %p47
      %p54 = scmp.eq.s32.totalorder %s26, 7
      %p55 = por %p53, %p54
      %p56 = scmp.ne.s32.totalorder %s48, %s51
      %p57 = scmp.eq.s32.totalorder %s26, 0
      %p58 = por %p56, %p57
      %p59 = scmp.ne.s32.totalorder %s48, %s51
      %p60 = scmp.eq.s32.totalorder %s31, 7
      %p61 = por %p59, %p60
      %p62 = scmp.ne.s32.totalorder %s51, %s52
      %p63 = scmp.eq.s32.totalorder %s31, 0
      %p64 = por %p62, %p63
      %p65 = scmp.ne.s32.totalorder %s51, %s52
      %p66 = scmp.eq.s32.totalorder %s32, 7
      %p67 = por %p65, %p66
      %p69 = scmp.ne.s32.totalorder %s52, %s68
      %p70 = scmp.eq.s32.totalorder %s32, 0
      %p71 = por %p69, %p70
      %s72 = ssub.s32 %s33, %s45
      %p73 = scmp.eq.s32.totalorder %s72, 0
      %s75 = sadd.s32 %s74, 1
      %s76 = scalar_select %p73, %s74, %s75
      %p79 = pneg %p73
      %p80 = scmp.eq.s32.totalorder %s26, 7
      %p81 = por %p79, %p80
      %p82 = scmp.ne.s32.totalorder %s74, %s77
      %p83 = scmp.eq.s32.totalorder %s26, 0
      %p84 = por %p82, %p83
      %p85 = scmp.ne.s32.totalorder %s74, %s77
      %p86 = scmp.eq.s32.totalorder %s31, 7
      %p87 = por %p85, %p86
      %p88 = scmp.ne.s32.totalorder %s77, %s78
      %p89 = scmp.eq.s32.totalorder %s31, 0
      %p90 = por %p88, %p89
      %p91 = scmp.ne.s32.totalorder %s77, %s78
      %p92 = scmp.eq.s32.totalorder %s32, 7
      %p93 = por %p91, %p92
      %p95 = scmp.ne.s32.totalorder %s78, %s94
      %p96 = scmp.eq.s32.totalorder %s32, 0
      %p97 = por %p95, %p96
      %s98 = ssub.s32 %s34, %s41
      %s99 = ssub.s32 %s33, %s45
      %s100 = sor.u32 %s98, %s99
      %p101 = scmp.eq.s32.totalorder %s100, 0
      %s103 = sadd.s32 %s102, 1
      %s104 = scalar_select %p101, %s102, %s103
      %p107 = pneg %p101
      %p108 = scmp.eq.s32.totalorder %s26, 7
      %p109 = por %p107, %p108
      %p110 = scmp.ne.s32.totalorder %s102, %s105
      %p111 = scmp.eq.s32.totalorder %s26, 0
      %p112 = por %p110, %p111
      %p113 = scmp.ne.s32.totalorder %s102, %s105
      %p114 = scmp.eq.s32.totalorder %s31, 7
      %p115 = por %p113, %p114
      %p116 = scmp.ne.s32.totalorder %s105, %s106
      %p117 = scmp.eq.s32.totalorder %s31, 0
      %p118 = por %p116, %p117
      %p119 = scmp.ne.s32.totalorder %s105, %s106
      %p120 = scmp.eq.s32.totalorder %s32, 7
      %p121 = por %p119, %p120
      %p123 = scmp.ne.s32.totalorder %s106, %s122
      %p124 = scmp.eq.s32.totalorder %s32, 0
      %p125 = por %p123, %p124
      %s126 = ssub.s32 %s33, %s45
      %s127 = ssub.s32 %s34, %s41
      %s128 = sor.u32 %s126, %s127
      %p129 = scmp.eq.s32.totalorder %s128, 0
      %s131 = sadd.s32 %s130, 1
      %s132 = scalar_select %p129, %s130, %s131
      %p135 = pneg %p129
      %p136 = scmp.eq.s32.totalorder %s26, 7
      %p137 = por %p135, %p136
      %p138 = scmp.ne.s32.totalorder %s130, %s133
      %p139 = scmp.eq.s32.totalorder %s26, 0
      %p140 = por %p138, %p139
      %p141 = scmp.ne.s32.totalorder %s130, %s133
      %p142 = scmp.eq.s32.totalorder %s31, 7
      %p143 = por %p141, %p142
      %p144 = scmp.ne.s32.totalorder %s133, %s134
      %p145 = scmp.eq.s32.totalorder %s31, 0
      %p146 = por %p144, %p145
      %p147 = scmp.ne.s32.totalorder %s133, %s134
      %p148 = scmp.eq.s32.totalorder %s32, 7
      %p149 = por %p147, %p148
      %p151 = scmp.ne.s32.totalorder %s134, %s150
      %p152 = scmp.eq.s32.totalorder %s32, 0
      %p153 = por %p151, %p152
      %s155 = sadd.s32 %s154, 1
      %p158 = scmp.eq.s32.totalorder %s26, 7
      %p159 = scmp.ne.s32.totalorder %s154, %s156
      %p160 = scmp.eq.s32.totalorder %s26, 0
      %p161 = por %p159, %p160
      %p162 = scmp.ne.s32.totalorder %s154, %s156
      %p163 = scmp.eq.s32.totalorder %s31, 7
      %p164 = por %p162, %p163
      %p165 = scmp.ne.s32.totalorder %s156, %s157
      %p166 = scmp.eq.s32.totalorder %s31, 0
      %p167 = por %p165, %p166
      %p168 = scmp.ne.s32.totalorder %s156, %s157
      %p169 = scmp.eq.s32.totalorder %s32, 7
      %p170 = por %p168, %p169
      %p172 = scmp.ne.s32.totalorder %s157, %s171
      %p173 = scmp.eq.s32.totalorder %s32, 0
      %p174 = por %p172, %p173
      %s176 = sadd.s32 %s175, 1
      %p179 = scmp.eq.s32.totalorder %s26, 7
      %p180 = scmp.ne.s32.totalorder %s175, %s177
      %p181 = scmp.eq.s32.totalorder %s26, 0
      %p182 = por %p180, %p181
      %p183 = scmp.ne.s32.totalorder %s175, %s177
      %p184 = scmp.eq.s32.totalorder %s31, 7
      %p185 = por %p183, %p184
      %p186 = scmp.ne.s32.totalorder %s177, %s178
      %p187 = scmp.eq.s32.totalorder %s31, 0
      %p188 = por %p186, %p187
      %p189 = scmp.ne.s32.totalorder %s177, %s178
      %p190 = scmp.eq.s32.totalorder %s32, 7
      %p191 = por %p189, %p190
      %p193 = scmp.ne.s32.totalorder %s178, %s192
      %p194 = scmp.eq.s32.totalorder %s32, 0
      %p195 = por %p193, %p194
      %s197 = sadd.s32 %s196, 1
      %p200 = scmp.eq.s32.totalorder %s26, 7
      %p201 = scmp.ne.s32.totalorder %s196, %s198
      %p202 = scmp.eq.s32.totalorder %s26, 0
      %p203 = por %p201, %p202
      %p204 = scmp.ne.s32.totalorder %s196, %s198
      %p205 = scmp.eq.s32.totalorder %s31, 7
      %p206 = por %p204, %p205
      %p207 = scmp.ne.s32.totalorder %s198, %s199
      %p208 = scmp.eq.s32.totalorder %s31, 0
      %p209 = por %p207, %p208
      %p210 = scmp.ne.s32.totalorder %s198, %s199
      %p211 = scmp.eq.s32.totalorder %s32, 7
      %p212 = por %p210, %p211
      %p214 = scmp.ne.s32.totalorder %s199, %s213
      %p215 = scmp.eq.s32.totalorder %s32, 0
      %p216 = por %p214, %p215
      %s217 = ssub.s32 %s33, %s45
      %p218 = scmp.eq.s32.totalorder %s217, 0
      %s220 = sadd.s32 %s219, 1
      %s221 = scalar_select %p218, %s219, %s220
      %p224 = pneg %p218
      %p225 = scmp.eq.s32.totalorder %s26, 7
      %p226 = por %p224, %p225
      %p227 = scmp.ne.s32.totalorder %s219, %s222
      %p228 = scmp.eq.s32.totalorder %s26, 0
      %p229 = por %p227, %p228
      %p230 = scmp.ne.s32.totalorder %s219, %s222
      %p231 = scmp.eq.s32.totalorder %s31, 7
      %p232 = por %p230, %p231
      %p233 = scmp.ne.s32.totalorder %s222, %s223
      %p234 = scmp.eq.s32.totalorder %s31, 0
      %p235 = por %p233, %p234
      %p236 = scmp.ne.s32.totalorder %s222, %s223
      %p237 = scmp.eq.s32.totalorder %s32, 7
      %p238 = por %p236, %p237
      %p240 = scmp.ne.s32.totalorder %s223, %s239
      %p241 = scmp.eq.s32.totalorder %s32, 0
      %p242 = por %p240, %p241
      %p243 = scmp.le.s32.totalorder 1, %s26
      %p244 = scmp.lt.s32.totalorder %s26, 9
      %p245 = pnand %p243, %p244
      %p246 = pneg %p245
      // Predicated region
      $region9: #{tpu_custom_call.1} parent=5 // pred_check
        _
      $region10: #{tpu_custom_call.1} parent=5 // pred_check_branch
        %248 = sbr.rel (%p245) target = $region12
      $region11: #{tpu_custom_call.1} parent=5 // pred_region
        %s249 = ssub.s32 %s26, 1
        // Predicated region
        $region13: #{tpu_custom_call.1} parent=11 // pred_check
          %p250 = pneg %p167
        $region14: #{tpu_custom_call.1} parent=11 // pred_check_branch
          %252 = sbr.rel (%p250) target = $region16
        $region15: #{tpu_custom_call.1} parent=11 // pred_region
          %s254 = ssub.s32 2048, 2048
          %255 = vsyncadd [#allocation13], %s254
          %s256 = sshll.u32 [#allocation14], 4
          %s257 = int_to_ptr.vmem [resolvable:$true] %s256
          %262 = dma.hbm_to_vmem [thread:$0]  %s4, 2048, %s257, [#allocation13], 128, 128, 8
        $region16: #{tpu_custom_call.1} parent=11 // pred_fallthru
          _
        // Predicated region
        $region17: #{tpu_custom_call.1} parent=11 // pred_check
          %p263 = pneg %p188
        $region18: #{tpu_custom_call.1} parent=11 // pred_check_branch
          %265 = sbr.rel (%p263) target = $region20
        $region19: #{tpu_custom_call.1} parent=11 // pred_region
          _
        $region20: #{tpu_custom_call.1} parent=11 // pred_fallthru
          _
        // Predicated region
        $region21: #{tpu_custom_call.1} parent=11 // pred_check
          %p266 = pneg %p209
        $region22: #{tpu_custom_call.1} parent=11 // pred_check_branch
          %268 = sbr.rel (%p266) target = $region24
        $region23: #{tpu_custom_call.1} parent=11 // pred_region
          %s270 = ssub.s32 2048, 2048
          %271 = vsyncadd [#allocation16], %s270
          %s272 = sshll.u32 [#allocation15], 4
          %s273 = int_to_ptr.vmem [resolvable:$true] %s272
          %278 = dma.hbm_to_vmem [thread:$0]  %s6, 2048, %s273, [#allocation16], 128, 128, 8
        $region24: #{tpu_custom_call.1} parent=11 // pred_fallthru
          _
      $region12: #{tpu_custom_call.1} parent=5 // pred_fallthru
        _
      %p279 = scmp.lt.s32.totalorder %s26, 8
      // Predicated region
      $region25: #{tpu_custom_call.1} parent=5 // pred_check
        %p280 = pneg %p279
      $region26: #{tpu_custom_call.1} parent=5 // pred_check_branch
        %282 = sbr.rel (%p280) target = $region28
      $region27: #{tpu_custom_call.1} parent=5 // pred_region
        // Predicated region
        $region29: #{tpu_custom_call.1} parent=27 // pred_check
          %p283 = pneg %p58
        $region30: #{tpu_custom_call.1} parent=27 // pred_check_branch
          %285 = sbr.rel (%p283) target = $region32
        $region31: #{tpu_custom_call.1} parent=27 // pred_region
          #allocation19 [shape = 'u32[6]{0}', space=smem, size = 0x18, scoped, tag = 'DMA stride descriptor']
          %s286 = sand.u32 %s48, 1
          %s287 = scalar_lea.sflag [#allocation7], %s286
          %s288 = sand.u32 %s48, 1
          %s289 = smul.addr %s288, 384
          %s290 = scalar_lea.vmem [#allocation6], %s289
          %s291 = smul.u32 16, %s33
          %s293 = ssub.s32 6144, 6144
          %294 = vsyncadd %s287, %s293
          %s295 = smul.addr %s291, 128
          %s296 = scalar_lea.hbm %s0, %s295
          %s298 = sshll.u32 1, 14
          %s299 = sxor.u32 4294967295, %s298
          %s301 = sld [smem:[#allocation0]]
          %s302 = sadd.s32 2, %s301
          %s304 = sshll.u32 7, 26
          %s305 = sxor.u32 4294967295, %s304
          %s306 = sand.u32 0, %s305
          %s307 = sshll.u32 %s302, 26
          %s308 = sor.u32 %s306, %s307
          %s309 = sshll.u32 %s290, 4
          %s310 = int_to_ptr.vmem [resolvable:$true] %s309
          %316 = sst [smem:[#allocation19]] 4096
          %s317 = scalar_lea.smem [#allocation19], 1
          %318 = sst [smem:[%s317]] 2048
          %s319 = scalar_lea.smem [#allocation19], 2
          %320 = sst [smem:[%s319]] 16
          %s321 = scalar_lea.smem [#allocation19], 3
          %322 = sst [smem:[%s321]] 128
          %s323 = scalar_lea.smem [#allocation19], 4
          %324 = sst [smem:[%s323]] 128
          %s325 = scalar_lea.smem [#allocation19], 5
          %326 = sst [smem:[%s325]] 8
          %328 = dma.general %s296, 6144, %s310, %s287, 131072, [#allocation19], %s308, 0
        $region32: #{tpu_custom_call.1} parent=27 // pred_fallthru
          _
        // Predicated region
        $region33: #{tpu_custom_call.1} parent=27 // pred_check
          %p329 = pneg %p84
        $region34: #{tpu_custom_call.1} parent=27 // pred_check_branch
          %331 = sbr.rel (%p329) target = $region36
        $region35: #{tpu_custom_call.1} parent=27 // pred_region
          %s332 = sand.u32 %s26, 1
          %s333 = scalar_lea.sflag [#allocation10], %s332
          %s334 = sand.u32 %s74, 1
          %s335 = smul.addr %s334, 48
          %s336 = scalar_lea.vmem [#allocation9], %s335
          %s338 = ssub.s32 768, 768
          %339 = vsyncadd %s333, %s338
          %s340 = smul.addr %s33, 6
          %s341 = smul.addr %s340, 128
          %s342 = scalar_lea.hbm %s1, %s341
          %s343 = sshll.u32 %s336, 4
          %s344 = int_to_ptr.vmem [resolvable:$true] %s343
          %349 = dma.hbm_to_vmem [thread:$0]  %s342, 768, %s344, %s333, 128, 128, 8
        $region36: #{tpu_custom_call.1} parent=27 // pred_fallthru
          _
        // Predicated region
        $region37: #{tpu_custom_call.1} parent=27 // pred_check
          %p350 = pneg %p112
        $region38: #{tpu_custom_call.1} parent=27 // pred_check_branch
          %352 = sbr.rel (%p350) target = $region40
        $region39: #{tpu_custom_call.1} parent=27 // pred_region
          #allocation21 [shape = 'u32[6]{0}', space=smem, size = 0x18, scoped, tag = 'DMA stride descriptor']
          %s353 = sand.u32 %s26, 1
          %s354 = scalar_lea.sflag [#allocation10], %s353
          %s355 = sand.u32 %s102, 1
          %s356 = smul.addr %s355, 384
          %s357 = scalar_lea.vmem [#allocation11], %s356
          %s358 = smul.u32 16, %s33
          %s360 = ssub.s32 6144, 6144
          %361 = vsyncadd %s354, %s360
          %s362 = smul.addr %s34, 96
          %s363 = sadd.s32 %s358, %s362
          %s364 = smul.addr %s363, 128
          %s365 = scalar_lea.hbm %s2, %s364
          %s367 = sshll.u32 1, 14
          %s368 = sxor.u32 4294967295, %s367
          %s370 = sld [smem:[#allocation0]]
          %s371 = sadd.s32 2, %s370
          %s373 = sshll.u32 7, 26
          %s374 = sxor.u32 4294967295, %s373
          %s375 = sand.u32 0, %s374
          %s376 = sshll.u32 %s371, 26
          %s377 = sor.u32 %s375, %s376
          %s378 = sshll.u32 %s357, 4
          %s379 = int_to_ptr.vmem [resolvable:$true] %s378
          %385 = sst [smem:[#allocation21]] 4096
          %s386 = scalar_lea.smem [#allocation21], 1
          %387 = sst [smem:[%s386]] 2048
          %s388 = scalar_lea.smem [#allocation21], 2
          %389 = sst [smem:[%s388]] 16
          %s390 = scalar_lea.smem [#allocation21], 3
          %391 = sst [smem:[%s390]] 128
          %s392 = scalar_lea.smem [#allocation21], 4
          %393 = sst [smem:[%s392]] 128
          %s394 = scalar_lea.smem [#allocation21], 5
          %395 = sst [smem:[%s394]] 8
          %397 = dma.general %s365, 6144, %s379, %s354, 131072, [#allocation21], %s377, 0
        $region40: #{tpu_custom_call.1} parent=27 // pred_fallthru
          _
        // Predicated region
        $region41: #{tpu_custom_call.1} parent=27 // pred_check
          %p398 = pneg %p140
        $region42: #{tpu_custom_call.1} parent=27 // pred_check_branch
          %400 = sbr.rel (%p398) target = $region44
        $region43: #{tpu_custom_call.1} parent=27 // pred_region
          %s401 = sand.u32 %s26, 1
          %s402 = scalar_lea.sflag [#allocation13], %s401
          %s403 = sand.u32 %s130, 1
          %s404 = smul.addr %s403, 48
          %s405 = scalar_lea.vmem [#allocation12], %s404
          %s407 = ssub.s32 768, 768
          %408 = vsyncadd %s402, %s407
          %s409 = smul.addr %s34, 6
          %s410 = smul.addr %s33, 24
          %s411 = sadd.s32 %s409, %s410
          %s412 = smul.addr %s411, 128
          %s413 = scalar_lea.hbm %s3, %s412
          %s414 = sshll.u32 %s405, 4
          %s415 = int_to_ptr.vmem [resolvable:$true] %s414
          %420 = dma.hbm_to_vmem [thread:$0]  %s413, 768, %s415, %s402, 128, 128, 8
        $region44: #{tpu_custom_call.1} parent=27 // pred_fallthru
          _
      $region28: #{tpu_custom_call.1} parent=5 // pred_fallthru
        _
      %p421 = scmp.le.s32.totalorder 1, %s26
      %p422 = scmp.lt.s32.totalorder %s26, 9
      %p423 = pnand %p421, %p422
      %p424 = pneg %p423
      // Predicated region
      $region45: #{tpu_custom_call.1} parent=5 // pred_check
        _
      $region46: #{tpu_custom_call.1} parent=5 // pred_check_branch
        %426 = sbr.rel (%p423) target = $region48
      $region47: #{tpu_custom_call.1} parent=5 // pred_region
        %s427 = ssub.s32 %s26, 1
        %s428 = sand.u32 %s51, 1
        %s429 = scalar_lea.sflag [#allocation7], %s428
        %s430 = sand.u32 %s51, 1
        %s431 = smul.addr %s430, 384
        %s432 = scalar_lea.vmem [#allocation6], %s431
        // Predicated region
        $region49: #{tpu_custom_call.1} parent=47 // pred_check
          %p433 = pneg %p64
        $region50: #{tpu_custom_call.1} parent=47 // pred_check_branch
          %435 = sbr.rel (%p433) target = $region52
        $region51: #{tpu_custom_call.1} parent=47 // pred_region
          %436 = dma.done %s429, 6144
        $region52: #{tpu_custom_call.1} parent=47 // pred_fallthru
          _
        %s437 = sand.u32 %s31, 1
        %s438 = scalar_lea.sflag [#allocation10], %s437
        %s439 = sand.u32 %s77, 1
        %s440 = smul.addr %s439, 48
        %s441 = scalar_lea.vmem [#allocation9], %s440
        // Predicated region
        $region53: #{tpu_custom_call.1} parent=47 // pred_check
          %p442 = pneg %p90
        $region54: #{tpu_custom_call.1} parent=47 // pred_check_branch
          %444 = sbr.rel (%p442) target = $region56
        $region55: #{tpu_custom_call.1} parent=47 // pred_region
          %445 = dma.done %s438, 768
        $region56: #{tpu_custom_call.1} parent=47 // pred_fallthru
          _
        %s446 = sand.u32 %s31, 1
        %s447 = scalar_lea.sflag [#allocation10], %s446
        %s448 = sand.u32 %s105, 1
        %s449 = smul.addr %s448, 384
        %s450 = scalar_lea.vmem [#allocation11], %s449
        // Predicated region
        $region57: #{tpu_custom_call.1} parent=47 // pred_check
          %p451 = pneg %p118
        $region58: #{tpu_custom_call.1} parent=47 // pred_check_branch
          %453 = sbr.rel (%p451) target = $region60
        $region59: #{tpu_custom_call.1} parent=47 // pred_region
          %454 = dma.done %s447, 6144
        $region60: #{tpu_custom_call.1} parent=47 // pred_fallthru
          _
        %s455 = sand.u32 %s31, 1
        %s456 = scalar_lea.sflag [#allocation13], %s455
        %s457 = sand.u32 %s133, 1
        %s458 = smul.addr %s457, 48
        %s459 = scalar_lea.vmem [#allocation12], %s458
        // Predicated region
        $region61: #{tpu_custom_call.1} parent=47 // pred_check
          %p460 = pneg %p146
        $region62: #{tpu_custom_call.1} parent=47 // pred_check_branch
          %462 = sbr.rel (%p460) target = $region64
        $region63: #{tpu_custom_call.1} parent=47 // pred_region
          %463 = dma.done %s456, 768
        $region64: #{tpu_custom_call.1} parent=47 // pred_fallthru
          _
        // Predicated region
        $region65: #{tpu_custom_call.1} parent=47 // pred_check
          %p464 = pneg %p167
        $region66: #{tpu_custom_call.1} parent=47 // pred_check_branch
          %466 = sbr.rel (%p464) target = $region68
        $region67: #{tpu_custom_call.1} parent=47 // pred_region
          %467 = dma.done [#allocation13], 2048
        $region68: #{tpu_custom_call.1} parent=47 // pred_fallthru
          _
        // Predicated region
        $region69: #{tpu_custom_call.1} parent=47 // pred_check
          %p468 = pneg %p209
        $region70: #{tpu_custom_call.1} parent=47 // pred_check_branch
          %470 = sbr.rel (%p468) target = $region72
        $region71: #{tpu_custom_call.1} parent=47 // pred_region
          %471 = dma.done [#allocation16], 2048
        $region72: #{tpu_custom_call.1} parent=47 // pred_fallthru
          _
        %s472 = sand.u32 %s51, 1
        %s473 = scalar_lea.sflag [#allocation7], %s472
        %s474 = sand.u32 %s51, 1
        %s475 = smul.addr %s474, 384
        %s476 = scalar_lea.vmem [#allocation6], %s475
        %p477 = pneg %p64
        %p478 = pneg %p61
        %s479 = sand.u32 %s31, 1
        %s480 = scalar_lea.sflag [#allocation10], %s479
        %s481 = sand.u32 %s77, 1
        %s482 = smul.addr %s481, 48
        %s483 = scalar_lea.vmem [#allocation9], %s482
        %p484 = pneg %p90
        %p485 = pneg %p87
        %s486 = sand.u32 %s31, 1
        %s487 = scalar_lea.sflag [#allocation10], %s486
        %s488 = sand.u32 %s105, 1
        %s489 = smul.addr %s488, 384
        %s490 = scalar_lea.vmem [#allocation11], %s489
        %p491 = pneg %p118
        %p492 = pneg %p115
        %s493 = sand.u32 %s31, 1
        %s494 = scalar_lea.sflag [#allocation13], %s493
        %s495 = sand.u32 %s133, 1
        %s496 = smul.addr %s495, 48
        %s497 = scalar_lea.vmem [#allocation12], %s496
        %p498 = pneg %p146
        %p499 = pneg %p143
        %p500 = pneg %p167
        %p501 = pneg %p164
        %p502 = pneg %p188
        %p503 = pneg %p185
        %p504 = pneg %p209
        %p505 = pneg %p206
        %p506 = pneg %p235
        %p507 = pneg %p232
        %s508 = sand.u32 %s222, 1
        %s509 = scalar_lea.sflag [#allocation8], %s508
        %s510 = sand.u32 %s222, 1
        %s511 = smul.addr %s510, 8
        %s512 = scalar_lea.vmem [#allocation17], %s511
        %s513 = smul.u32 16, %s35
        %s514 = smul.u32 16, %s35
        %v515 = vld [vmem:[#allocation14] sm:$0xff]
        %v516 = vld [vmem:[#allocation14 + $0x8] sm:$0xff]
        %v517 = vld [vmem:[#allocation14 + $0x10] sm:$0xff]
        %v518 = vld [vmem:[#allocation14 + $0x18] sm:$0xff]
        %v519 = vld [vmem:[#allocation14 + $0x20] sm:$0xff]
        %v520 = vld [vmem:[#allocation14 + $0x28] sm:$0xff]
        %v521 = vld [vmem:[#allocation14 + $0x30] sm:$0xff]
        %v522 = vld [vmem:[#allocation14 + $0x38] sm:$0xff]
        %v523 = vld [vmem:[#allocation14 + $0x40] sm:$0xff]
        %v524 = vld [vmem:[#allocation14 + $0x48] sm:$0xff]
        %v525 = vld [vmem:[#allocation14 + $0x50] sm:$0xff]
        %v526 = vld [vmem:[#allocation14 + $0x58] sm:$0xff]
        %v527 = vld [vmem:[#allocation14 + $0x60] sm:$0xff]
        %v528 = vld [vmem:[#allocation14 + $0x68] sm:$0xff]
        %v529 = vld [vmem:[#allocation14 + $0x70] sm:$0xff]
        %v530 = vld [vmem:[#allocation14 + $0x78] sm:$0xff]
        %v531 = vld [vmem:[%s5] sm:$0xff]
        %v532 = vld [vmem:[%s5 + $0x8] sm:$0xff]
        %v533 = vld [vmem:[%s5 + $0x10] sm:$0xff]
        %v534 = vld [vmem:[%s5 + $0x18] sm:$0xff]
        %v535 = vld [vmem:[%s5 + $0x20] sm:$0xff]
        %v536 = vld [vmem:[%s5 + $0x28] sm:$0xff]
        %v537 = vld [vmem:[%s5 + $0x30] sm:$0xff]
        %v538 = vld [vmem:[%s5 + $0x38] sm:$0xff]
        %v539 = vld [vmem:[%s5 + $0x40] sm:$0xff]
        %v540 = vld [vmem:[%s5 + $0x48] sm:$0xff]
        %v541 = vld [vmem:[%s5 + $0x50] sm:$0xff]
        %v542 = vld [vmem:[%s5 + $0x58] sm:$0xff]
        %v543 = vld [vmem:[%s5 + $0x60] sm:$0xff]
        %v544 = vld [vmem:[%s5 + $0x68] sm:$0xff]
        %v545 = vld [vmem:[%s5 + $0x70] sm:$0xff]
        %v546 = vld [vmem:[%s5 + $0x78] sm:$0xff]
        %v547 = vld [vmem:[#allocation15] sm:$0xff]
        %v548 = vld [vmem:[#allocation15 + $0x8] sm:$0xff]
        %v549 = vld [vmem:[#allocation15 + $0x10] sm:$0xff]
        %v550 = vld [vmem:[#allocation15 + $0x18] sm:$0xff]
        %v551 = vld [vmem:[#allocation15 + $0x20] sm:$0xff]
        %v552 = vld [vmem:[#allocation15 + $0x28] sm:$0xff]
        %v553 = vld [vmem:[#allocation15 + $0x30] sm:$0xff]
        %v554 = vld [vmem:[#allocation15 + $0x38] sm:$0xff]
        %v555 = vld [vmem:[#allocation15 + $0x40] sm:$0xff]
        %v556 = vld [vmem:[#allocation15 + $0x48] sm:$0xff]
        %v557 = vld [vmem:[#allocation15 + $0x50] sm:$0xff]
        %v558 = vld [vmem:[#allocation15 + $0x58] sm:$0xff]
        %v559 = vld [vmem:[#allocation15 + $0x60] sm:$0xff]
        %v560 = vld [vmem:[#allocation15 + $0x68] sm:$0xff]
        %v561 = vld [vmem:[#allocation15 + $0x70] sm:$0xff]
        %v562 = vld [vmem:[#allocation15 + $0x78] sm:$0xff]
        %v563 = vld [vmem:[%s432] sm:$0xff]
        %v564 = vld [vmem:[%s432 + $0x8] sm:$0xff]
        %v565 = vld [vmem:[%s432 + $0x10] sm:$0xff]
        %v566 = vld [vmem:[%s432 + $0x18] sm:$0xff]
        %v567 = vld [vmem:[%s432 + $0x20] sm:$0xff]
        %v568 = vld [vmem:[%s432 + $0x28] sm:$0xff]
        %v569 = vld [vmem:[%s432 + $0x30] sm:$0xff]
        %v570 = vld [vmem:[%s432 + $0x38] sm:$0xff]
        %v571 = vld [vmem:[%s432 + $0x40] sm:$0xff]
        %v572 = vld [vmem:[%s432 + $0x48] sm:$0xff]
        %v573 = vld [vmem:[%s432 + $0x50] sm:$0xff]
        %v574 = vld [vmem:[%s432 + $0x58] sm:$0xff]
        %v575 = vld [vmem:[%s432 + $0x60] sm:$0xff]
        %v576 = vld [vmem:[%s432 + $0x68] sm:$0xff]
        %v577 = vld [vmem:[%s432 + $0x70] sm:$0xff]
        %v578 = vld [vmem:[%s432 + $0x78] sm:$0xff]
        %v579 = vld [vmem:[%s432 + $0x80] sm:$0xff]
        %v580 = vld [vmem:[%s432 + $0x88] sm:$0xff]
        %v581 = vld [vmem:[%s432 + $0x90] sm:$0xff]
        %v582 = vld [vmem:[%s432 + $0x98] sm:$0xff]
        %v583 = vld [vmem:[%s432 + $0xa0] sm:$0xff]
        %v584 = vld [vmem:[%s432 + $0xa8] sm:$0xff]
        %v585 = vld [vmem:[%s432 + $0xb0] sm:$0xff]
        %v586 = vld [vmem:[%s432 + $0xb8] sm:$0xff]
        %v587 = vld [vmem:[%s432 + $0xc0] sm:$0xff]
        %v588 = vld [vmem:[%s432 + $0xc8] sm:$0xff]
        %v589 = vld [vmem:[%s432 + $0xd0] sm:$0xff]
        %v590 = vld [vmem:[%s432 + $0xd8] sm:$0xff]
        %v591 = vld [vmem:[%s432 + $0xe0] sm:$0xff]
        %v592 = vld [vmem:[%s432 + $0xe8] sm:$0xff]
        %v593 = vld [vmem:[%s432 + $0xf0] sm:$0xff]
        %v594 = vld [vmem:[%s432 + $0xf8] sm:$0xff]
        %v595 = vld [vmem:[%s432 + $0x100] sm:$0xff]
        %v596 = vld [vmem:[%s432 + $0x108] sm:$0xff]
        %v597 = vld [vmem:[%s432 + $0x110] sm:$0xff]
        %v598 = vld [vmem:[%s432 + $0x118] sm:$0xff]
        %v599 = vld [vmem:[%s432 + $0x120] sm:$0xff]
        %v600 = vld [vmem:[%s432 + $0x128] sm:$0xff]
        %v601 = vld [vmem:[%s432 + $0x130] sm:$0xff]
        %v602 = vld [vmem:[%s432 + $0x138] sm:$0xff]
        %v603 = vld [vmem:[%s432 + $0x140] sm:$0xff]
        %v604 = vld [vmem:[%s432 + $0x148] sm:$0xff]
        %v605 = vld [vmem:[%s432 + $0x150] sm:$0xff]
        %v606 = vld [vmem:[%s432 + $0x158] sm:$0xff]
        %v607 = vld [vmem:[%s432 + $0x160] sm:$0xff]
        %v608 = vld [vmem:[%s432 + $0x168] sm:$0xff]
        %v609 = vld [vmem:[%s432 + $0x170] sm:$0xff]
        %v610 = vld [vmem:[%s432 + $0x178] sm:$0xff]
        %v611 = vld [vmem:[%s441] sm:$0xff]
        %v612 = vld [vmem:[%s441 + $0x8] sm:$0xff]
        %v613 = vld [vmem:[%s441 + $0x10] sm:$0xff]
        %v614 = vld [vmem:[%s441 + $0x18] sm:$0xff]
        %v615 = vld [vmem:[%s441 + $0x20] sm:$0xff]
        %v616 = vld [vmem:[%s441 + $0x28] sm:$0xff]
        %p617 = scmp.eq.s32.totalorder %s36, 0
        // Predicated region
        $region73: #{tpu_custom_call.1} parent=47 // pred_check
          %p618 = pneg %p617
        $region74: #{tpu_custom_call.1} parent=47 // pred_check_branch
          %620 = sbr.rel (%p618) target = $region76
        $region75: #{tpu_custom_call.1} parent=47 // pred_region
          %v621 = vadd.f32 %v563, %v579
          %v622 = vadd.f32 %v621, %v595
          %v623 = vadd.f32 %v564, %v580
          %v624 = vadd.f32 %v623, %v596
          %v625 = vadd.f32 %v565, %v581
          %v626 = vadd.f32 %v625, %v597
          %v627 = vadd.f32 %v566, %v582
          %v628 = vadd.f32 %v627, %v598
          %v629 = vadd.f32 %v567, %v583
          %v630 = vadd.f32 %v629, %v599
          %v631 = vadd.f32 %v568, %v584
          %v632 = vadd.f32 %v631, %v600
          %v633 = vadd.f32 %v569, %v585
          %v634 = vadd.f32 %v633, %v601
          %v635 = vadd.f32 %v570, %v586
          %v636 = vadd.f32 %v635, %v602
          %v637 = vadd.f32 %v571, %v587
          %v638 = vadd.f32 %v637, %v603
          %v639 = vadd.f32 %v572, %v588
          %v640 = vadd.f32 %v639, %v604
          %v641 = vadd.f32 %v573, %v589
          %v642 = vadd.f32 %v641, %v605
          %v643 = vadd.f32 %v574, %v590
          %v644 = vadd.f32 %v643, %v606
          %v645 = vadd.f32 %v575, %v591
          %v646 = vadd.f32 %v645, %v607
          %v647 = vadd.f32 %v576, %v592
          %v648 = vadd.f32 %v647, %v608
          %v649 = vadd.f32 %v577, %v593
          %v650 = vadd.f32 %v649, %v609
          %v651 = vadd.f32 %v578, %v594
          %v652 = vadd.f32 %v651, %v610
          %v653 = vmul.f32 %v622, 0.33333334
          %v654 = vmul.f32 %v624, 0.33333334
          %v655 = vmul.f32 %v626, 0.33333334
          %v656 = vmul.f32 %v628, 0.33333334
          %v657 = vmul.f32 %v630, 0.33333334
          %v658 = vmul.f32 %v632, 0.33333334
          %v659 = vmul.f32 %v634, 0.33333334
          %v660 = vmul.f32 %v636, 0.33333334
          %v661 = vmul.f32 %v638, 0.33333334
          %v662 = vmul.f32 %v640, 0.33333334
          %v663 = vmul.f32 %v642, 0.33333334
          %v664 = vmul.f32 %v644, 0.33333334
          %v665 = vmul.f32 %v646, 0.33333334
          %v666 = vmul.f32 %v648, 0.33333334
          %v667 = vmul.f32 %v650, 0.33333334
          %v668 = vmul.f32 %v652, 0.33333334
          %v669 = vmul.f32 %v563, %v563
          %v670 = vmul.f32 %v564, %v564
          %v671 = vmul.f32 %v565, %v565
          %v672 = vmul.f32 %v566, %v566
          %v673 = vmul.f32 %v567, %v567
          %v674 = vmul.f32 %v568, %v568
          %v675 = vmul.f32 %v569, %v569
          %v676 = vmul.f32 %v570, %v570
          %v677 = vmul.f32 %v571, %v571
          %v678 = vmul.f32 %v572, %v572
          %v679 = vmul.f32 %v573, %v573
          %v680 = vmul.f32 %v574, %v574
          %v681 = vmul.f32 %v575, %v575
          %v682 = vmul.f32 %v576, %v576
          %v683 = vmul.f32 %v577, %v577
          %v684 = vmul.f32 %v578, %v578
          %v685 = vmul.f32 %v579, %v579
          %v686 = vmul.f32 %v580, %v580
          %v687 = vmul.f32 %v581, %v581
          %v688 = vmul.f32 %v582, %v582
          %v689 = vmul.f32 %v583, %v583
          %v690 = vmul.f32 %v584, %v584
          %v691 = vmul.f32 %v585, %v585
          %v692 = vmul.f32 %v586, %v586
          %v693 = vmul.f32 %v587, %v587
          %v694 = vmul.f32 %v588, %v588
          %v695 = vmul.f32 %v589, %v589
          %v696 = vmul.f32 %v590, %v590
          %v697 = vmul.f32 %v591, %v591
          %v698 = vmul.f32 %v592, %v592
          %v699 = vmul.f32 %v593, %v593
          %v700 = vmul.f32 %v594, %v594
          %v701 = vmul.f32 %v595, %v595
          %v702 = vmul.f32 %v596, %v596
          %v703 = vmul.f32 %v597, %v597
          %v704 = vmul.f32 %v598, %v598
          %v705 = vmul.f32 %v599, %v599
          %v706 = vmul.f32 %v600, %v600
          %v707 = vmul.f32 %v601, %v601
          %v708 = vmul.f32 %v602, %v602
          %v709 = vmul.f32 %v603, %v603
          %v710 = vmul.f32 %v604, %v604
          %v711 = vmul.f32 %v605, %v605
          %v712 = vmul.f32 %v606, %v606
          %v713 = vmul.f32 %v607, %v607
          %v714 = vmul.f32 %v608, %v608
          %v715 = vmul.f32 %v609, %v609
          %v716 = vmul.f32 %v610, %v610
          %v717 = vadd.f32 %v669, %v685
          %v718 = vadd.f32 %v717, %v701
          %v719 = vadd.f32 %v670, %v686
          %v720 = vadd.f32 %v719, %v702
          %v721 = vadd.f32 %v671, %v687
          %v722 = vadd.f32 %v721, %v703
          %v723 = vadd.f32 %v672, %v688
          %v724 = vadd.f32 %v723, %v704
          %v725 = vadd.f32 %v673, %v689
          %v726 = vadd.f32 %v725, %v705
          %v727 = vadd.f32 %v674, %v690
          %v728 = vadd.f32 %v727, %v706
          %v729 = vadd.f32 %v675, %v691
          %v730 = vadd.f32 %v729, %v707
          %v731 = vadd.f32 %v676, %v692
          %v732 = vadd.f32 %v731, %v708
          %v733 = vadd.f32 %v677, %v693
          %v734 = vadd.f32 %v733, %v709
          %v735 = vadd.f32 %v678, %v694
          %v736 = vadd.f32 %v735, %v710
          %v737 = vadd.f32 %v679, %v695
          %v738 = vadd.f32 %v737, %v711
          %v739 = vadd.f32 %v680, %v696
          %v740 = vadd.f32 %v739, %v712
          %v741 = vadd.f32 %v681, %v697
          %v742 = vadd.f32 %v741, %v713
          %v743 = vadd.f32 %v682, %v698
          %v744 = vadd.f32 %v743, %v714
          %v745 = vadd.f32 %v683, %v699
          %v746 = vadd.f32 %v745, %v715
          %v747 = vadd.f32 %v684, %v700
          %v748 = vadd.f32 %v747, %v716
          %v749 = vmul.f32 %v718, 0.33333334
          %v750 = vmul.f32 %v720, 0.33333334
          %v751 = vmul.f32 %v722, 0.33333334
          %v752 = vmul.f32 %v724, 0.33333334
          %v753 = vmul.f32 %v726, 0.33333334
          %v754 = vmul.f32 %v728, 0.33333334
          %v755 = vmul.f32 %v730, 0.33333334
          %v756 = vmul.f32 %v732, 0.33333334
          %v757 = vmul.f32 %v734, 0.33333334
          %v758 = vmul.f32 %v736, 0.33333334
          %v759 = vmul.f32 %v738, 0.33333334
          %v760 = vmul.f32 %v740, 0.33333334
          %v761 = vmul.f32 %v742, 0.33333334
          %v762 = vmul.f32 %v744, 0.33333334
          %v763 = vmul.f32 %v746, 0.33333334
          %v764 = vmul.f32 %v748, 0.33333334
          %v765 = vadd.f32 %v611, %v613
          %v766 = vadd.f32 %v765, %v615
          %v767 = vadd.f32 %v612, %v614
          %v768 = vadd.f32 %v767, %v616
          %v769 = vmul.f32 %v766, 0.33333334
          %v770 = vmul.f32 %v768, 0.33333334
          %v771 = vmul.f32 %v611, %v611
          %v772 = vmul.f32 %v612, %v612
          %v773 = vmul.f32 %v613, %v613
          %v774 = vmul.f32 %v614, %v614
          %v775 = vmul.f32 %v615, %v615
          %v776 = vmul.f32 %v616, %v616
          %v777 = vadd.f32 %v771, %v773
          %v778 = vadd.f32 %v777, %v775
          %v779 = vadd.f32 %v772, %v774
          %v780 = vadd.f32 %v779, %v776
          %v781 = vmul.f32 %v778, 0.33333334
          %v782 = vmul.f32 %v780, 0.33333334
          %783 = vmatprep.subr.mxu0 0.0
          %784 = vmatpush1.msra.mxu0 %v562
          %785 = vmatprep.subr.mxu0 0.0
          %786 = vmatpush1.msra.mxu0 %v561
          %787 = vmatprep.subr.mxu0 0.0
          %788 = vmatpush1.msra.mxu0 %v560
          %789 = vmatprep.subr.mxu0 0.0
          %790 = vmatpush1.msra.mxu0 %v559
          %791 = vmatprep.subr.mxu0 0.0
          %792 = vmatpush1.msra.mxu0 %v558
          %793 = vmatprep.subr.mxu0 0.0
          %794 = vmatpush1.msra.mxu0 %v557
          %795 = vmatprep.subr.mxu0 0.0
          %796 = vmatpush1.msra.mxu0 %v556
          %797 = vmatprep.subr.mxu0 0.0
          %798 = vmatpush1.msra.mxu0 %v555
          %799 = vmatprep.subr.mxu0 0.0
          %800 = vmatpush1.msra.mxu0 %v554
          %801 = vmatprep.subr.mxu0 0.0
          %802 = vmatpush1.msra.mxu0 %v553
          %803 = vmatprep.subr.mxu0 0.0
          %804 = vmatpush1.msra.mxu0 %v552
          %805 = vmatprep.subr.mxu0 0.0
          %806 = vmatpush1.msra.mxu0 %v551
          %807 = vmatprep.subr.mxu0 0.0
          %808 = vmatpush1.msra.mxu0 %v550
          %809 = vmatprep.subr.mxu0 0.0
          %810 = vmatpush1.msra.mxu0 %v549
          %811 = vmatprep.subr.mxu0 0.0
          %812 = vmatpush1.msra.mxu0 %v548
          %813 = vmatprep.subr.mxu0 0.0
          %814 = vmatpush1.msra.mxu0 %v547
          %815 = vmatprep.subr.mxu0 0.0
          %816 = vmatpush2.msra.mxu0 0.0
          %817 = vmatprep.subr.mxu0 0.0
          %818 = vmatpush2.msra.mxu0 0.0
          %819 = vmatprep.subr.mxu0 0.0
          %820 = vmatpush2.msra.mxu0 0.0
          %821 = vmatprep.subr.mxu0 0.0
          %822 = vmatpush2.msra.mxu0 0.0
          %823 = vmatprep.subr.mxu0 0.0
          %824 = vmatpush2.msra.mxu0 0.0
          %825 = vmatprep.subr.mxu0 0.0
          %826 = vmatpush2.msra.mxu0 0.0
          %827 = vmatprep.subr.mxu0 0.0
          %828 = vmatpush2.msra.mxu0 0.0
          %829 = vmatprep.subr.mxu0 0.0
          %830 = vmatpush2.msra.mxu0 0.0
          %831 = vmatprep.subr.mxu0 0.0
          %832 = vmatpush2.msra.mxu0 0.0
          %833 = vmatprep.subr.mxu0 0.0
          %834 = vmatpush2.msra.mxu0 0.0
          %835 = vmatprep.subr.mxu0 0.0
          %836 = vmatpush2.msra.mxu0 0.0
          %837 = vmatprep.subr.mxu0 0.0
          %838 = vmatpush2.msra.mxu0 0.0
          %839 = vmatprep.subr.mxu0 0.0
          %840 = vmatpush2.msra.mxu0 0.0
          %841 = vmatprep.subr.mxu0 0.0
          %842 = vmatpush2.msra.mxu0 0.0
          %843 = vmatprep.subr.mxu0 0.0
          %844 = vmatpush2.msra.mxu0 0.0
          %845 = vmatprep.subr.mxu0 0.0
          %846 = vmatpush2.msra.mxu0 0.0
          %847 = vmatprep.mubr.f32.mxu0 0.0
          %848 = vmatmul.mubr.f32.gmra.mxu0 %v653
          %v849 = vpop.f32.mrf.mxu0
          %v850 = vadd.f32 0.0, %v849
          %v851 = vpop.f32.mrf.mxu0
          %852 = vmatprep.mubr.f32.mxu0 0.0
          %853 = vmatmul.mubr.f32.gmra.mxu0 %v654
          %v854 = vpop.f32.mrf.mxu0
          %v855 = vadd.f32 0.0, %v854
          %v856 = vpop.f32.mrf.mxu0
          %857 = vmatprep.mubr.f32.mxu0 0.0
          %858 = vmatmul.mubr.f32.gmra.mxu0 %v655
          %v859 = vpop.f32.mrf.mxu0
          %v860 = vadd.f32 0.0, %v859
          %v861 = vpop.f32.mrf.mxu0
          %862 = vmatprep.mubr.f32.mxu0 0.0
          %863 = vmatmul.mubr.f32.gmra.mxu0 %v656
          %v864 = vpop.f32.mrf.mxu0
          %v865 = vadd.f32 0.0, %v864
          %v866 = vpop.f32.mrf.mxu0
          %867 = vmatprep.mubr.f32.mxu0 0.0
          %868 = vmatmul.mubr.f32.gmra.mxu0 %v657
          %v869 = vpop.f32.mrf.mxu0
          %v870 = vadd.f32 0.0, %v869
          %v871 = vpop.f32.mrf.mxu0
          %872 = vmatprep.mubr.f32.mxu0 0.0
          %873 = vmatmul.mubr.f32.gmra.mxu0 %v658
          %v874 = vpop.f32.mrf.mxu0
          %v875 = vadd.f32 0.0, %v874
          %v876 = vpop.f32.mrf.mxu0
          %877 = vmatprep.mubr.f32.mxu0 0.0
          %878 = vmatmul.mubr.f32.gmra.mxu0 %v659
          %v879 = vpop.f32.mrf.mxu0
          %v880 = vadd.f32 0.0, %v879
          %v881 = vpop.f32.mrf.mxu0
          %882 = vmatprep.mubr.f32.mxu0 0.0
          %883 = vmatmul.mubr.f32.gmra.mxu0 %v660
          %v884 = vpop.f32.mrf.mxu0
          %v885 = vadd.f32 0.0, %v884
          %v886 = vpop.f32.mrf.mxu0
          %887 = vmatprep.mubr.f32.mxu0 0.0
          %888 = vmatmul.mubr.f32.gmra.mxu0 %v661
          %v889 = vpop.f32.mrf.mxu0
          %v890 = vadd.f32 0.0, %v889
          %v891 = vpop.f32.mrf.mxu0
          %892 = vmatprep.mubr.f32.mxu0 0.0
          %893 = vmatmul.mubr.f32.gmra.mxu0 %v662
          %v894 = vpop.f32.mrf.mxu0
          %v895 = vadd.f32 0.0, %v894
          %v896 = vpop.f32.mrf.mxu0
          %897 = vmatprep.mubr.f32.mxu0 0.0
          %898 = vmatmul.mubr.f32.gmra.mxu0 %v663
          %v899 = vpop.f32.mrf.mxu0
          %v900 = vadd.f32 0.0, %v899
          %v901 = vpop.f32.mrf.mxu0
          %902 = vmatprep.mubr.f32.mxu0 0.0
          %903 = vmatmul.mubr.f32.gmra.mxu0 %v664
          %v904 = vpop.f32.mrf.mxu0
          %v905 = vadd.f32 0.0, %v904
          %v906 = vpop.f32.mrf.mxu0
          %907 = vmatprep.mubr.f32.mxu0 0.0
          %908 = vmatmul.mubr.f32.gmra.mxu0 %v665
          %v909 = vpop.f32.mrf.mxu0
          %v910 = vadd.f32 0.0, %v909
          %v911 = vpop.f32.mrf.mxu0
          %912 = vmatprep.mubr.f32.mxu0 0.0
          %913 = vmatmul.mubr.f32.gmra.mxu0 %v666
          %v914 = vpop.f32.mrf.mxu0
          %v915 = vadd.f32 0.0, %v914
          %v916 = vpop.f32.mrf.mxu0
          %917 = vmatprep.mubr.f32.mxu0 0.0
          %918 = vmatmul.mubr.f32.gmra.mxu0 %v667
          %v919 = vpop.f32.mrf.mxu0
          %v920 = vadd.f32 0.0, %v919
          %v921 = vpop.f32.mrf.mxu0
          %922 = vmatprep.mubr.f32.mxu0 0.0
          %923 = vmatmul.mubr.f32.gmra.mxu0 %v668
          %v924 = vpop.f32.mrf.mxu0
          %v925 = vadd.f32 0.0, %v924
          %v926 = vpop.f32.mrf.mxu0
          %927 = vmatprep.mubr.f32.mxu0 0.0
          %928 = vmatmul.mubr.f32.gmra.mxu0 %v749
          %v929 = vpop.f32.mrf.mxu0
          %v930 = vadd.f32 0.0, %v929
          %v931 = vpop.f32.mrf.mxu0
          %932 = vmatprep.mubr.f32.mxu0 0.0
          %933 = vmatmul.mubr.f32.gmra.mxu0 %v750
          %v934 = vpop.f32.mrf.mxu0
          %v935 = vadd.f32 0.0, %v934
          %v936 = vpop.f32.mrf.mxu0
          %937 = vmatprep.mubr.f32.mxu0 0.0
          %938 = vmatmul.mubr.f32.gmra.mxu0 %v751
          %v939 = vpop.f32.mrf.mxu0
          %v940 = vadd.f32 0.0, %v939
          %v941 = vpop.f32.mrf.mxu0
          %942 = vmatprep.mubr.f32.mxu0 0.0
          %943 = vmatmul.mubr.f32.gmra.mxu0 %v752
          %v944 = vpop.f32.mrf.mxu0
          %v945 = vadd.f32 0.0, %v944
          %v946 = vpop.f32.mrf.mxu0
          %947 = vmatprep.mubr.f32.mxu0 0.0
          %948 = vmatmul.mubr.f32.gmra.mxu0 %v753
          %v949 = vpop.f32.mrf.mxu0
          %v950 = vadd.f32 0.0, %v949
          %v951 = vpop.f32.mrf.mxu0
          %952 = vmatprep.mubr.f32.mxu0 0.0
          %953 = vmatmul.mubr.f32.gmra.mxu0 %v754
          %v954 = vpop.f32.mrf.mxu0
          %v955 = vadd.f32 0.0, %v954
          %v956 = vpop.f32.mrf.mxu0
          %957 = vmatprep.mubr.f32.mxu0 0.0
          %958 = vmatmul.mubr.f32.gmra.mxu0 %v755
          %v959 = vpop.f32.mrf.mxu0
          %v960 = vadd.f32 0.0, %v959
          %v961 = vpop.f32.mrf.mxu0
          %962 = vmatprep.mubr.f32.mxu0 0.0
          %963 = vmatmul.mubr.f32.gmra.mxu0 %v756
          %v964 = vpop.f32.mrf.mxu0
          %v965 = vadd.f32 0.0, %v964
          %v966 = vpop.f32.mrf.mxu0
          %967 = vmatprep.mubr.f32.mxu0 0.0
          %968 = vmatmul.mubr.f32.gmra.mxu0 %v757
          %v969 = vpop.f32.mrf.mxu0
          %v970 = vadd.f32 0.0, %v969
          %v971 = vpop.f32.mrf.mxu0
          %972 = vmatprep.mubr.f32.mxu0 0.0
          %973 = vmatmul.mubr.f32.gmra.mxu0 %v758
          %v974 = vpop.f32.mrf.mxu0
          %v975 = vadd.f32 0.0, %v974
          %v976 = vpop.f32.mrf.mxu0
          %977 = vmatprep.mubr.f32.mxu0 0.0
          %978 = vmatmul.mubr.f32.gmra.mxu0 %v759
          %v979 = vpop.f32.mrf.mxu0
          %v980 = vadd.f32 0.0, %v979
          %v981 = vpop.f32.mrf.mxu0
          %982 = vmatprep.mubr.f32.mxu0 0.0
          %983 = vmatmul.mubr.f32.gmra.mxu0 %v760
          %v984 = vpop.f32.mrf.mxu0
          %v985 = vadd.f32 0.0, %v984
          %v986 = vpop.f32.mrf.mxu0
          %987 = vmatprep.mubr.f32.mxu0 0.0
          %988 = vmatmul.mubr.f32.gmra.mxu0 %v761
          %v989 = vpop.f32.mrf.mxu0
          %v990 = vadd.f32 0.0, %v989
          %v991 = vpop.f32.mrf.mxu0
          %992 = vmatprep.mubr.f32.mxu0 0.0
          %993 = vmatmul.mubr.f32.gmra.mxu0 %v762
          %v994 = vpop.f32.mrf.mxu0
          %v995 = vadd.f32 0.0, %v994
          %v996 = vpop.f32.mrf.mxu0
          %997 = vmatprep.mubr.f32.mxu0 0.0
          %998 = vmatmul.mubr.f32.gmra.mxu0 %v763
          %v999 = vpop.f32.mrf.mxu0
          %v1000 = vadd.f32 0.0, %v999
          %v1001 = vpop.f32.mrf.mxu0
          %1002 = vmatprep.mubr.f32.mxu0 0.0
          %1003 = vmatmul.mubr.f32.gmra.mxu0 %v764
          %v1004 = vpop.f32.mrf.mxu0
          %v1005 = vadd.f32 0.0, %v1004
          %v1006 = vpop.f32.mrf.mxu0
          %1007 = vmatprep.mubr.f32.mxu0 0.0
          %1008 = vmatmul.mubr.f32.gmra.mxu0 %v769
          %v1009 = vpop.f32.mrf.mxu0
          %v1010 = vadd.f32 0.0, %v1009
          %v1011 = vpop.f32.mrf.mxu0
          %1012 = vmatprep.mubr.f32.mxu0 0.0
          %1013 = vmatmul.mubr.f32.gmra.mxu0 %v770
          %v1014 = vpop.f32.mrf.mxu0
          %v1015 = vadd.f32 0.0, %v1014
          %v1016 = vpop.f32.mrf.mxu0
          %1017 = vmatprep.mubr.f32.mxu0 0.0
          %1018 = vmatmul.mubr.f32.gmra.mxu0 %v781
          %v1019 = vpop.f32.mrf.mxu0
          %v1020 = vadd.f32 0.0, %v1019
          %v1021 = vpop.f32.mrf.mxu0
          %1022 = vmatprep.mubr.f32.mxu0 0.0
          %1023 = vmatmul.mubr.f32.gmra.mxu0 %v782
          %v1024 = vpop.f32.mrf.mxu0
          %v1025 = vadd.f32 0.0, %v1024
          %v1026 = vpop.f32.mrf.mxu0
          %1027 = vdwg.mxu0
          %vm1028 = vcmask 130048
          %v1030 = vsel %vm1028, %v531, 0
          %v1033 = vsel %vm1028, %v532, 0
          %v1036 = vsel %vm1028, %v533, 0
          %v1039 = vsel %vm1028, %v534, 0
          %v1042 = vsel %vm1028, %v535, 0
          %v1045 = vsel %vm1028, %v536, 0
          %v1048 = vsel %vm1028, %v537, 0
          %v1051 = vsel %vm1028, %v538, 0
          %v1054 = vsel %vm1028, %v539, 0
          %v1057 = vsel %vm1028, %v540, 0
          %v1060 = vsel %vm1028, %v541, 0
          %v1063 = vsel %vm1028, %v542, 0
          %v1066 = vsel %vm1028, %v543, 0
          %v1069 = vsel %vm1028, %v544, 0
          %v1072 = vsel %vm1028, %v545, 0
          %v1075 = vsel %vm1028, %v546, 0
          %1077 = vmatprep.subr.mxu0 0.0
          %1078 = vmatpush1.msra.mxu0 0.0
          %1079 = vmatprep.subr.mxu0 0.0
          %1080 = vmatpush1.msra.mxu0 0.0
          %1081 = vmatprep.subr.mxu0 0.0
          %1082 = vmatpush1.msra.mxu0 0.0
          %1083 = vmatprep.subr.mxu0 0.0
          %1084 = vmatpush1.msra.mxu0 0.0
          %1085 = vmatprep.subr.mxu0 0.0
          %1086 = vmatpush1.msra.mxu0 0.0
          %1087 = vmatprep.subr.mxu0 0.0
          %1088 = vmatpush1.msra.mxu0 0.0
          %1089 = vmatprep.subr.mxu0 0.0
          %1090 = vmatpush1.msra.mxu0 0.0
          %1091 = vmatprep.subr.mxu0 0.0
          %1092 = vmatpush1.msra.mxu0 0.0
          %1093 = vmatprep.subr.mxu0 0.0
          %1094 = vmatpush1.msra.mxu0 0.0
          %1095 = vmatprep.subr.mxu0 0.0
          %1096 = vmatpush1.msra.mxu0 0.0
          %1097 = vmatprep.subr.mxu0 0.0
          %1098 = vmatpush1.msra.mxu0 0.0
          %1099 = vmatprep.subr.mxu0 0.0
          %1100 = vmatpush1.msra.mxu0 0.0
          %1101 = vmatprep.subr.mxu0 0.0
          %1102 = vmatpush1.msra.mxu0 0.0
          %1103 = vmatprep.subr.mxu0 0.0
          %1104 = vmatpush1.msra.mxu0 0.0
          %1105 = vmatprep.subr.mxu0 %v1025
          %1106 = vmatpush1.msra.mxu0 %v1015
          %1107 = vmatprep.subr.mxu0 %v1020
          %1108 = vmatpush1.msra.mxu0 %v1010
          %1109 = vmatprep.subr.mxu0 0.0
          %1110 = vmatpush2.msra.mxu0 0.0
          %1111 = vmatprep.subr.mxu0 0.0
          %1112 = vmatpush2.msra.mxu0 0.0
          %1113 = vmatprep.subr.mxu0 0.0
          %1114 = vmatpush2.msra.mxu0 0.0
          %1115 = vmatprep.subr.mxu0 0.0
          %1116 = vmatpush2.msra.mxu0 0.0
          %1117 = vmatprep.subr.mxu0 0.0
          %1118 = vmatpush2.msra.mxu0 0.0
          %1119 = vmatprep.subr.mxu0 0.0
          %1120 = vmatpush2.msra.mxu0 0.0
          %1121 = vmatprep.subr.mxu0 0.0
          %1122 = vmatpush2.msra.mxu0 0.0
          %1123 = vmatprep.subr.mxu0 0.0
          %1124 = vmatpush2.msra.mxu0 0.0
          %1125 = vmatprep.subr.mxu0 0.0
          %1126 = vmatpush2.msra.mxu0 0.0
          %1127 = vmatprep.subr.mxu0 0.0
          %1128 = vmatpush2.msra.mxu0 0.0
          %1129 = vmatprep.subr.mxu0 0.0
          %1130 = vmatpush2.msra.mxu0 0.0
          %1131 = vmatprep.subr.mxu0 0.0
          %1132 = vmatpush2.msra.mxu0 0.0
          %1133 = vmatprep.subr.mxu0 0.0
          %1134 = vmatpush2.msra.mxu0 0.0
          %1135 = vmatprep.subr.mxu0 0.0
          %1136 = vmatpush2.msra.mxu0 0.0
          %1137 = vmatprep.subr.mxu0 0.0
          %1138 = vmatpush2.msra.mxu0 0.0
          %1139 = vmatprep.subr.mxu0 0.0
          %1140 = vmatpush2.msra.mxu0 0.0
          %1141 = vmatprep.mubr.f32.mxu0 0.0
          %1142 = vmatmul.mubr.f32.gmra.mxu0 %v1030
          %v1143 = vpop.f32.mrf.mxu0
          %v1144 = vadd.f32 0.0, %v1143
          %v1145 = vpop.f32.mrf.mxu0
          %v1146 = vadd.f32 0.0, %v1145
          %1147 = vmatprep.mubr.f32.mxu0 0.0
          %1148 = vmatmul.mubr.f32.gmra.mxu0 %v1033
          %v1149 = vpop.f32.mrf.mxu0
          %v1150 = vadd.f32 0.0, %v1149
          %v1151 = vpop.f32.mrf.mxu0
          %v1152 = vadd.f32 0.0, %v1151
          %1153 = vmatprep.mubr.f32.mxu0 0.0
          %1154 = vmatmul.mubr.f32.gmra.mxu0 %v1036
          %v1155 = vpop.f32.mrf.mxu0
          %v1156 = vadd.f32 0.0, %v1155
          %v1157 = vpop.f32.mrf.mxu0
          %v1158 = vadd.f32 0.0, %v1157
          %1159 = vmatprep.mubr.f32.mxu0 0.0
          %1160 = vmatmul.mubr.f32.gmra.mxu0 %v1039
          %v1161 = vpop.f32.mrf.mxu0
          %v1162 = vadd.f32 0.0, %v1161
          %v1163 = vpop.f32.mrf.mxu0
          %v1164 = vadd.f32 0.0, %v1163
          %1165 = vmatprep.mubr.f32.mxu0 0.0
          %1166 = vmatmul.mubr.f32.gmra.mxu0 %v1042
          %v1167 = vpop.f32.mrf.mxu0
          %v1168 = vadd.f32 0.0, %v1167
          %v1169 = vpop.f32.mrf.mxu0
          %v1170 = vadd.f32 0.0, %v1169
          %1171 = vmatprep.mubr.f32.mxu0 0.0
          %1172 = vmatmul.mubr.f32.gmra.mxu0 %v1045
          %v1173 = vpop.f32.mrf.mxu0
          %v1174 = vadd.f32 0.0, %v1173
          %v1175 = vpop.f32.mrf.mxu0
          %v1176 = vadd.f32 0.0, %v1175
          %1177 = vmatprep.mubr.f32.mxu0 0.0
          %1178 = vmatmul.mubr.f32.gmra.mxu0 %v1048
          %v1179 = vpop.f32.mrf.mxu0
          %v1180 = vadd.f32 0.0, %v1179
          %v1181 = vpop.f32.mrf.mxu0
          %v1182 = vadd.f32 0.0, %v1181
          %1183 = vmatprep.mubr.f32.mxu0 0.0
          %1184 = vmatmul.mubr.f32.gmra.mxu0 %v1051
          %v1185 = vpop.f32.mrf.mxu0
          %v1186 = vadd.f32 0.0, %v1185
          %v1187 = vpop.f32.mrf.mxu0
          %v1188 = vadd.f32 0.0, %v1187
          %1189 = vmatprep.mubr.f32.mxu0 0.0
          %1190 = vmatmul.mubr.f32.gmra.mxu0 %v1054
          %v1191 = vpop.f32.mrf.mxu0
          %v1192 = vadd.f32 0.0, %v1191
          %v1193 = vpop.f32.mrf.mxu0
          %v1194 = vadd.f32 0.0, %v1193
          %1195 = vmatprep.mubr.f32.mxu0 0.0
          %1196 = vmatmul.mubr.f32.gmra.mxu0 %v1057
          %v1197 = vpop.f32.mrf.mxu0
          %v1198 = vadd.f32 0.0, %v1197
          %v1199 = vpop.f32.mrf.mxu0
          %v1200 = vadd.f32 0.0, %v1199
          %1201 = vmatprep.mubr.f32.mxu0 0.0
          %1202 = vmatmul.mubr.f32.gmra.mxu0 %v1060
          %v1203 = vpop.f32.mrf.mxu0
          %v1204 = vadd.f32 0.0, %v1203
          %v1205 = vpop.f32.mrf.mxu0
          %v1206 = vadd.f32 0.0, %v1205
          %1207 = vmatprep.mubr.f32.mxu0 0.0
          %1208 = vmatmul.mubr.f32.gmra.mxu0 %v1063
          %v1209 = vpop.f32.mrf.mxu0
          %v1210 = vadd.f32 0.0, %v1209
          %v1211 = vpop.f32.mrf.mxu0
          %v1212 = vadd.f32 0.0, %v1211
          %1213 = vmatprep.mubr.f32.mxu0 0.0
          %1214 = vmatmul.mubr.f32.gmra.mxu0 %v1066
          %v1215 = vpop.f32.mrf.mxu0
          %v1216 = vadd.f32 0.0, %v1215
          %v1217 = vpop.f32.mrf.mxu0
          %v1218 = vadd.f32 0.0, %v1217
          %1219 = vmatprep.mubr.f32.mxu0 0.0
          %1220 = vmatmul.mubr.f32.gmra.mxu0 %v1069
          %v1221 = vpop.f32.mrf.mxu0
          %v1222 = vadd.f32 0.0, %v1221
          %v1223 = vpop.f32.mrf.mxu0
          %v1224 = vadd.f32 0.0, %v1223
          %1225 = vmatprep.mubr.f32.mxu0 0.0
          %1226 = vmatmul.mubr.f32.gmra.mxu0 %v1072
          %v1227 = vpop.f32.mrf.mxu0
          %v1228 = vadd.f32 0.0, %v1227
          %v1229 = vpop.f32.mrf.mxu0
          %v1230 = vadd.f32 0.0, %v1229
          %1231 = vmatprep.mubr.f32.mxu0 0.0
          %1232 = vmatmul.mubr.f32.gmra.mxu0 %v1075
          %v1233 = vpop.f32.mrf.mxu0
          %v1234 = vadd.f32 0.0, %v1233
          %v1235 = vpop.f32.mrf.mxu0
          %v1236 = vadd.f32 0.0, %v1235
          %1237 = vdwg.mxu0
          %1238 = vmatprep.subr.mxu0 %v1005
          %1239 = vmatpush1.msra.mxu0 %v925
          %1240 = vmatprep.subr.mxu0 %v1000
          %1241 = vmatpush1.msra.mxu0 %v920
          %1242 = vmatprep.subr.mxu0 %v995
          %1243 = vmatpush1.msra.mxu0 %v915
          %1244 = vmatprep.subr.mxu0 %v990
          %1245 = vmatpush1.msra.mxu0 %v910
          %1246 = vmatprep.subr.mxu0 %v985
          %1247 = vmatpush1.msra.mxu0 %v905
          %1248 = vmatprep.subr.mxu0 %v980
          %1249 = vmatpush1.msra.mxu0 %v900
          %1250 = vmatprep.subr.mxu0 %v975
          %1251 = vmatpush1.msra.mxu0 %v895
          %1252 = vmatprep.subr.mxu0 %v970
          %1253 = vmatpush1.msra.mxu0 %v890
          %1254 = vmatprep.subr.mxu0 %v965
          %1255 = vmatpush1.msra.mxu0 %v885
          %1256 = vmatprep.subr.mxu0 %v960
          %1257 = vmatpush1.msra.mxu0 %v880
          %1258 = vmatprep.subr.mxu0 %v955
          %1259 = vmatpush1.msra.mxu0 %v875
          %1260 = vmatprep.subr.mxu0 %v950
          %1261 = vmatpush1.msra.mxu0 %v870
          %1262 = vmatprep.subr.mxu0 %v945
          %1263 = vmatpush1.msra.mxu0 %v865
          %1264 = vmatprep.subr.mxu0 %v940
          %1265 = vmatpush1.msra.mxu0 %v860
          %1266 = vmatprep.subr.mxu0 %v935
          %1267 = vmatpush1.msra.mxu0 %v855
          %1268 = vmatprep.subr.mxu0 %v930
          %1269 = vmatpush1.msra.mxu0 %v850
          %1270 = vmatprep.subr.mxu0 0.0
          %1271 = vmatpush2.msra.mxu0 0.0
          %1272 = vmatprep.subr.mxu0 0.0
          %1273 = vmatpush2.msra.mxu0 0.0
          %1274 = vmatprep.subr.mxu0 0.0
          %1275 = vmatpush2.msra.mxu0 0.0
          %1276 = vmatprep.subr.mxu0 0.0
          %1277 = vmatpush2.msra.mxu0 0.0
          %1278 = vmatprep.subr.mxu0 0.0
          %1279 = vmatpush2.msra.mxu0 0.0
          %1280 = vmatprep.subr.mxu0 0.0
          %1281 = vmatpush2.msra.mxu0 0.0
          %1282 = vmatprep.subr.mxu0 0.0
          %1283 = vmatpush2.msra.mxu0 0.0
          %1284 = vmatprep.subr.mxu0 0.0
          %1285 = vmatpush2.msra.mxu0 0.0
          %1286 = vmatprep.subr.mxu0 0.0
          %1287 = vmatpush2.msra.mxu0 0.0
          %1288 = vmatprep.subr.mxu0 0.0
          %1289 = vmatpush2.msra.mxu0 0.0
          %1290 = vmatprep.subr.mxu0 0.0
          %1291 = vmatpush2.msra.mxu0 0.0
          %1292 = vmatprep.subr.mxu0 0.0
          %1293 = vmatpush2.msra.mxu0 0.0
          %1294 = vmatprep.subr.mxu0 0.0
          %1295 = vmatpush2.msra.mxu0 0.0
          %1296 = vmatprep.subr.mxu0 0.0
          %1297 = vmatpush2.msra.mxu0 0.0
          %1298 = vmatprep.subr.mxu0 0.0
          %1299 = vmatpush2.msra.mxu0 0.0
          %1300 = vmatprep.subr.mxu0 0.0
          %1301 = vmatpush2.msra.mxu0 0.0
          %1302 = vmatprep.mubr.f32.mxu0 0.0
          %1303 = vmatmul.mubr.f32.gmra.mxu0 %v515
          %v1304 = vpop.f32.mrf.mxu0
          %v1305 = vadd.f32 %v1144, %v1304
          %v1306 = vpop.f32.mrf.mxu0
          %v1307 = vadd.f32 %v1146, %v1306
          %1308 = vmatprep.mubr.f32.mxu0 0.0
          %1309 = vmatmul.mubr.f32.gmra.mxu0 %v516
          %v1310 = vpop.f32.mrf.mxu0
          %v1311 = vadd.f32 %v1150, %v1310
          %v1312 = vpop.f32.mrf.mxu0
          %v1313 = vadd.f32 %v1152, %v1312
          %1314 = vmatprep.mubr.f32.mxu0 0.0
          %1315 = vmatmul.mubr.f32.gmra.mxu0 %v517
          %v1316 = vpop.f32.mrf.mxu0
          %v1317 = vadd.f32 %v1156, %v1316
          %v1318 = vpop.f32.mrf.mxu0
          %v1319 = vadd.f32 %v1158, %v1318
          %1320 = vmatprep.mubr.f32.mxu0 0.0
          %1321 = vmatmul.mubr.f32.gmra.mxu0 %v518
          %v1322 = vpop.f32.mrf.mxu0
          %v1323 = vadd.f32 %v1162, %v1322
          %v1324 = vpop.f32.mrf.mxu0
          %v1325 = vadd.f32 %v1164, %v1324
          %1326 = vmatprep.mubr.f32.mxu0 0.0
          %1327 = vmatmul.mubr.f32.gmra.mxu0 %v519
          %v1328 = vpop.f32.mrf.mxu0
          %v1329 = vadd.f32 %v1168, %v1328
          %v1330 = vpop.f32.mrf.mxu0
          %v1331 = vadd.f32 %v1170, %v1330
          %1332 = vmatprep.mubr.f32.mxu0 0.0
          %1333 = vmatmul.mubr.f32.gmra.mxu0 %v520
          %v1334 = vpop.f32.mrf.mxu0
          %v1335 = vadd.f32 %v1174, %v1334
          %v1336 = vpop.f32.mrf.mxu0
          %v1337 = vadd.f32 %v1176, %v1336
          %1338 = vmatprep.mubr.f32.mxu0 0.0
          %1339 = vmatmul.mubr.f32.gmra.mxu0 %v521
          %v1340 = vpop.f32.mrf.mxu0
          %v1341 = vadd.f32 %v1180, %v1340
          %v1342 = vpop.f32.mrf.mxu0
          %v1343 = vadd.f32 %v1182, %v1342
          %1344 = vmatprep.mubr.f32.mxu0 0.0
          %1345 = vmatmul.mubr.f32.gmra.mxu0 %v522
          %v1346 = vpop.f32.mrf.mxu0
          %v1347 = vadd.f32 %v1186, %v1346
          %v1348 = vpop.f32.mrf.mxu0
          %v1349 = vadd.f32 %v1188, %v1348
          %1350 = vmatprep.mubr.f32.mxu0 0.0
          %1351 = vmatmul.mubr.f32.gmra.mxu0 %v523
          %v1352 = vpop.f32.mrf.mxu0
          %v1353 = vadd.f32 %v1192, %v1352
          %v1354 = vpop.f32.mrf.mxu0
          %v1355 = vadd.f32 %v1194, %v1354
          %1356 = vmatprep.mubr.f32.mxu0 0.0
          %1357 = vmatmul.mubr.f32.gmra.mxu0 %v524
          %v1358 = vpop.f32.mrf.mxu0
          %v1359 = vadd.f32 %v1198, %v1358
          %v1360 = vpop.f32.mrf.mxu0
          %v1361 = vadd.f32 %v1200, %v1360
          %1362 = vmatprep.mubr.f32.mxu0 0.0
          %1363 = vmatmul.mubr.f32.gmra.mxu0 %v525
          %v1364 = vpop.f32.mrf.mxu0
          %v1365 = vadd.f32 %v1204, %v1364
          %v1366 = vpop.f32.mrf.mxu0
          %v1367 = vadd.f32 %v1206, %v1366
          %1368 = vmatprep.mubr.f32.mxu0 0.0
          %1369 = vmatmul.mubr.f32.gmra.mxu0 %v526
          %v1370 = vpop.f32.mrf.mxu0
          %v1371 = vadd.f32 %v1210, %v1370
          %v1372 = vpop.f32.mrf.mxu0
          %v1373 = vadd.f32 %v1212, %v1372
          %1374 = vmatprep.mubr.f32.mxu0 0.0
          %1375 = vmatmul.mubr.f32.gmra.mxu0 %v527
          %v1376 = vpop.f32.mrf.mxu0
          %v1377 = vadd.f32 %v1216, %v1376
          %v1378 = vpop.f32.mrf.mxu0
          %v1379 = vadd.f32 %v1218, %v1378
          %1380 = vmatprep.mubr.f32.mxu0 0.0
          %1381 = vmatmul.mubr.f32.gmra.mxu0 %v528
          %v1382 = vpop.f32.mrf.mxu0
          %v1383 = vadd.f32 %v1222, %v1382
          %v1384 = vpop.f32.mrf.mxu0
          %v1385 = vadd.f32 %v1224, %v1384
          %1386 = vmatprep.mubr.f32.mxu0 0.0
          %1387 = vmatmul.mubr.f32.gmra.mxu0 %v529
          %v1388 = vpop.f32.mrf.mxu0
          %v1389 = vadd.f32 %v1228, %v1388
          %v1390 = vpop.f32.mrf.mxu0
          %v1391 = vadd.f32 %v1230, %v1390
          %1392 = vmatprep.mubr.f32.mxu0 0.0
          %1393 = vmatmul.mubr.f32.gmra.mxu0 %v530
          %v1394 = vpop.f32.mrf.mxu0
          %v1395 = vadd.f32 %v1234, %v1394
          %v1396 = vpop.f32.mrf.mxu0
          %v1397 = vadd.f32 %v1236, %v1396
          %1398 = vdwg.mxu0
          %1399 = vst [vmem:[#allocation2] sm:$0xff] %v1305
          %1400 = vst [vmem:[#allocation2 + $0x8] sm:$0xff] %v1311
          %1401 = vst [vmem:[#allocation2 + $0x10] sm:$0xff] %v1317
          %1402 = vst [vmem:[#allocation2 + $0x18] sm:$0xff] %v1323
          %1403 = vst [vmem:[#allocation2 + $0x20] sm:$0xff] %v1329
          %1404 = vst [vmem:[#allocation2 + $0x28] sm:$0xff] %v1335
          %1405 = vst [vmem:[#allocation2 + $0x30] sm:$0xff] %v1341
          %1406 = vst [vmem:[#allocation2 + $0x38] sm:$0xff] %v1347
          %1407 = vst [vmem:[#allocation2 + $0x40] sm:$0xff] %v1353
          %1408 = vst [vmem:[#allocation2 + $0x48] sm:$0xff] %v1359
          %1409 = vst [vmem:[#allocation2 + $0x50] sm:$0xff] %v1365
          %1410 = vst [vmem:[#allocation2 + $0x58] sm:$0xff] %v1371
          %1411 = vst [vmem:[#allocation2 + $0x60] sm:$0xff] %v1377
          %1412 = vst [vmem:[#allocation2 + $0x68] sm:$0xff] %v1383
          %1413 = vst [vmem:[#allocation2 + $0x70] sm:$0xff] %v1389
          %1414 = vst [vmem:[#allocation2 + $0x78] sm:$0xff] %v1395
          %v1415 = vmul.f32 %v1305, %v1305
          %v1416 = vmul.f32 %v1311, %v1311
          %v1417 = vmul.f32 %v1317, %v1317
          %v1418 = vmul.f32 %v1323, %v1323
          %v1419 = vmul.f32 %v1329, %v1329
          %v1420 = vmul.f32 %v1335, %v1335
          %v1421 = vmul.f32 %v1341, %v1341
          %v1422 = vmul.f32 %v1347, %v1347
          %v1423 = vmul.f32 %v1353, %v1353
          %v1424 = vmul.f32 %v1359, %v1359
          %v1425 = vmul.f32 %v1365, %v1365
          %v1426 = vmul.f32 %v1371, %v1371
          %v1427 = vmul.f32 %v1377, %v1377
          %v1428 = vmul.f32 %v1383, %v1383
          %v1429 = vmul.f32 %v1389, %v1389
          %v1430 = vmul.f32 %v1395, %v1395
          %v1431 = vsub.f32 %v1307, %v1415
          %v1432 = vsub.f32 %v1313, %v1416
          %v1433 = vsub.f32 %v1319, %v1417
          %v1434 = vsub.f32 %v1325, %v1418
          %v1435 = vsub.f32 %v1331, %v1419
          %v1436 = vsub.f32 %v1337, %v1420
          %v1437 = vsub.f32 %v1343, %v1421
          %v1438 = vsub.f32 %v1349, %v1422
          %v1439 = vsub.f32 %v1355, %v1423
          %v1440 = vsub.f32 %v1361, %v1424
          %v1441 = vsub.f32 %v1367, %v1425
          %v1442 = vsub.f32 %v1373, %v1426
          %v1443 = vsub.f32 %v1379, %v1427
          %v1444 = vsub.f32 %v1385, %v1428
          %v1445 = vsub.f32 %v1391, %v1429
          %v1446 = vsub.f32 %v1397, %v1430
          %1447 = vst [vmem:[#allocation3] sm:$0xff] %v1431
          %1448 = vst [vmem:[#allocation3 + $0x8] sm:$0xff] %v1432
          %1449 = vst [vmem:[#allocation3 + $0x10] sm:$0xff] %v1433
          %1450 = vst [vmem:[#allocation3 + $0x18] sm:$0xff] %v1434
          %1451 = vst [vmem:[#allocation3 + $0x20] sm:$0xff] %v1435
          %1452 = vst [vmem:[#allocation3 + $0x28] sm:$0xff] %v1436
          %1453 = vst [vmem:[#allocation3 + $0x30] sm:$0xff] %v1437
          %1454 = vst [vmem:[#allocation3 + $0x38] sm:$0xff] %v1438
          %1455 = vst [vmem:[#allocation3 + $0x40] sm:$0xff] %v1439
          %1456 = vst [vmem:[#allocation3 + $0x48] sm:$0xff] %v1440
          %1457 = vst [vmem:[#allocation3 + $0x50] sm:$0xff] %v1441
          %1458 = vst [vmem:[#allocation3 + $0x58] sm:$0xff] %v1442
          %1459 = vst [vmem:[#allocation3 + $0x60] sm:$0xff] %v1443
          %1460 = vst [vmem:[#allocation3 + $0x68] sm:$0xff] %v1444
          %1461 = vst [vmem:[#allocation3 + $0x70] sm:$0xff] %v1445
          %1462 = vst [vmem:[#allocation3 + $0x78] sm:$0xff] %v1446
          %1463 = vst [vmem:[#allocation4] sm:$0xff] -inf
          %1464 = vst [vmem:[#allocation4 + $0x8] sm:$0xff] -inf
          %1465 = vst [vmem:[#allocation4 + $0x10] sm:$0xff] -inf
          %1466 = vst [vmem:[#allocation4 + $0x18] sm:$0xff] -inf
          %1467 = vst [vmem:[#allocation4 + $0x20] sm:$0xff] -inf
          %1468 = vst [vmem:[#allocation4 + $0x28] sm:$0xff] -inf
          %1469 = vst [vmem:[#allocation4 + $0x30] sm:$0xff] -inf
          %1470 = vst [vmem:[#allocation4 + $0x38] sm:$0xff] -inf
          %1471 = vst [vmem:[#allocation4 + $0x40] sm:$0xff] -inf
          %1472 = vst [vmem:[#allocation4 + $0x48] sm:$0xff] -inf
          %1473 = vst [vmem:[#allocation4 + $0x50] sm:$0xff] -inf
          %1474 = vst [vmem:[#allocation4 + $0x58] sm:$0xff] -inf
          %1475 = vst [vmem:[#allocation4 + $0x60] sm:$0xff] -inf
          %1476 = vst [vmem:[#allocation4 + $0x68] sm:$0xff] -inf
          %1477 = vst [vmem:[#allocation4 + $0x70] sm:$0xff] -inf
          %1478 = vst [vmem:[#allocation4 + $0x78] sm:$0xff] -inf
          %1479 = vst [vmem:[#allocation5] sm:$0xff] 0.0
          %1480 = vst [vmem:[#allocation5 + $0x8] sm:$0xff] 0.0
          %1481 = vst [vmem:[#allocation5 + $0x10] sm:$0xff] 0.0
          %1482 = vst [vmem:[#allocation5 + $0x18] sm:$0xff] 0.0
          %1483 = vst [vmem:[#allocation5 + $0x20] sm:$0xff] 0.0
          %1484 = vst [vmem:[#allocation5 + $0x28] sm:$0xff] 0.0
          %1485 = vst [vmem:[#allocation5 + $0x30] sm:$0xff] 0.0
          %1486 = vst [vmem:[#allocation5 + $0x38] sm:$0xff] 0.0
          %1487 = vst [vmem:[#allocation5 + $0x40] sm:$0xff] 0.0
          %1488 = vst [vmem:[#allocation5 + $0x48] sm:$0xff] 0.0
          %1489 = vst [vmem:[#allocation5 + $0x50] sm:$0xff] 0.0
          %1490 = vst [vmem:[#allocation5 + $0x58] sm:$0xff] 0.0
          %1491 = vst [vmem:[#allocation5 + $0x60] sm:$0xff] 0.0
          %1492 = vst [vmem:[#allocation5 + $0x68] sm:$0xff] 0.0
          %1493 = vst [vmem:[#allocation5 + $0x70] sm:$0xff] 0.0
          %1494 = vst [vmem:[#allocation5 + $0x78] sm:$0xff] 0.0
        $region76: #{tpu_custom_call.1} parent=47 // pred_fallthru
          _
        %v1495 = vld [vmem:[%s450] sm:$0xff]
        %v1496 = vld [vmem:[%s450 + $0x8] sm:$0xff]
        %v1497 = vld [vmem:[%s450 + $0x10] sm:$0xff]
        %v1498 = vld [vmem:[%s450 + $0x18] sm:$0xff]
        %v1499 = vld [vmem:[%s450 + $0x20] sm:$0xff]
        %v1500 = vld [vmem:[%s450 + $0x28] sm:$0xff]
        %v1501 = vld [vmem:[%s450 + $0x30] sm:$0xff]
        %v1502 = vld [vmem:[%s450 + $0x38] sm:$0xff]
        %v1503 = vld [vmem:[%s450 + $0x40] sm:$0xff]
        %v1504 = vld [vmem:[%s450 + $0x48] sm:$0xff]
        %v1505 = vld [vmem:[%s450 + $0x50] sm:$0xff]
        %v1506 = vld [vmem:[%s450 + $0x58] sm:$0xff]
        %v1507 = vld [vmem:[%s450 + $0x60] sm:$0xff]
        %v1508 = vld [vmem:[%s450 + $0x68] sm:$0xff]
        %v1509 = vld [vmem:[%s450 + $0x70] sm:$0xff]
        %v1510 = vld [vmem:[%s450 + $0x78] sm:$0xff]
        %v1511 = vld [vmem:[%s450 + $0x80] sm:$0xff]
        %v1512 = vld [vmem:[%s450 + $0x88] sm:$0xff]
        %v1513 = vld [vmem:[%s450 + $0x90] sm:$0xff]
        %v1514 = vld [vmem:[%s450 + $0x98] sm:$0xff]
        %v1515 = vld [vmem:[%s450 + $0xa0] sm:$0xff]
        %v1516 = vld [vmem:[%s450 + $0xa8] sm:$0xff]
        %v1517 = vld [vmem:[%s450 + $0xb0] sm:$0xff]
        %v1518 = vld [vmem:[%s450 + $0xb8] sm:$0xff]
        %v1519 = vld [vmem:[%s450 + $0xc0] sm:$0xff]
        %v1520 = vld [vmem:[%s450 + $0xc8] sm:$0xff]
        %v1521 = vld [vmem:[%s450 + $0xd0] sm:$0xff]
        %v1522 = vld [vmem:[%s450 + $0xd8] sm:$0xff]
        %v1523 = vld [vmem:[%s450 + $0xe0] sm:$0xff]
        %v1524 = vld [vmem:[%s450 + $0xe8] sm:$0xff]
        %v1525 = vld [vmem:[%s450 + $0xf0] sm:$0xff]
        %v1526 = vld [vmem:[%s450 + $0xf8] sm:$0xff]
        %v1527 = vld [vmem:[%s450 + $0x100] sm:$0xff]
        %v1528 = vld [vmem:[%s450 + $0x108] sm:$0xff]
        %v1529 = vld [vmem:[%s450 + $0x110] sm:$0xff]
        %v1530 = vld [vmem:[%s450 + $0x118] sm:$0xff]
        %v1531 = vld [vmem:[%s450 + $0x120] sm:$0xff]
        %v1532 = vld [vmem:[%s450 + $0x128] sm:$0xff]
        %v1533 = vld [vmem:[%s450 + $0x130] sm:$0xff]
        %v1534 = vld [vmem:[%s450 + $0x138] sm:$0xff]
        %v1535 = vld [vmem:[%s450 + $0x140] sm:$0xff]
        %v1536 = vld [vmem:[%s450 + $0x148] sm:$0xff]
        %v1537 = vld [vmem:[%s450 + $0x150] sm:$0xff]
        %v1538 = vld [vmem:[%s450 + $0x158] sm:$0xff]
        %v1539 = vld [vmem:[%s450 + $0x160] sm:$0xff]
        %v1540 = vld [vmem:[%s450 + $0x168] sm:$0xff]
        %v1541 = vld [vmem:[%s450 + $0x170] sm:$0xff]
        %v1542 = vld [vmem:[%s450 + $0x178] sm:$0xff]
        %v1543 = vld [vmem:[%s459] sm:$0xff]
        %v1544 = vld [vmem:[%s459 + $0x8] sm:$0xff]
        %v1545 = vld [vmem:[%s459 + $0x10] sm:$0xff]
        %v1546 = vld [vmem:[%s459 + $0x18] sm:$0xff]
        %v1547 = vld [vmem:[%s459 + $0x20] sm:$0xff]
        %v1548 = vld [vmem:[%s459 + $0x28] sm:$0xff]
        %v1549 = vadd.f32 %v1495, %v1511
        %v1550 = vadd.f32 %v1549, %v1527
        %v1551 = vadd.f32 %v1496, %v1512
        %v1552 = vadd.f32 %v1551, %v1528
        %v1553 = vadd.f32 %v1497, %v1513
        %v1554 = vadd.f32 %v1553, %v1529
        %v1555 = vadd.f32 %v1498, %v1514
        %v1556 = vadd.f32 %v1555, %v1530
        %v1557 = vadd.f32 %v1499, %v1515
        %v1558 = vadd.f32 %v1557, %v1531
        %v1559 = vadd.f32 %v1500, %v1516
        %v1560 = vadd.f32 %v1559, %v1532
        %v1561 = vadd.f32 %v1501, %v1517
        %v1562 = vadd.f32 %v1561, %v1533
        %v1563 = vadd.f32 %v1502, %v1518
        %v1564 = vadd.f32 %v1563, %v1534
        %v1565 = vadd.f32 %v1503, %v1519
        %v1566 = vadd.f32 %v1565, %v1535
        %v1567 = vadd.f32 %v1504, %v1520
        %v1568 = vadd.f32 %v1567, %v1536
        %v1569 = vadd.f32 %v1505, %v1521
        %v1570 = vadd.f32 %v1569, %v1537
        %v1571 = vadd.f32 %v1506, %v1522
        %v1572 = vadd.f32 %v1571, %v1538
        %v1573 = vadd.f32 %v1507, %v1523
        %v1574 = vadd.f32 %v1573, %v1539
        %v1575 = vadd.f32 %v1508, %v1524
        %v1576 = vadd.f32 %v1575, %v1540
        %v1577 = vadd.f32 %v1509, %v1525
        %v1578 = vadd.f32 %v1577, %v1541
        %v1579 = vadd.f32 %v1510, %v1526
        %v1580 = vadd.f32 %v1579, %v1542
        %v1581 = vmul.f32 %v1550, 0.33333334
        %v1582 = vmul.f32 %v1552, 0.33333334
        %v1583 = vmul.f32 %v1554, 0.33333334
        %v1584 = vmul.f32 %v1556, 0.33333334
        %v1585 = vmul.f32 %v1558, 0.33333334
        %v1586 = vmul.f32 %v1560, 0.33333334
        %v1587 = vmul.f32 %v1562, 0.33333334
        %v1588 = vmul.f32 %v1564, 0.33333334
        %v1589 = vmul.f32 %v1566, 0.33333334
        %v1590 = vmul.f32 %v1568, 0.33333334
        %v1591 = vmul.f32 %v1570, 0.33333334
        %v1592 = vmul.f32 %v1572, 0.33333334
        %v1593 = vmul.f32 %v1574, 0.33333334
        %v1594 = vmul.f32 %v1576, 0.33333334
        %v1595 = vmul.f32 %v1578, 0.33333334
        %v1596 = vmul.f32 %v1580, 0.33333334
        %v1597 = vmul.f32 %v1495, %v1495
        %v1598 = vmul.f32 %v1496, %v1496
        %v1599 = vmul.f32 %v1497, %v1497
        %v1600 = vmul.f32 %v1498, %v1498
        %v1601 = vmul.f32 %v1499, %v1499
        %v1602 = vmul.f32 %v1500, %v1500
        %v1603 = vmul.f32 %v1501, %v1501
        %v1604 = vmul.f32 %v1502, %v1502
        %v1605 = vmul.f32 %v1503, %v1503
        %v1606 = vmul.f32 %v1504, %v1504
        %v1607 = vmul.f32 %v1505, %v1505
        %v1608 = vmul.f32 %v1506, %v1506
        %v1609 = vmul.f32 %v1507, %v1507
        %v1610 = vmul.f32 %v1508, %v1508
        %v1611 = vmul.f32 %v1509, %v1509
        %v1612 = vmul.f32 %v1510, %v1510
        %v1613 = vmul.f32 %v1511, %v1511
        %v1614 = vmul.f32 %v1512, %v1512
        %v1615 = vmul.f32 %v1513, %v1513
        %v1616 = vmul.f32 %v1514, %v1514
        %v1617 = vmul.f32 %v1515, %v1515
        %v1618 = vmul.f32 %v1516, %v1516
        %v1619 = vmul.f32 %v1517, %v1517
        %v1620 = vmul.f32 %v1518, %v1518
        %v1621 = vmul.f32 %v1519, %v1519
        %v1622 = vmul.f32 %v1520, %v1520
        %v1623 = vmul.f32 %v1521, %v1521
        %v1624 = vmul.f32 %v1522, %v1522
        %v1625 = vmul.f32 %v1523, %v1523
        %v1626 = vmul.f32 %v1524, %v1524
        %v1627 = vmul.f32 %v1525, %v1525
        %v1628 = vmul.f32 %v1526, %v1526
        %v1629 = vmul.f32 %v1527, %v1527
        %v1630 = vmul.f32 %v1528, %v1528
        %v1631 = vmul.f32 %v1529, %v1529
        %v1632 = vmul.f32 %v1530, %v1530
        %v1633 = vmul.f32 %v1531, %v1531
        %v1634 = vmul.f32 %v1532, %v1532
        %v1635 = vmul.f32 %v1533, %v1533
        %v1636 = vmul.f32 %v1534, %v1534
        %v1637 = vmul.f32 %v1535, %v1535
        %v1638 = vmul.f32 %v1536, %v1536
        %v1639 = vmul.f32 %v1537, %v1537
        %v1640 = vmul.f32 %v1538, %v1538
        %v1641 = vmul.f32 %v1539, %v1539
        %v1642 = vmul.f32 %v1540, %v1540
        %v1643 = vmul.f32 %v1541, %v1541
        %v1644 = vmul.f32 %v1542, %v1542
        %v1645 = vadd.f32 %v1597, %v1613
        %v1646 = vadd.f32 %v1645, %v1629
        %v1647 = vadd.f32 %v1598, %v1614
        %v1648 = vadd.f32 %v1647, %v1630
        %v1649 = vadd.f32 %v1599, %v1615
        %v1650 = vadd.f32 %v1649, %v1631
        %v1651 = vadd.f32 %v1600, %v1616
        %v1652 = vadd.f32 %v1651, %v1632
        %v1653 = vadd.f32 %v1601, %v1617
        %v1654 = vadd.f32 %v1653, %v1633
        %v1655 = vadd.f32 %v1602, %v1618
        %v1656 = vadd.f32 %v1655, %v1634
        %v1657 = vadd.f32 %v1603, %v1619
        %v1658 = vadd.f32 %v1657, %v1635
        %v1659 = vadd.f32 %v1604, %v1620
        %v1660 = vadd.f32 %v1659, %v1636
        %v1661 = vadd.f32 %v1605, %v1621
        %v1662 = vadd.f32 %v1661, %v1637
        %v1663 = vadd.f32 %v1606, %v1622
        %v1664 = vadd.f32 %v1663, %v1638
        %v1665 = vadd.f32 %v1607, %v1623
        %v1666 = vadd.f32 %v1665, %v1639
        %v1667 = vadd.f32 %v1608, %v1624
        %v1668 = vadd.f32 %v1667, %v1640
        %v1669 = vadd.f32 %v1609, %v1625
        %v1670 = vadd.f32 %v1669, %v1641
        %v1671 = vadd.f32 %v1610, %v1626
        %v1672 = vadd.f32 %v1671, %v1642
        %v1673 = vadd.f32 %v1611, %v1627
        %v1674 = vadd.f32 %v1673, %v1643
        %v1675 = vadd.f32 %v1612, %v1628
        %v1676 = vadd.f32 %v1675, %v1644
        %v1677 = vmul.f32 %v1646, 0.33333334
        %v1678 = vmul.f32 %v1648, 0.33333334
        %v1679 = vmul.f32 %v1650, 0.33333334
        %v1680 = vmul.f32 %v1652, 0.33333334
        %v1681 = vmul.f32 %v1654, 0.33333334
        %v1682 = vmul.f32 %v1656, 0.33333334
        %v1683 = vmul.f32 %v1658, 0.33333334
        %v1684 = vmul.f32 %v1660, 0.33333334
        %v1685 = vmul.f32 %v1662, 0.33333334
        %v1686 = vmul.f32 %v1664, 0.33333334
        %v1687 = vmul.f32 %v1666, 0.33333334
        %v1688 = vmul.f32 %v1668, 0.33333334
        %v1689 = vmul.f32 %v1670, 0.33333334
        %v1690 = vmul.f32 %v1672, 0.33333334
        %v1691 = vmul.f32 %v1674, 0.33333334
        %v1692 = vmul.f32 %v1676, 0.33333334
        %v1693 = vmul.f32 %v563, %v1495
        %v1694 = vmul.f32 %v564, %v1496
        %v1695 = vmul.f32 %v565, %v1497
        %v1696 = vmul.f32 %v566, %v1498
        %v1697 = vmul.f32 %v567, %v1499
        %v1698 = vmul.f32 %v568, %v1500
        %v1699 = vmul.f32 %v569, %v1501
        %v1700 = vmul.f32 %v570, %v1502
        %v1701 = vmul.f32 %v571, %v1503
        %v1702 = vmul.f32 %v572, %v1504
        %v1703 = vmul.f32 %v573, %v1505
        %v1704 = vmul.f32 %v574, %v1506
        %v1705 = vmul.f32 %v575, %v1507
        %v1706 = vmul.f32 %v576, %v1508
        %v1707 = vmul.f32 %v577, %v1509
        %v1708 = vmul.f32 %v578, %v1510
        %v1709 = vmul.f32 %v579, %v1511
        %v1710 = vmul.f32 %v580, %v1512
        %v1711 = vmul.f32 %v581, %v1513
        %v1712 = vmul.f32 %v582, %v1514
        %v1713 = vmul.f32 %v583, %v1515
        %v1714 = vmul.f32 %v584, %v1516
        %v1715 = vmul.f32 %v585, %v1517
        %v1716 = vmul.f32 %v586, %v1518
        %v1717 = vmul.f32 %v587, %v1519
        %v1718 = vmul.f32 %v588, %v1520
        %v1719 = vmul.f32 %v589, %v1521
        %v1720 = vmul.f32 %v590, %v1522
        %v1721 = vmul.f32 %v591, %v1523
        %v1722 = vmul.f32 %v592, %v1524
        %v1723 = vmul.f32 %v593, %v1525
        %v1724 = vmul.f32 %v594, %v1526
        %v1725 = vmul.f32 %v595, %v1527
        %v1726 = vmul.f32 %v596, %v1528
        %v1727 = vmul.f32 %v597, %v1529
        %v1728 = vmul.f32 %v598, %v1530
        %v1729 = vmul.f32 %v599, %v1531
        %v1730 = vmul.f32 %v600, %v1532
        %v1731 = vmul.f32 %v601, %v1533
        %v1732 = vmul.f32 %v602, %v1534
        %v1733 = vmul.f32 %v603, %v1535
        %v1734 = vmul.f32 %v604, %v1536
        %v1735 = vmul.f32 %v605, %v1537
        %v1736 = vmul.f32 %v606, %v1538
        %v1737 = vmul.f32 %v607, %v1539
        %v1738 = vmul.f32 %v608, %v1540
        %v1739 = vmul.f32 %v609, %v1541
        %v1740 = vmul.f32 %v610, %v1542
        %v1741 = vadd.f32 %v1693, %v1709
        %v1742 = vadd.f32 %v1741, %v1725
        %v1743 = vadd.f32 %v1694, %v1710
        %v1744 = vadd.f32 %v1743, %v1726
        %v1745 = vadd.f32 %v1695, %v1711
        %v1746 = vadd.f32 %v1745, %v1727
        %v1747 = vadd.f32 %v1696, %v1712
        %v1748 = vadd.f32 %v1747, %v1728
        %v1749 = vadd.f32 %v1697, %v1713
        %v1750 = vadd.f32 %v1749, %v1729
        %v1751 = vadd.f32 %v1698, %v1714
        %v1752 = vadd.f32 %v1751, %v1730
        %v1753 = vadd.f32 %v1699, %v1715
        %v1754 = vadd.f32 %v1753, %v1731
        %v1755 = vadd.f32 %v1700, %v1716
        %v1756 = vadd.f32 %v1755, %v1732
        %v1757 = vadd.f32 %v1701, %v1717
        %v1758 = vadd.f32 %v1757, %v1733
        %v1759 = vadd.f32 %v1702, %v1718
        %v1760 = vadd.f32 %v1759, %v1734
        %v1761 = vadd.f32 %v1703, %v1719
        %v1762 = vadd.f32 %v1761, %v1735
        %v1763 = vadd.f32 %v1704, %v1720
        %v1764 = vadd.f32 %v1763, %v1736
        %v1765 = vadd.f32 %v1705, %v1721
        %v1766 = vadd.f32 %v1765, %v1737
        %v1767 = vadd.f32 %v1706, %v1722
        %v1768 = vadd.f32 %v1767, %v1738
        %v1769 = vadd.f32 %v1707, %v1723
        %v1770 = vadd.f32 %v1769, %v1739
        %v1771 = vadd.f32 %v1708, %v1724
        %v1772 = vadd.f32 %v1771, %v1740
        %v1773 = vmul.f32 %v1742, 0.33333334
        %v1774 = vmul.f32 %v1744, 0.33333334
        %v1775 = vmul.f32 %v1746, 0.33333334
        %v1776 = vmul.f32 %v1748, 0.33333334
        %v1777 = vmul.f32 %v1750, 0.33333334
        %v1778 = vmul.f32 %v1752, 0.33333334
        %v1779 = vmul.f32 %v1754, 0.33333334
        %v1780 = vmul.f32 %v1756, 0.33333334
        %v1781 = vmul.f32 %v1758, 0.33333334
        %v1782 = vmul.f32 %v1760, 0.33333334
        %v1783 = vmul.f32 %v1762, 0.33333334
        %v1784 = vmul.f32 %v1764, 0.33333334
        %v1785 = vmul.f32 %v1766, 0.33333334
        %v1786 = vmul.f32 %v1768, 0.33333334
        %v1787 = vmul.f32 %v1770, 0.33333334
        %v1788 = vmul.f32 %v1772, 0.33333334
        %v1789 = vadd.f32 %v1543, %v1545
        %v1790 = vadd.f32 %v1789, %v1547
        %v1791 = vadd.f32 %v1544, %v1546
        %v1792 = vadd.f32 %v1791, %v1548
        %v1793 = vmul.f32 %v1790, 0.33333334
        %v1794 = vmul.f32 %v1792, 0.33333334
        %v1795 = vmul.f32 %v1543, %v1543
        %v1796 = vmul.f32 %v1544, %v1544
        %v1797 = vmul.f32 %v1545, %v1545
        %v1798 = vmul.f32 %v1546, %v1546
        %v1799 = vmul.f32 %v1547, %v1547
        %v1800 = vmul.f32 %v1548, %v1548
        %v1801 = vadd.f32 %v1795, %v1797
        %v1802 = vadd.f32 %v1801, %v1799
        %v1803 = vadd.f32 %v1796, %v1798
        %v1804 = vadd.f32 %v1803, %v1800
        %v1805 = vmul.f32 %v1802, 0.33333334
        %v1806 = vmul.f32 %v1804, 0.33333334
        %v1807 = vmul.f32 %v611, %v1543
        %v1808 = vmul.f32 %v612, %v1544
        %v1809 = vmul.f32 %v613, %v1545
        %v1810 = vmul.f32 %v614, %v1546
        %v1811 = vmul.f32 %v615, %v1547
        %v1812 = vmul.f32 %v616, %v1548
        %v1813 = vadd.f32 %v1807, %v1809
        %v1814 = vadd.f32 %v1813, %v1811
        %v1815 = vadd.f32 %v1808, %v1810
        %v1816 = vadd.f32 %v1815, %v1812
        %v1817 = vmul.f32 %v1814, 0.33333334
        %v1818 = vmul.f32 %v1816, 0.33333334
        %1819 = vmatprep.subr.mxu0 0.0
        %1820 = vmatpush1.msra.mxu0 %v562
        %1821 = vmatprep.subr.mxu0 0.0
        %1822 = vmatpush1.msra.mxu0 %v561
        %1823 = vmatprep.subr.mxu0 0.0
        %1824 = vmatpush1.msra.mxu0 %v560
        %1825 = vmatprep.subr.mxu0 0.0
        %1826 = vmatpush1.msra.mxu0 %v559
        %1827 = vmatprep.subr.mxu0 0.0
        %1828 = vmatpush1.msra.mxu0 %v558
        %1829 = vmatprep.subr.mxu0 0.0
        %1830 = vmatpush1.msra.mxu0 %v557
        %1831 = vmatprep.subr.mxu0 0.0
        %1832 = vmatpush1.msra.mxu0 %v556
        %1833 = vmatprep.subr.mxu0 0.0
        %1834 = vmatpush1.msra.mxu0 %v555
        %1835 = vmatprep.subr.mxu0 0.0
        %1836 = vmatpush1.msra.mxu0 %v554
        %1837 = vmatprep.subr.mxu0 0.0
        %1838 = vmatpush1.msra.mxu0 %v553
        %1839 = vmatprep.subr.mxu0 0.0
        %1840 = vmatpush1.msra.mxu0 %v552
        %1841 = vmatprep.subr.mxu0 0.0
        %1842 = vmatpush1.msra.mxu0 %v551
        %1843 = vmatprep.subr.mxu0 0.0
        %1844 = vmatpush1.msra.mxu0 %v550
        %1845 = vmatprep.subr.mxu0 0.0
        %1846 = vmatpush1.msra.mxu0 %v549
        %1847 = vmatprep.subr.mxu0 0.0
        %1848 = vmatpush1.msra.mxu0 %v548
        %1849 = vmatprep.subr.mxu0 0.0
        %1850 = vmatpush1.msra.mxu0 %v547
        %1851 = vmatprep.subr.mxu0 0.0
        %1852 = vmatpush2.msra.mxu0 0.0
        %1853 = vmatprep.subr.mxu0 0.0
        %1854 = vmatpush2.msra.mxu0 0.0
        %1855 = vmatprep.subr.mxu0 0.0
        %1856 = vmatpush2.msra.mxu0 0.0
        %1857 = vmatprep.subr.mxu0 0.0
        %1858 = vmatpush2.msra.mxu0 0.0
        %1859 = vmatprep.subr.mxu0 0.0
        %1860 = vmatpush2.msra.mxu0 0.0
        %1861 = vmatprep.subr.mxu0 0.0
        %1862 = vmatpush2.msra.mxu0 0.0
        %1863 = vmatprep.subr.mxu0 0.0
        %1864 = vmatpush2.msra.mxu0 0.0
        %1865 = vmatprep.subr.mxu0 0.0
        %1866 = vmatpush2.msra.mxu0 0.0
        %1867 = vmatprep.subr.mxu0 0.0
        %1868 = vmatpush2.msra.mxu0 0.0
        %1869 = vmatprep.subr.mxu0 0.0
        %1870 = vmatpush2.msra.mxu0 0.0
        %1871 = vmatprep.subr.mxu0 0.0
        %1872 = vmatpush2.msra.mxu0 0.0
        %1873 = vmatprep.subr.mxu0 0.0
        %1874 = vmatpush2.msra.mxu0 0.0
        %1875 = vmatprep.subr.mxu0 0.0
        %1876 = vmatpush2.msra.mxu0 0.0
        %1877 = vmatprep.subr.mxu0 0.0
        %1878 = vmatpush2.msra.mxu0 0.0
        %1879 = vmatprep.subr.mxu0 0.0
        %1880 = vmatpush2.msra.mxu0 0.0
        %1881 = vmatprep.subr.mxu0 0.0
        %1882 = vmatpush2.msra.mxu0 0.0
        %1883 = vmatprep.mubr.f32.mxu0 0.0
        %1884 = vmatmul.mubr.f32.gmra.mxu0 %v1581
        %v1885 = vpop.f32.mrf.mxu0
        %v1886 = vadd.f32 0.0, %v1885
        %v1887 = vpop.f32.mrf.mxu0
        %1888 = vmatprep.mubr.f32.mxu0 0.0
        %1889 = vmatmul.mubr.f32.gmra.mxu0 %v1582
        %v1890 = vpop.f32.mrf.mxu0
        %v1891 = vadd.f32 0.0, %v1890
        %v1892 = vpop.f32.mrf.mxu0
        %1893 = vmatprep.mubr.f32.mxu0 0.0
        %1894 = vmatmul.mubr.f32.gmra.mxu0 %v1583
        %v1895 = vpop.f32.mrf.mxu0
        %v1896 = vadd.f32 0.0, %v1895
        %v1897 = vpop.f32.mrf.mxu0
        %1898 = vmatprep.mubr.f32.mxu0 0.0
        %1899 = vmatmul.mubr.f32.gmra.mxu0 %v1584
        %v1900 = vpop.f32.mrf.mxu0
        %v1901 = vadd.f32 0.0, %v1900
        %v1902 = vpop.f32.mrf.mxu0
        %1903 = vmatprep.mubr.f32.mxu0 0.0
        %1904 = vmatmul.mubr.f32.gmra.mxu0 %v1585
        %v1905 = vpop.f32.mrf.mxu0
        %v1906 = vadd.f32 0.0, %v1905
        %v1907 = vpop.f32.mrf.mxu0
        %1908 = vmatprep.mubr.f32.mxu0 0.0
        %1909 = vmatmul.mubr.f32.gmra.mxu0 %v1586
        %v1910 = vpop.f32.mrf.mxu0
        %v1911 = vadd.f32 0.0, %v1910
        %v1912 = vpop.f32.mrf.mxu0
        %1913 = vmatprep.mubr.f32.mxu0 0.0
        %1914 = vmatmul.mubr.f32.gmra.mxu0 %v1587
        %v1915 = vpop.f32.mrf.mxu0
        %v1916 = vadd.f32 0.0, %v1915
        %v1917 = vpop.f32.mrf.mxu0
        %1918 = vmatprep.mubr.f32.mxu0 0.0
        %1919 = vmatmul.mubr.f32.gmra.mxu0 %v1588
        %v1920 = vpop.f32.mrf.mxu0
        %v1921 = vadd.f32 0.0, %v1920
        %v1922 = vpop.f32.mrf.mxu0
        %1923 = vmatprep.mubr.f32.mxu0 0.0
        %1924 = vmatmul.mubr.f32.gmra.mxu0 %v1589
        %v1925 = vpop.f32.mrf.mxu0
        %v1926 = vadd.f32 0.0, %v1925
        %v1927 = vpop.f32.mrf.mxu0
        %1928 = vmatprep.mubr.f32.mxu0 0.0
        %1929 = vmatmul.mubr.f32.gmra.mxu0 %v1590
        %v1930 = vpop.f32.mrf.mxu0
        %v1931 = vadd.f32 0.0, %v1930
        %v1932 = vpop.f32.mrf.mxu0
        %1933 = vmatprep.mubr.f32.mxu0 0.0
        %1934 = vmatmul.mubr.f32.gmra.mxu0 %v1591
        %v1935 = vpop.f32.mrf.mxu0
        %v1936 = vadd.f32 0.0, %v1935
        %v1937 = vpop.f32.mrf.mxu0
        %1938 = vmatprep.mubr.f32.mxu0 0.0
        %1939 = vmatmul.mubr.f32.gmra.mxu0 %v1592
        %v1940 = vpop.f32.mrf.mxu0
        %v1941 = vadd.f32 0.0, %v1940
        %v1942 = vpop.f32.mrf.mxu0
        %1943 = vmatprep.mubr.f32.mxu0 0.0
        %1944 = vmatmul.mubr.f32.gmra.mxu0 %v1593
        %v1945 = vpop.f32.mrf.mxu0
        %v1946 = vadd.f32 0.0, %v1945
        %v1947 = vpop.f32.mrf.mxu0
        %1948 = vmatprep.mubr.f32.mxu0 0.0
        %1949 = vmatmul.mubr.f32.gmra.mxu0 %v1594
        %v1950 = vpop.f32.mrf.mxu0
        %v1951 = vadd.f32 0.0, %v1950
        %v1952 = vpop.f32.mrf.mxu0
        %1953 = vmatprep.mubr.f32.mxu0 0.0
        %1954 = vmatmul.mubr.f32.gmra.mxu0 %v1595
        %v1955 = vpop.f32.mrf.mxu0
        %v1956 = vadd.f32 0.0, %v1955
        %v1957 = vpop.f32.mrf.mxu0
        %1958 = vmatprep.mubr.f32.mxu0 0.0
        %1959 = vmatmul.mubr.f32.gmra.mxu0 %v1596
        %v1960 = vpop.f32.mrf.mxu0
        %v1961 = vadd.f32 0.0, %v1960
        %v1962 = vpop.f32.mrf.mxu0
        %1963 = vmatprep.mubr.f32.mxu0 0.0
        %1964 = vmatmul.mubr.f32.gmra.mxu0 %v1677
        %v1965 = vpop.f32.mrf.mxu0
        %v1966 = vadd.f32 0.0, %v1965
        %v1967 = vpop.f32.mrf.mxu0
        %1968 = vmatprep.mubr.f32.mxu0 0.0
        %1969 = vmatmul.mubr.f32.gmra.mxu0 %v1678
        %v1970 = vpop.f32.mrf.mxu0
        %v1971 = vadd.f32 0.0, %v1970
        %v1972 = vpop.f32.mrf.mxu0
        %1973 = vmatprep.mubr.f32.mxu0 0.0
        %1974 = vmatmul.mubr.f32.gmra.mxu0 %v1679
        %v1975 = vpop.f32.mrf.mxu0
        %v1976 = vadd.f32 0.0, %v1975
        %v1977 = vpop.f32.mrf.mxu0
        %1978 = vmatprep.mubr.f32.mxu0 0.0
        %1979 = vmatmul.mubr.f32.gmra.mxu0 %v1680
        %v1980 = vpop.f32.mrf.mxu0
        %v1981 = vadd.f32 0.0, %v1980
        %v1982 = vpop.f32.mrf.mxu0
        %1983 = vmatprep.mubr.f32.mxu0 0.0
        %1984 = vmatmul.mubr.f32.gmra.mxu0 %v1681
        %v1985 = vpop.f32.mrf.mxu0
        %v1986 = vadd.f32 0.0, %v1985
        %v1987 = vpop.f32.mrf.mxu0
        %1988 = vmatprep.mubr.f32.mxu0 0.0
        %1989 = vmatmul.mubr.f32.gmra.mxu0 %v1682
        %v1990 = vpop.f32.mrf.mxu0
        %v1991 = vadd.f32 0.0, %v1990
        %v1992 = vpop.f32.mrf.mxu0
        %1993 = vmatprep.mubr.f32.mxu0 0.0
        %1994 = vmatmul.mubr.f32.gmra.mxu0 %v1683
        %v1995 = vpop.f32.mrf.mxu0
        %v1996 = vadd.f32 0.0, %v1995
        %v1997 = vpop.f32.mrf.mxu0
        %1998 = vmatprep.mubr.f32.mxu0 0.0
        %1999 = vmatmul.mubr.f32.gmra.mxu0 %v1684
        %v2000 = vpop.f32.mrf.mxu0
        %v2001 = vadd.f32 0.0, %v2000
        %v2002 = vpop.f32.mrf.mxu0
        %2003 = vmatprep.mubr.f32.mxu0 0.0
        %2004 = vmatmul.mubr.f32.gmra.mxu0 %v1685
        %v2005 = vpop.f32.mrf.mxu0
        %v2006 = vadd.f32 0.0, %v2005
        %v2007 = vpop.f32.mrf.mxu0
        %2008 = vmatprep.mubr.f32.mxu0 0.0
        %2009 = vmatmul.mubr.f32.gmra.mxu0 %v1686
        %v2010 = vpop.f32.mrf.mxu0
        %v2011 = vadd.f32 0.0, %v2010
        %v2012 = vpop.f32.mrf.mxu0
        %2013 = vmatprep.mubr.f32.mxu0 0.0
        %2014 = vmatmul.mubr.f32.gmra.mxu0 %v1687
        %v2015 = vpop.f32.mrf.mxu0
        %v2016 = vadd.f32 0.0, %v2015
        %v2017 = vpop.f32.mrf.mxu0
        %2018 = vmatprep.mubr.f32.mxu0 0.0
        %2019 = vmatmul.mubr.f32.gmra.mxu0 %v1688
        %v2020 = vpop.f32.mrf.mxu0
        %v2021 = vadd.f32 0.0, %v2020
        %v2022 = vpop.f32.mrf.mxu0
        %2023 = vmatprep.mubr.f32.mxu0 0.0
        %2024 = vmatmul.mubr.f32.gmra.mxu0 %v1689
        %v2025 = vpop.f32.mrf.mxu0
        %v2026 = vadd.f32 0.0, %v2025
        %v2027 = vpop.f32.mrf.mxu0
        %2028 = vmatprep.mubr.f32.mxu0 0.0
        %2029 = vmatmul.mubr.f32.gmra.mxu0 %v1690
        %v2030 = vpop.f32.mrf.mxu0
        %v2031 = vadd.f32 0.0, %v2030
        %v2032 = vpop.f32.mrf.mxu0
        %2033 = vmatprep.mubr.f32.mxu0 0.0
        %2034 = vmatmul.mubr.f32.gmra.mxu0 %v1691
        %v2035 = vpop.f32.mrf.mxu0
        %v2036 = vadd.f32 0.0, %v2035
        %v2037 = vpop.f32.mrf.mxu0
        %2038 = vmatprep.mubr.f32.mxu0 0.0
        %2039 = vmatmul.mubr.f32.gmra.mxu0 %v1692
        %v2040 = vpop.f32.mrf.mxu0
        %v2041 = vadd.f32 0.0, %v2040
        %v2042 = vpop.f32.mrf.mxu0
        %2043 = vmatprep.mubr.f32.mxu0 0.0
        %2044 = vmatmul.mubr.f32.gmra.mxu0 %v1773
        %v2045 = vpop.f32.mrf.mxu0
        %v2046 = vadd.f32 0.0, %v2045
        %v2047 = vpop.f32.mrf.mxu0
        %2048 = vmatprep.mubr.f32.mxu0 0.0
        %2049 = vmatmul.mubr.f32.gmra.mxu0 %v1774
        %v2050 = vpop.f32.mrf.mxu0
        %v2051 = vadd.f32 0.0, %v2050
        %v2052 = vpop.f32.mrf.mxu0
        %2053 = vmatprep.mubr.f32.mxu0 0.0
        %2054 = vmatmul.mubr.f32.gmra.mxu0 %v1775
        %v2055 = vpop.f32.mrf.mxu0
        %v2056 = vadd.f32 0.0, %v2055
        %v2057 = vpop.f32.mrf.mxu0
        %2058 = vmatprep.mubr.f32.mxu0 0.0
        %2059 = vmatmul.mubr.f32.gmra.mxu0 %v1776
        %v2060 = vpop.f32.mrf.mxu0
        %v2061 = vadd.f32 0.0, %v2060
        %v2062 = vpop.f32.mrf.mxu0
        %2063 = vmatprep.mubr.f32.mxu0 0.0
        %2064 = vmatmul.mubr.f32.gmra.mxu0 %v1777
        %v2065 = vpop.f32.mrf.mxu0
        %v2066 = vadd.f32 0.0, %v2065
        %v2067 = vpop.f32.mrf.mxu0
        %2068 = vmatprep.mubr.f32.mxu0 0.0
        %2069 = vmatmul.mubr.f32.gmra.mxu0 %v1778
        %v2070 = vpop.f32.mrf.mxu0
        %v2071 = vadd.f32 0.0, %v2070
        %v2072 = vpop.f32.mrf.mxu0
        %2073 = vmatprep.mubr.f32.mxu0 0.0
        %2074 = vmatmul.mubr.f32.gmra.mxu0 %v1779
        %v2075 = vpop.f32.mrf.mxu0
        %v2076 = vadd.f32 0.0, %v2075
        %v2077 = vpop.f32.mrf.mxu0
        %2078 = vmatprep.mubr.f32.mxu0 0.0
        %2079 = vmatmul.mubr.f32.gmra.mxu0 %v1780
        %v2080 = vpop.f32.mrf.mxu0
        %v2081 = vadd.f32 0.0, %v2080
        %v2082 = vpop.f32.mrf.mxu0
        %2083 = vmatprep.mubr.f32.mxu0 0.0
        %2084 = vmatmul.mubr.f32.gmra.mxu0 %v1781
        %v2085 = vpop.f32.mrf.mxu0
        %v2086 = vadd.f32 0.0, %v2085
        %v2087 = vpop.f32.mrf.mxu0
        %2088 = vmatprep.mubr.f32.mxu0 0.0
        %2089 = vmatmul.mubr.f32.gmra.mxu0 %v1782
        %v2090 = vpop.f32.mrf.mxu0
        %v2091 = vadd.f32 0.0, %v2090
        %v2092 = vpop.f32.mrf.mxu0
        %2093 = vmatprep.mubr.f32.mxu0 0.0
        %2094 = vmatmul.mubr.f32.gmra.mxu0 %v1783
        %v2095 = vpop.f32.mrf.mxu0
        %v2096 = vadd.f32 0.0, %v2095
        %v2097 = vpop.f32.mrf.mxu0
        %2098 = vmatprep.mubr.f32.mxu0 0.0
        %2099 = vmatmul.mubr.f32.gmra.mxu0 %v1784
        %v2100 = vpop.f32.mrf.mxu0
        %v2101 = vadd.f32 0.0, %v2100
        %v2102 = vpop.f32.mrf.mxu0
        %2103 = vmatprep.mubr.f32.mxu0 0.0
        %2104 = vmatmul.mubr.f32.gmra.mxu0 %v1785
        %v2105 = vpop.f32.mrf.mxu0
        %v2106 = vadd.f32 0.0, %v2105
        %v2107 = vpop.f32.mrf.mxu0
        %2108 = vmatprep.mubr.f32.mxu0 0.0
        %2109 = vmatmul.mubr.f32.gmra.mxu0 %v1786
        %v2110 = vpop.f32.mrf.mxu0
        %v2111 = vadd.f32 0.0, %v2110
        %v2112 = vpop.f32.mrf.mxu0
        %2113 = vmatprep.mubr.f32.mxu0 0.0
        %2114 = vmatmul.mubr.f32.gmra.mxu0 %v1787
        %v2115 = vpop.f32.mrf.mxu0
        %v2116 = vadd.f32 0.0, %v2115
        %v2117 = vpop.f32.mrf.mxu0
        %2118 = vmatprep.mubr.f32.mxu0 0.0
        %2119 = vmatmul.mubr.f32.gmra.mxu0 %v1788
        %v2120 = vpop.f32.mrf.mxu0
        %v2121 = vadd.f32 0.0, %v2120
        %v2122 = vpop.f32.mrf.mxu0
        %2123 = vmatprep.mubr.f32.mxu0 0.0
        %2124 = vmatmul.mubr.f32.gmra.mxu0 %v1793
        %v2125 = vpop.f32.mrf.mxu0
        %v2126 = vadd.f32 0.0, %v2125
        %v2127 = vpop.f32.mrf.mxu0
        %2128 = vmatprep.mubr.f32.mxu0 0.0
        %2129 = vmatmul.mubr.f32.gmra.mxu0 %v1794
        %v2130 = vpop.f32.mrf.mxu0
        %v2131 = vadd.f32 0.0, %v2130
        %v2132 = vpop.f32.mrf.mxu0
        %2133 = vmatprep.mubr.f32.mxu0 0.0
        %2134 = vmatmul.mubr.f32.gmra.mxu0 %v1805
        %v2135 = vpop.f32.mrf.mxu0
        %v2136 = vadd.f32 0.0, %v2135
        %v2137 = vpop.f32.mrf.mxu0
        %2138 = vmatprep.mubr.f32.mxu0 0.0
        %2139 = vmatmul.mubr.f32.gmra.mxu0 %v1806
        %v2140 = vpop.f32.mrf.mxu0
        %v2141 = vadd.f32 0.0, %v2140
        %v2142 = vpop.f32.mrf.mxu0
        %2143 = vmatprep.mubr.f32.mxu0 0.0
        %2144 = vmatmul.mubr.f32.gmra.mxu0 %v1817
        %v2145 = vpop.f32.mrf.mxu0
        %v2146 = vadd.f32 0.0, %v2145
        %v2147 = vpop.f32.mrf.mxu0
        %2148 = vmatprep.mubr.f32.mxu0 0.0
        %2149 = vmatmul.mubr.f32.gmra.mxu0 %v1818
        %v2150 = vpop.f32.mrf.mxu0
        %v2151 = vadd.f32 0.0, %v2150
        %v2152 = vpop.f32.mrf.mxu0
        %2153 = vdwg.mxu0
        %vm2154 = vcmask 130048
        %v2156 = vsel %vm2154, %v531, 0
        %v2159 = vsel %vm2154, %v532, 0
        %v2162 = vsel %vm2154, %v533, 0
        %v2165 = vsel %vm2154, %v534, 0
        %v2168 = vsel %vm2154, %v535, 0
        %v2171 = vsel %vm2154, %v536, 0
        %v2174 = vsel %vm2154, %v537, 0
        %v2177 = vsel %vm2154, %v538, 0
        %v2180 = vsel %vm2154, %v539, 0
        %v2183 = vsel %vm2154, %v540, 0
        %v2186 = vsel %vm2154, %v541, 0
        %v2189 = vsel %vm2154, %v542, 0
        %v2192 = vsel %vm2154, %v543, 0
        %v2195 = vsel %vm2154, %v544, 0
        %v2198 = vsel %vm2154, %v545, 0
        %v2201 = vsel %vm2154, %v546, 0
        %2203 = vmatprep.subr.mxu0 0.0
        %2204 = vmatpush1.msra.mxu0 0.0
        %2205 = vmatprep.subr.mxu0 0.0
        %2206 = vmatpush1.msra.mxu0 0.0
        %2207 = vmatprep.subr.mxu0 0.0
        %2208 = vmatpush1.msra.mxu0 0.0
        %2209 = vmatprep.subr.mxu0 0.0
        %2210 = vmatpush1.msra.mxu0 0.0
        %2211 = vmatprep.subr.mxu0 0.0
        %2212 = vmatpush1.msra.mxu0 0.0
        %2213 = vmatprep.subr.mxu0 0.0
        %2214 = vmatpush1.msra.mxu0 0.0
        %2215 = vmatprep.subr.mxu0 0.0
        %2216 = vmatpush1.msra.mxu0 0.0
        %2217 = vmatprep.subr.mxu0 0.0
        %2218 = vmatpush1.msra.mxu0 0.0
        %2219 = vmatprep.subr.mxu0 0.0
        %2220 = vmatpush1.msra.mxu0 0.0
        %2221 = vmatprep.subr.mxu0 0.0
        %2222 = vmatpush1.msra.mxu0 0.0
        %2223 = vmatprep.subr.mxu0 0.0
        %2224 = vmatpush1.msra.mxu0 0.0
        %2225 = vmatprep.subr.mxu0 0.0
        %2226 = vmatpush1.msra.mxu0 0.0
        %2227 = vmatprep.subr.mxu0 0.0
        %2228 = vmatpush1.msra.mxu0 0.0
        %2229 = vmatprep.subr.mxu0 0.0
        %2230 = vmatpush1.msra.mxu0 0.0
        %2231 = vmatprep.subr.mxu0 %v2141
        %2232 = vmatpush1.msra.mxu0 %v2131
        %2233 = vmatprep.subr.mxu0 %v2136
        %2234 = vmatpush1.msra.mxu0 %v2126
        %2235 = vmatprep.subr.mxu0 0.0
        %2236 = vmatpush2.msra.mxu0 0.0
        %2237 = vmatprep.subr.mxu0 0.0
        %2238 = vmatpush2.msra.mxu0 0.0
        %2239 = vmatprep.subr.mxu0 0.0
        %2240 = vmatpush2.msra.mxu0 0.0
        %2241 = vmatprep.subr.mxu0 0.0
        %2242 = vmatpush2.msra.mxu0 0.0
        %2243 = vmatprep.subr.mxu0 0.0
        %2244 = vmatpush2.msra.mxu0 0.0
        %2245 = vmatprep.subr.mxu0 0.0
        %2246 = vmatpush2.msra.mxu0 0.0
        %2247 = vmatprep.subr.mxu0 0.0
        %2248 = vmatpush2.msra.mxu0 0.0
        %2249 = vmatprep.subr.mxu0 0.0
        %2250 = vmatpush2.msra.mxu0 0.0
        %2251 = vmatprep.subr.mxu0 0.0
        %2252 = vmatpush2.msra.mxu0 0.0
        %2253 = vmatprep.subr.mxu0 0.0
        %2254 = vmatpush2.msra.mxu0 0.0
        %2255 = vmatprep.subr.mxu0 0.0
        %2256 = vmatpush2.msra.mxu0 0.0
        %2257 = vmatprep.subr.mxu0 0.0
        %2258 = vmatpush2.msra.mxu0 0.0
        %2259 = vmatprep.subr.mxu0 0.0
        %2260 = vmatpush2.msra.mxu0 0.0
        %2261 = vmatprep.subr.mxu0 0.0
        %2262 = vmatpush2.msra.mxu0 0.0
        %2263 = vmatprep.subr.mxu0 0.0
        %2264 = vmatpush2.msra.mxu0 0.0
        %2265 = vmatprep.subr.mxu0 0.0
        %2266 = vmatpush2.msra.mxu0 0.0
        %2267 = vmatprep.mubr.f32.mxu0 0.0
        %2268 = vmatmul.mubr.f32.gmra.mxu0 %v2156
        %v2269 = vpop.f32.mrf.mxu0
        %v2270 = vadd.f32 0.0, %v2269
        %v2271 = vpop.f32.mrf.mxu0
        %v2272 = vadd.f32 0.0, %v2271
        %2273 = vmatprep.mubr.f32.mxu0 0.0
        %2274 = vmatmul.mubr.f32.gmra.mxu0 %v2159
        %v2275 = vpop.f32.mrf.mxu0
        %v2276 = vadd.f32 0.0, %v2275
        %v2277 = vpop.f32.mrf.mxu0
        %v2278 = vadd.f32 0.0, %v2277
        %2279 = vmatprep.mubr.f32.mxu0 0.0
        %2280 = vmatmul.mubr.f32.gmra.mxu0 %v2162
        %v2281 = vpop.f32.mrf.mxu0
        %v2282 = vadd.f32 0.0, %v2281
        %v2283 = vpop.f32.mrf.mxu0
        %v2284 = vadd.f32 0.0, %v2283
        %2285 = vmatprep.mubr.f32.mxu0 0.0
        %2286 = vmatmul.mubr.f32.gmra.mxu0 %v2165
        %v2287 = vpop.f32.mrf.mxu0
        %v2288 = vadd.f32 0.0, %v2287
        %v2289 = vpop.f32.mrf.mxu0
        %v2290 = vadd.f32 0.0, %v2289
        %2291 = vmatprep.mubr.f32.mxu0 0.0
        %2292 = vmatmul.mubr.f32.gmra.mxu0 %v2168
        %v2293 = vpop.f32.mrf.mxu0
        %v2294 = vadd.f32 0.0, %v2293
        %v2295 = vpop.f32.mrf.mxu0
        %v2296 = vadd.f32 0.0, %v2295
        %2297 = vmatprep.mubr.f32.mxu0 0.0
        %2298 = vmatmul.mubr.f32.gmra.mxu0 %v2171
        %v2299 = vpop.f32.mrf.mxu0
        %v2300 = vadd.f32 0.0, %v2299
        %v2301 = vpop.f32.mrf.mxu0
        %v2302 = vadd.f32 0.0, %v2301
        %2303 = vmatprep.mubr.f32.mxu0 0.0
        %2304 = vmatmul.mubr.f32.gmra.mxu0 %v2174
        %v2305 = vpop.f32.mrf.mxu0
        %v2306 = vadd.f32 0.0, %v2305
        %v2307 = vpop.f32.mrf.mxu0
        %v2308 = vadd.f32 0.0, %v2307
        %2309 = vmatprep.mubr.f32.mxu0 0.0
        %2310 = vmatmul.mubr.f32.gmra.mxu0 %v2177
        %v2311 = vpop.f32.mrf.mxu0
        %v2312 = vadd.f32 0.0, %v2311
        %v2313 = vpop.f32.mrf.mxu0
        %v2314 = vadd.f32 0.0, %v2313
        %2315 = vmatprep.mubr.f32.mxu0 0.0
        %2316 = vmatmul.mubr.f32.gmra.mxu0 %v2180
        %v2317 = vpop.f32.mrf.mxu0
        %v2318 = vadd.f32 0.0, %v2317
        %v2319 = vpop.f32.mrf.mxu0
        %v2320 = vadd.f32 0.0, %v2319
        %2321 = vmatprep.mubr.f32.mxu0 0.0
        %2322 = vmatmul.mubr.f32.gmra.mxu0 %v2183
        %v2323 = vpop.f32.mrf.mxu0
        %v2324 = vadd.f32 0.0, %v2323
        %v2325 = vpop.f32.mrf.mxu0
        %v2326 = vadd.f32 0.0, %v2325
        %2327 = vmatprep.mubr.f32.mxu0 0.0
        %2328 = vmatmul.mubr.f32.gmra.mxu0 %v2186
        %v2329 = vpop.f32.mrf.mxu0
        %v2330 = vadd.f32 0.0, %v2329
        %v2331 = vpop.f32.mrf.mxu0
        %v2332 = vadd.f32 0.0, %v2331
        %2333 = vmatprep.mubr.f32.mxu0 0.0
        %2334 = vmatmul.mubr.f32.gmra.mxu0 %v2189
        %v2335 = vpop.f32.mrf.mxu0
        %v2336 = vadd.f32 0.0, %v2335
        %v2337 = vpop.f32.mrf.mxu0
        %v2338 = vadd.f32 0.0, %v2337
        %2339 = vmatprep.mubr.f32.mxu0 0.0
        %2340 = vmatmul.mubr.f32.gmra.mxu0 %v2192
        %v2341 = vpop.f32.mrf.mxu0
        %v2342 = vadd.f32 0.0, %v2341
        %v2343 = vpop.f32.mrf.mxu0
        %v2344 = vadd.f32 0.0, %v2343
        %2345 = vmatprep.mubr.f32.mxu0 0.0
        %2346 = vmatmul.mubr.f32.gmra.mxu0 %v2195
        %v2347 = vpop.f32.mrf.mxu0
        %v2348 = vadd.f32 0.0, %v2347
        %v2349 = vpop.f32.mrf.mxu0
        %v2350 = vadd.f32 0.0, %v2349
        %2351 = vmatprep.mubr.f32.mxu0 0.0
        %2352 = vmatmul.mubr.f32.gmra.mxu0 %v2198
        %v2353 = vpop.f32.mrf.mxu0
        %v2354 = vadd.f32 0.0, %v2353
        %v2355 = vpop.f32.mrf.mxu0
        %v2356 = vadd.f32 0.0, %v2355
        %2357 = vmatprep.mubr.f32.mxu0 0.0
        %2358 = vmatmul.mubr.f32.gmra.mxu0 %v2201
        %v2359 = vpop.f32.mrf.mxu0
        %v2360 = vadd.f32 0.0, %v2359
        %v2361 = vpop.f32.mrf.mxu0
        %v2362 = vadd.f32 0.0, %v2361
        %2363 = vdwg.mxu0
        %2364 = vmatprep.subr.mxu0 0.0
        %2365 = vmatpush1.msra.mxu0 0.0
        %2366 = vmatprep.subr.mxu0 0.0
        %2367 = vmatpush1.msra.mxu0 0.0
        %2368 = vmatprep.subr.mxu0 0.0
        %2369 = vmatpush1.msra.mxu0 0.0
        %2370 = vmatprep.subr.mxu0 0.0
        %2371 = vmatpush1.msra.mxu0 0.0
        %2372 = vmatprep.subr.mxu0 0.0
        %2373 = vmatpush1.msra.mxu0 0.0
        %2374 = vmatprep.subr.mxu0 0.0
        %2375 = vmatpush1.msra.mxu0 0.0
        %2376 = vmatprep.subr.mxu0 0.0
        %2377 = vmatpush1.msra.mxu0 0.0
        %2378 = vmatprep.subr.mxu0 0.0
        %2379 = vmatpush1.msra.mxu0 0.0
        %2380 = vmatprep.subr.mxu0 0.0
        %2381 = vmatpush1.msra.mxu0 0.0
        %2382 = vmatprep.subr.mxu0 0.0
        %2383 = vmatpush1.msra.mxu0 0.0
        %2384 = vmatprep.subr.mxu0 0.0
        %2385 = vmatpush1.msra.mxu0 0.0
        %2386 = vmatprep.subr.mxu0 0.0
        %2387 = vmatpush1.msra.mxu0 0.0
        %2388 = vmatprep.subr.mxu0 0.0
        %2389 = vmatpush1.msra.mxu0 0.0
        %2390 = vmatprep.subr.mxu0 0.0
        %2391 = vmatpush1.msra.mxu0 0.0
        %2392 = vmatprep.subr.mxu0 0.0
        %2393 = vmatpush1.msra.mxu0 %v2151
        %2394 = vmatprep.subr.mxu0 0.0
        %2395 = vmatpush1.msra.mxu0 %v2146
        %2396 = vmatprep.subr.mxu0 0.0
        %2397 = vmatpush2.msra.mxu0 0.0
        %2398 = vmatprep.subr.mxu0 0.0
        %2399 = vmatpush2.msra.mxu0 0.0
        %2400 = vmatprep.subr.mxu0 0.0
        %2401 = vmatpush2.msra.mxu0 0.0
        %2402 = vmatprep.subr.mxu0 0.0
        %2403 = vmatpush2.msra.mxu0 0.0
        %2404 = vmatprep.subr.mxu0 0.0
        %2405 = vmatpush2.msra.mxu0 0.0
        %2406 = vmatprep.subr.mxu0 0.0
        %2407 = vmatpush2.msra.mxu0 0.0
        %2408 = vmatprep.subr.mxu0 0.0
        %2409 = vmatpush2.msra.mxu0 0.0
        %2410 = vmatprep.subr.mxu0 0.0
        %2411 = vmatpush2.msra.mxu0 0.0
        %2412 = vmatprep.subr.mxu0 0.0
        %2413 = vmatpush2.msra.mxu0 0.0
        %2414 = vmatprep.subr.mxu0 0.0
        %2415 = vmatpush2.msra.mxu0 0.0
        %2416 = vmatprep.subr.mxu0 0.0
        %2417 = vmatpush2.msra.mxu0 0.0
        %2418 = vmatprep.subr.mxu0 0.0
        %2419 = vmatpush2.msra.mxu0 0.0
        %2420 = vmatprep.subr.mxu0 0.0
        %2421 = vmatpush2.msra.mxu0 0.0
        %2422 = vmatprep.subr.mxu0 0.0
        %2423 = vmatpush2.msra.mxu0 0.0
        %2424 = vmatprep.subr.mxu0 0.0
        %2425 = vmatpush2.msra.mxu0 0.0
        %2426 = vmatprep.subr.mxu0 0.0
        %2427 = vmatpush2.msra.mxu0 0.0
        %2428 = vmatprep.mubr.f32.mxu0 0.0
        %2429 = vmatmul.mubr.f32.gmra.mxu0 %v2156
        %v2430 = vpop.f32.mrf.mxu0
        %v2431 = vadd.f32 0.0, %v2430
        %v2432 = vpop.f32.mrf.mxu0
        %2433 = vmatprep.mubr.f32.mxu0 0.0
        %2434 = vmatmul.mubr.f32.gmra.mxu0 %v2159
        %v2435 = vpop.f32.mrf.mxu0
        %v2436 = vadd.f32 0.0, %v2435
        %v2437 = vpop.f32.mrf.mxu0
        %2438 = vmatprep.mubr.f32.mxu0 0.0
        %2439 = vmatmul.mubr.f32.gmra.mxu0 %v2162
        %v2440 = vpop.f32.mrf.mxu0
        %v2441 = vadd.f32 0.0, %v2440
        %v2442 = vpop.f32.mrf.mxu0
        %2443 = vmatprep.mubr.f32.mxu0 0.0
        %2444 = vmatmul.mubr.f32.gmra.mxu0 %v2165
        %v2445 = vpop.f32.mrf.mxu0
        %v2446 = vadd.f32 0.0, %v2445
        %v2447 = vpop.f32.mrf.mxu0
        %2448 = vmatprep.mubr.f32.mxu0 0.0
        %2449 = vmatmul.mubr.f32.gmra.mxu0 %v2168
        %v2450 = vpop.f32.mrf.mxu0
        %v2451 = vadd.f32 0.0, %v2450
        %v2452 = vpop.f32.mrf.mxu0
        %2453 = vmatprep.mubr.f32.mxu0 0.0
        %2454 = vmatmul.mubr.f32.gmra.mxu0 %v2171
        %v2455 = vpop.f32.mrf.mxu0
        %v2456 = vadd.f32 0.0, %v2455
        %v2457 = vpop.f32.mrf.mxu0
        %2458 = vmatprep.mubr.f32.mxu0 0.0
        %2459 = vmatmul.mubr.f32.gmra.mxu0 %v2174
        %v2460 = vpop.f32.mrf.mxu0
        %v2461 = vadd.f32 0.0, %v2460
        %v2462 = vpop.f32.mrf.mxu0
        %2463 = vmatprep.mubr.f32.mxu0 0.0
        %2464 = vmatmul.mubr.f32.gmra.mxu0 %v2177
        %v2465 = vpop.f32.mrf.mxu0
        %v2466 = vadd.f32 0.0, %v2465
        %v2467 = vpop.f32.mrf.mxu0
        %2468 = vmatprep.mubr.f32.mxu0 0.0
        %2469 = vmatmul.mubr.f32.gmra.mxu0 %v2180
        %v2470 = vpop.f32.mrf.mxu0
        %v2471 = vadd.f32 0.0, %v2470
        %v2472 = vpop.f32.mrf.mxu0
        %2473 = vmatprep.mubr.f32.mxu0 0.0
        %2474 = vmatmul.mubr.f32.gmra.mxu0 %v2183
        %v2475 = vpop.f32.mrf.mxu0
        %v2476 = vadd.f32 0.0, %v2475
        %v2477 = vpop.f32.mrf.mxu0
        %2478 = vmatprep.mubr.f32.mxu0 0.0
        %2479 = vmatmul.mubr.f32.gmra.mxu0 %v2186
        %v2480 = vpop.f32.mrf.mxu0
        %v2481 = vadd.f32 0.0, %v2480
        %v2482 = vpop.f32.mrf.mxu0
        %2483 = vmatprep.mubr.f32.mxu0 0.0
        %2484 = vmatmul.mubr.f32.gmra.mxu0 %v2189
        %v2485 = vpop.f32.mrf.mxu0
        %v2486 = vadd.f32 0.0, %v2485
        %v2487 = vpop.f32.mrf.mxu0
        %2488 = vmatprep.mubr.f32.mxu0 0.0
        %2489 = vmatmul.mubr.f32.gmra.mxu0 %v2192
        %v2490 = vpop.f32.mrf.mxu0
        %v2491 = vadd.f32 0.0, %v2490
        %v2492 = vpop.f32.mrf.mxu0
        %2493 = vmatprep.mubr.f32.mxu0 0.0
        %2494 = vmatmul.mubr.f32.gmra.mxu0 %v2195
        %v2495 = vpop.f32.mrf.mxu0
        %v2496 = vadd.f32 0.0, %v2495
        %v2497 = vpop.f32.mrf.mxu0
        %2498 = vmatprep.mubr.f32.mxu0 0.0
        %2499 = vmatmul.mubr.f32.gmra.mxu0 %v2198
        %v2500 = vpop.f32.mrf.mxu0
        %v2501 = vadd.f32 0.0, %v2500
        %v2502 = vpop.f32.mrf.mxu0
        %2503 = vmatprep.mubr.f32.mxu0 0.0
        %2504 = vmatmul.mubr.f32.gmra.mxu0 %v2201
        %v2505 = vpop.f32.mrf.mxu0
        %v2506 = vadd.f32 0.0, %v2505
        %v2507 = vpop.f32.mrf.mxu0
        %2508 = vdwg.mxu0
        %2509 = vmatprep.subr.mxu0 %v2041
        %2510 = vmatpush1.msra.mxu0 %v1961
        %2511 = vmatprep.subr.mxu0 %v2036
        %2512 = vmatpush1.msra.mxu0 %v1956
        %2513 = vmatprep.subr.mxu0 %v2031
        %2514 = vmatpush1.msra.mxu0 %v1951
        %2515 = vmatprep.subr.mxu0 %v2026
        %2516 = vmatpush1.msra.mxu0 %v1946
        %2517 = vmatprep.subr.mxu0 %v2021
        %2518 = vmatpush1.msra.mxu0 %v1941
        %2519 = vmatprep.subr.mxu0 %v2016
        %2520 = vmatpush1.msra.mxu0 %v1936
        %2521 = vmatprep.subr.mxu0 %v2011
        %2522 = vmatpush1.msra.mxu0 %v1931
        %2523 = vmatprep.subr.mxu0 %v2006
        %2524 = vmatpush1.msra.mxu0 %v1926
        %2525 = vmatprep.subr.mxu0 %v2001
        %2526 = vmatpush1.msra.mxu0 %v1921
        %2527 = vmatprep.subr.mxu0 %v1996
        %2528 = vmatpush1.msra.mxu0 %v1916
        %2529 = vmatprep.subr.mxu0 %v1991
        %2530 = vmatpush1.msra.mxu0 %v1911
        %2531 = vmatprep.subr.mxu0 %v1986
        %2532 = vmatpush1.msra.mxu0 %v1906
        %2533 = vmatprep.subr.mxu0 %v1981
        %2534 = vmatpush1.msra.mxu0 %v1901
        %2535 = vmatprep.subr.mxu0 %v1976
        %2536 = vmatpush1.msra.mxu0 %v1896
        %2537 = vmatprep.subr.mxu0 %v1971
        %2538 = vmatpush1.msra.mxu0 %v1891
        %2539 = vmatprep.subr.mxu0 %v1966
        %2540 = vmatpush1.msra.mxu0 %v1886
        %2541 = vmatprep.subr.mxu0 0.0
        %2542 = vmatpush2.msra.mxu0 0.0
        %2543 = vmatprep.subr.mxu0 0.0
        %2544 = vmatpush2.msra.mxu0 0.0
        %2545 = vmatprep.subr.mxu0 0.0
        %2546 = vmatpush2.msra.mxu0 0.0
        %2547 = vmatprep.subr.mxu0 0.0
        %2548 = vmatpush2.msra.mxu0 0.0
        %2549 = vmatprep.subr.mxu0 0.0
        %2550 = vmatpush2.msra.mxu0 0.0
        %2551 = vmatprep.subr.mxu0 0.0
        %2552 = vmatpush2.msra.mxu0 0.0
        %2553 = vmatprep.subr.mxu0 0.0
        %2554 = vmatpush2.msra.mxu0 0.0
        %2555 = vmatprep.subr.mxu0 0.0
        %2556 = vmatpush2.msra.mxu0 0.0
        %2557 = vmatprep.subr.mxu0 0.0
        %2558 = vmatpush2.msra.mxu0 0.0
        %2559 = vmatprep.subr.mxu0 0.0
        %2560 = vmatpush2.msra.mxu0 0.0
        %2561 = vmatprep.subr.mxu0 0.0
        %2562 = vmatpush2.msra.mxu0 0.0
        %2563 = vmatprep.subr.mxu0 0.0
        %2564 = vmatpush2.msra.mxu0 0.0
        %2565 = vmatprep.subr.mxu0 0.0
        %2566 = vmatpush2.msra.mxu0 0.0
        %2567 = vmatprep.subr.mxu0 0.0
        %2568 = vmatpush2.msra.mxu0 0.0
        %2569 = vmatprep.subr.mxu0 0.0
        %2570 = vmatpush2.msra.mxu0 0.0
        %2571 = vmatprep.subr.mxu0 0.0
        %2572 = vmatpush2.msra.mxu0 0.0
        %2573 = vmatprep.mubr.f32.mxu0 0.0
        %2574 = vmatmul.mubr.f32.gmra.mxu0 %v515
        %v2575 = vpop.f32.mrf.mxu0
        %v2576 = vadd.f32 %v2270, %v2575
        %v2577 = vpop.f32.mrf.mxu0
        %v2578 = vadd.f32 %v2272, %v2577
        %2579 = vmatprep.mubr.f32.mxu0 0.0
        %2580 = vmatmul.mubr.f32.gmra.mxu0 %v516
        %v2581 = vpop.f32.mrf.mxu0
        %v2582 = vadd.f32 %v2276, %v2581
        %v2583 = vpop.f32.mrf.mxu0
        %v2584 = vadd.f32 %v2278, %v2583
        %2585 = vmatprep.mubr.f32.mxu0 0.0
        %2586 = vmatmul.mubr.f32.gmra.mxu0 %v517
        %v2587 = vpop.f32.mrf.mxu0
        %v2588 = vadd.f32 %v2282, %v2587
        %v2589 = vpop.f32.mrf.mxu0
        %v2590 = vadd.f32 %v2284, %v2589
        %2591 = vmatprep.mubr.f32.mxu0 0.0
        %2592 = vmatmul.mubr.f32.gmra.mxu0 %v518
        %v2593 = vpop.f32.mrf.mxu0
        %v2594 = vadd.f32 %v2288, %v2593
        %v2595 = vpop.f32.mrf.mxu0
        %v2596 = vadd.f32 %v2290, %v2595
        %2597 = vmatprep.mubr.f32.mxu0 0.0
        %2598 = vmatmul.mubr.f32.gmra.mxu0 %v519
        %v2599 = vpop.f32.mrf.mxu0
        %v2600 = vadd.f32 %v2294, %v2599
        %v2601 = vpop.f32.mrf.mxu0
        %v2602 = vadd.f32 %v2296, %v2601
        %2603 = vmatprep.mubr.f32.mxu0 0.0
        %2604 = vmatmul.mubr.f32.gmra.mxu0 %v520
        %v2605 = vpop.f32.mrf.mxu0
        %v2606 = vadd.f32 %v2300, %v2605
        %v2607 = vpop.f32.mrf.mxu0
        %v2608 = vadd.f32 %v2302, %v2607
        %2609 = vmatprep.mubr.f32.mxu0 0.0
        %2610 = vmatmul.mubr.f32.gmra.mxu0 %v521
        %v2611 = vpop.f32.mrf.mxu0
        %v2612 = vadd.f32 %v2306, %v2611
        %v2613 = vpop.f32.mrf.mxu0
        %v2614 = vadd.f32 %v2308, %v2613
        %2615 = vmatprep.mubr.f32.mxu0 0.0
        %2616 = vmatmul.mubr.f32.gmra.mxu0 %v522
        %v2617 = vpop.f32.mrf.mxu0
        %v2618 = vadd.f32 %v2312, %v2617
        %v2619 = vpop.f32.mrf.mxu0
        %v2620 = vadd.f32 %v2314, %v2619
        %2621 = vmatprep.mubr.f32.mxu0 0.0
        %2622 = vmatmul.mubr.f32.gmra.mxu0 %v523
        %v2623 = vpop.f32.mrf.mxu0
        %v2624 = vadd.f32 %v2318, %v2623
        %v2625 = vpop.f32.mrf.mxu0
        %v2626 = vadd.f32 %v2320, %v2625
        %2627 = vmatprep.mubr.f32.mxu0 0.0
        %2628 = vmatmul.mubr.f32.gmra.mxu0 %v524
        %v2629 = vpop.f32.mrf.mxu0
        %v2630 = vadd.f32 %v2324, %v2629
        %v2631 = vpop.f32.mrf.mxu0
        %v2632 = vadd.f32 %v2326, %v2631
        %2633 = vmatprep.mubr.f32.mxu0 0.0
        %2634 = vmatmul.mubr.f32.gmra.mxu0 %v525
        %v2635 = vpop.f32.mrf.mxu0
        %v2636 = vadd.f32 %v2330, %v2635
        %v2637 = vpop.f32.mrf.mxu0
        %v2638 = vadd.f32 %v2332, %v2637
        %2639 = vmatprep.mubr.f32.mxu0 0.0
        %2640 = vmatmul.mubr.f32.gmra.mxu0 %v526
        %v2641 = vpop.f32.mrf.mxu0
        %v2642 = vadd.f32 %v2336, %v2641
        %v2643 = vpop.f32.mrf.mxu0
        %v2644 = vadd.f32 %v2338, %v2643
        %2645 = vmatprep.mubr.f32.mxu0 0.0
        %2646 = vmatmul.mubr.f32.gmra.mxu0 %v527
        %v2647 = vpop.f32.mrf.mxu0
        %v2648 = vadd.f32 %v2342, %v2647
        %v2649 = vpop.f32.mrf.mxu0
        %v2650 = vadd.f32 %v2344, %v2649
        %2651 = vmatprep.mubr.f32.mxu0 0.0
        %2652 = vmatmul.mubr.f32.gmra.mxu0 %v528
        %v2653 = vpop.f32.mrf.mxu0
        %v2654 = vadd.f32 %v2348, %v2653
        %v2655 = vpop.f32.mrf.mxu0
        %v2656 = vadd.f32 %v2350, %v2655
        %2657 = vmatprep.mubr.f32.mxu0 0.0
        %2658 = vmatmul.mubr.f32.gmra.mxu0 %v529
        %v2659 = vpop.f32.mrf.mxu0
        %v2660 = vadd.f32 %v2354, %v2659
        %v2661 = vpop.f32.mrf.mxu0
        %v2662 = vadd.f32 %v2356, %v2661
        %2663 = vmatprep.mubr.f32.mxu0 0.0
        %2664 = vmatmul.mubr.f32.gmra.mxu0 %v530
        %v2665 = vpop.f32.mrf.mxu0
        %v2666 = vadd.f32 %v2360, %v2665
        %v2667 = vpop.f32.mrf.mxu0
        %v2668 = vadd.f32 %v2362, %v2667
        %2669 = vdwg.mxu0
        %2670 = vmatprep.subr.mxu0 0.0
        %2671 = vmatpush1.msra.mxu0 %v2121
        %2672 = vmatprep.subr.mxu0 0.0
        %2673 = vmatpush1.msra.mxu0 %v2116
        %2674 = vmatprep.subr.mxu0 0.0
        %2675 = vmatpush1.msra.mxu0 %v2111
        %2676 = vmatprep.subr.mxu0 0.0
        %2677 = vmatpush1.msra.mxu0 %v2106
        %2678 = vmatprep.subr.mxu0 0.0
        %2679 = vmatpush1.msra.mxu0 %v2101
        %2680 = vmatprep.subr.mxu0 0.0
        %2681 = vmatpush1.msra.mxu0 %v2096
        %2682 = vmatprep.subr.mxu0 0.0
        %2683 = vmatpush1.msra.mxu0 %v2091
        %2684 = vmatprep.subr.mxu0 0.0
        %2685 = vmatpush1.msra.mxu0 %v2086
        %2686 = vmatprep.subr.mxu0 0.0
        %2687 = vmatpush1.msra.mxu0 %v2081
        %2688 = vmatprep.subr.mxu0 0.0
        %2689 = vmatpush1.msra.mxu0 %v2076
        %2690 = vmatprep.subr.mxu0 0.0
        %2691 = vmatpush1.msra.mxu0 %v2071
        %2692 = vmatprep.subr.mxu0 0.0
        %2693 = vmatpush1.msra.mxu0 %v2066
        %2694 = vmatprep.subr.mxu0 0.0
        %2695 = vmatpush1.msra.mxu0 %v2061
        %2696 = vmatprep.subr.mxu0 0.0
        %2697 = vmatpush1.msra.mxu0 %v2056
        %2698 = vmatprep.subr.mxu0 0.0
        %2699 = vmatpush1.msra.mxu0 %v2051
        %2700 = vmatprep.subr.mxu0 0.0
        %2701 = vmatpush1.msra.mxu0 %v2046
        %2702 = vmatprep.subr.mxu0 0.0
        %2703 = vmatpush2.msra.mxu0 0.0
        %2704 = vmatprep.subr.mxu0 0.0
        %2705 = vmatpush2.msra.mxu0 0.0
        %2706 = vmatprep.subr.mxu0 0.0
        %2707 = vmatpush2.msra.mxu0 0.0
        %2708 = vmatprep.subr.mxu0 0.0
        %2709 = vmatpush2.msra.mxu0 0.0
        %2710 = vmatprep.subr.mxu0 0.0
        %2711 = vmatpush2.msra.mxu0 0.0
        %2712 = vmatprep.subr.mxu0 0.0
        %2713 = vmatpush2.msra.mxu0 0.0
        %2714 = vmatprep.subr.mxu0 0.0
        %2715 = vmatpush2.msra.mxu0 0.0
        %2716 = vmatprep.subr.mxu0 0.0
        %2717 = vmatpush2.msra.mxu0 0.0
        %2718 = vmatprep.subr.mxu0 0.0
        %2719 = vmatpush2.msra.mxu0 0.0
        %2720 = vmatprep.subr.mxu0 0.0
        %2721 = vmatpush2.msra.mxu0 0.0
        %2722 = vmatprep.subr.mxu0 0.0
        %2723 = vmatpush2.msra.mxu0 0.0
        %2724 = vmatprep.subr.mxu0 0.0
        %2725 = vmatpush2.msra.mxu0 0.0
        %2726 = vmatprep.subr.mxu0 0.0
        %2727 = vmatpush2.msra.mxu0 0.0
        %2728 = vmatprep.subr.mxu0 0.0
        %2729 = vmatpush2.msra.mxu0 0.0
        %2730 = vmatprep.subr.mxu0 0.0
        %2731 = vmatpush2.msra.mxu0 0.0
        %2732 = vmatprep.subr.mxu0 0.0
        %2733 = vmatpush2.msra.mxu0 0.0
        %2734 = vmatprep.mubr.f32.mxu0 0.0
        %2735 = vmatmul.mubr.f32.gmra.mxu0 %v515
        %v2736 = vpop.f32.mrf.mxu0
        %v2737 = vadd.f32 %v2431, %v2736
        %v2738 = vpop.f32.mrf.mxu0
        %2739 = vmatprep.mubr.f32.mxu0 0.0
        %2740 = vmatmul.mubr.f32.gmra.mxu0 %v516
        %v2741 = vpop.f32.mrf.mxu0
        %v2742 = vadd.f32 %v2436, %v2741
        %v2743 = vpop.f32.mrf.mxu0
        %2744 = vmatprep.mubr.f32.mxu0 0.0
        %2745 = vmatmul.mubr.f32.gmra.mxu0 %v517
        %v2746 = vpop.f32.mrf.mxu0
        %v2747 = vadd.f32 %v2441, %v2746
        %v2748 = vpop.f32.mrf.mxu0
        %2749 = vmatprep.mubr.f32.mxu0 0.0
        %2750 = vmatmul.mubr.f32.gmra.mxu0 %v518
        %v2751 = vpop.f32.mrf.mxu0
        %v2752 = vadd.f32 %v2446, %v2751
        %v2753 = vpop.f32.mrf.mxu0
        %2754 = vmatprep.mubr.f32.mxu0 0.0
        %2755 = vmatmul.mubr.f32.gmra.mxu0 %v519
        %v2756 = vpop.f32.mrf.mxu0
        %v2757 = vadd.f32 %v2451, %v2756
        %v2758 = vpop.f32.mrf.mxu0
        %2759 = vmatprep.mubr.f32.mxu0 0.0
        %2760 = vmatmul.mubr.f32.gmra.mxu0 %v520
        %v2761 = vpop.f32.mrf.mxu0
        %v2762 = vadd.f32 %v2456, %v2761
        %v2763 = vpop.f32.mrf.mxu0
        %2764 = vmatprep.mubr.f32.mxu0 0.0
        %2765 = vmatmul.mubr.f32.gmra.mxu0 %v521
        %v2766 = vpop.f32.mrf.mxu0
        %v2767 = vadd.f32 %v2461, %v2766
        %v2768 = vpop.f32.mrf.mxu0
        %2769 = vmatprep.mubr.f32.mxu0 0.0
        %2770 = vmatmul.mubr.f32.gmra.mxu0 %v522
        %v2771 = vpop.f32.mrf.mxu0
        %v2772 = vadd.f32 %v2466, %v2771
        %v2773 = vpop.f32.mrf.mxu0
        %2774 = vmatprep.mubr.f32.mxu0 0.0
        %2775 = vmatmul.mubr.f32.gmra.mxu0 %v523
        %v2776 = vpop.f32.mrf.mxu0
        %v2777 = vadd.f32 %v2471, %v2776
        %v2778 = vpop.f32.mrf.mxu0
        %2779 = vmatprep.mubr.f32.mxu0 0.0
        %2780 = vmatmul.mubr.f32.gmra.mxu0 %v524
        %v2781 = vpop.f32.mrf.mxu0
        %v2782 = vadd.f32 %v2476, %v2781
        %v2783 = vpop.f32.mrf.mxu0
        %2784 = vmatprep.mubr.f32.mxu0 0.0
        %2785 = vmatmul.mubr.f32.gmra.mxu0 %v525
        %v2786 = vpop.f32.mrf.mxu0
        %v2787 = vadd.f32 %v2481, %v2786
        %v2788 = vpop.f32.mrf.mxu0
        %2789 = vmatprep.mubr.f32.mxu0 0.0
        %2790 = vmatmul.mubr.f32.gmra.mxu0 %v526
        %v2791 = vpop.f32.mrf.mxu0
        %v2792 = vadd.f32 %v2486, %v2791
        %v2793 = vpop.f32.mrf.mxu0
        %2794 = vmatprep.mubr.f32.mxu0 0.0
        %2795 = vmatmul.mubr.f32.gmra.mxu0 %v527
        %v2796 = vpop.f32.mrf.mxu0
        %v2797 = vadd.f32 %v2491, %v2796
        %v2798 = vpop.f32.mrf.mxu0
        %2799 = vmatprep.mubr.f32.mxu0 0.0
        %2800 = vmatmul.mubr.f32.gmra.mxu0 %v528
        %v2801 = vpop.f32.mrf.mxu0
        %v2802 = vadd.f32 %v2496, %v2801
        %v2803 = vpop.f32.mrf.mxu0
        %2804 = vmatprep.mubr.f32.mxu0 0.0
        %2805 = vmatmul.mubr.f32.gmra.mxu0 %v529
        %v2806 = vpop.f32.mrf.mxu0
        %v2807 = vadd.f32 %v2501, %v2806
        %v2808 = vpop.f32.mrf.mxu0
        %2809 = vmatprep.mubr.f32.mxu0 0.0
        %2810 = vmatmul.mubr.f32.gmra.mxu0 %v530
        %v2811 = vpop.f32.mrf.mxu0
        %v2812 = vadd.f32 %v2506, %v2811
        %v2813 = vpop.f32.mrf.mxu0
        %2814 = vdwg.mxu0
        %v2815 = vld [vmem:[#allocation2] sm:$0xff]
        %v2816 = vld [vmem:[#allocation2 + $0x8] sm:$0xff]
        %v2817 = vld [vmem:[#allocation2 + $0x10] sm:$0xff]
        %v2818 = vld [vmem:[#allocation2 + $0x18] sm:$0xff]
        %v2819 = vld [vmem:[#allocation2 + $0x20] sm:$0xff]
        %v2820 = vld [vmem:[#allocation2 + $0x28] sm:$0xff]
        %v2821 = vld [vmem:[#allocation2 + $0x30] sm:$0xff]
        %v2822 = vld [vmem:[#allocation2 + $0x38] sm:$0xff]
        %v2823 = vld [vmem:[#allocation2 + $0x40] sm:$0xff]
        %v2824 = vld [vmem:[#allocation2 + $0x48] sm:$0xff]
        %v2825 = vld [vmem:[#allocation2 + $0x50] sm:$0xff]
        %v2826 = vld [vmem:[#allocation2 + $0x58] sm:$0xff]
        %v2827 = vld [vmem:[#allocation2 + $0x60] sm:$0xff]
        %v2828 = vld [vmem:[#allocation2 + $0x68] sm:$0xff]
        %v2829 = vld [vmem:[#allocation2 + $0x70] sm:$0xff]
        %v2830 = vld [vmem:[#allocation2 + $0x78] sm:$0xff]
        %v2831 = vmul.f32 %v2576, %v2576
        %v2832 = vmul.f32 %v2582, %v2582
        %v2833 = vmul.f32 %v2588, %v2588
        %v2834 = vmul.f32 %v2594, %v2594
        %v2835 = vmul.f32 %v2600, %v2600
        %v2836 = vmul.f32 %v2606, %v2606
        %v2837 = vmul.f32 %v2612, %v2612
        %v2838 = vmul.f32 %v2618, %v2618
        %v2839 = vmul.f32 %v2624, %v2624
        %v2840 = vmul.f32 %v2630, %v2630
        %v2841 = vmul.f32 %v2636, %v2636
        %v2842 = vmul.f32 %v2642, %v2642
        %v2843 = vmul.f32 %v2648, %v2648
        %v2844 = vmul.f32 %v2654, %v2654
        %v2845 = vmul.f32 %v2660, %v2660
        %v2846 = vmul.f32 %v2666, %v2666
        %v2847 = vsub.f32 %v2578, %v2831
        %v2848 = vsub.f32 %v2584, %v2832
        %v2849 = vsub.f32 %v2590, %v2833
        %v2850 = vsub.f32 %v2596, %v2834
        %v2851 = vsub.f32 %v2602, %v2835
        %v2852 = vsub.f32 %v2608, %v2836
        %v2853 = vsub.f32 %v2614, %v2837
        %v2854 = vsub.f32 %v2620, %v2838
        %v2855 = vsub.f32 %v2626, %v2839
        %v2856 = vsub.f32 %v2632, %v2840
        %v2857 = vsub.f32 %v2638, %v2841
        %v2858 = vsub.f32 %v2644, %v2842
        %v2859 = vsub.f32 %v2650, %v2843
        %v2860 = vsub.f32 %v2656, %v2844
        %v2861 = vsub.f32 %v2662, %v2845
        %v2862 = vsub.f32 %v2668, %v2846
        %v2863 = vmul.f32 %v2815, %v2576
        %v2864 = vmul.f32 %v2816, %v2582
        %v2865 = vmul.f32 %v2817, %v2588
        %v2866 = vmul.f32 %v2818, %v2594
        %v2867 = vmul.f32 %v2819, %v2600
        %v2868 = vmul.f32 %v2820, %v2606
        %v2869 = vmul.f32 %v2821, %v2612
        %v2870 = vmul.f32 %v2822, %v2618
        %v2871 = vmul.f32 %v2823, %v2624
        %v2872 = vmul.f32 %v2824, %v2630
        %v2873 = vmul.f32 %v2825, %v2636
        %v2874 = vmul.f32 %v2826, %v2642
        %v2875 = vmul.f32 %v2827, %v2648
        %v2876 = vmul.f32 %v2828, %v2654
        %v2877 = vmul.f32 %v2829, %v2660
        %v2878 = vmul.f32 %v2830, %v2666
        %v2879 = vsub.f32 %v2737, %v2863
        %v2880 = vsub.f32 %v2742, %v2864
        %v2881 = vsub.f32 %v2747, %v2865
        %v2882 = vsub.f32 %v2752, %v2866
        %v2883 = vsub.f32 %v2757, %v2867
        %v2884 = vsub.f32 %v2762, %v2868
        %v2885 = vsub.f32 %v2767, %v2869
        %v2886 = vsub.f32 %v2772, %v2870
        %v2887 = vsub.f32 %v2777, %v2871
        %v2888 = vsub.f32 %v2782, %v2872
        %v2889 = vsub.f32 %v2787, %v2873
        %v2890 = vsub.f32 %v2792, %v2874
        %v2891 = vsub.f32 %v2797, %v2875
        %v2892 = vsub.f32 %v2802, %v2876
        %v2893 = vsub.f32 %v2807, %v2877
        %v2894 = vsub.f32 %v2812, %v2878
        %v2895 = vmul.f32 %v2879, 2.0
        %v2896 = vmul.f32 %v2880, 2.0
        %v2897 = vmul.f32 %v2881, 2.0
        %v2898 = vmul.f32 %v2882, 2.0
        %v2899 = vmul.f32 %v2883, 2.0
        %v2900 = vmul.f32 %v2884, 2.0
        %v2901 = vmul.f32 %v2885, 2.0
        %v2902 = vmul.f32 %v2886, 2.0
        %v2903 = vmul.f32 %v2887, 2.0
        %v2904 = vmul.f32 %v2888, 2.0
        %v2905 = vmul.f32 %v2889, 2.0
        %v2906 = vmul.f32 %v2890, 2.0
        %v2907 = vmul.f32 %v2891, 2.0
        %v2908 = vmul.f32 %v2892, 2.0
        %v2909 = vmul.f32 %v2893, 2.0
        %v2910 = vmul.f32 %v2894, 2.0
        %v2911 = vadd.f32 %v2895, 0.0009
        %v2912 = vadd.f32 %v2896, 0.0009
        %v2913 = vadd.f32 %v2897, 0.0009
        %v2914 = vadd.f32 %v2898, 0.0009
        %v2915 = vadd.f32 %v2899, 0.0009
        %v2916 = vadd.f32 %v2900, 0.0009
        %v2917 = vadd.f32 %v2901, 0.0009
        %v2918 = vadd.f32 %v2902, 0.0009
        %v2919 = vadd.f32 %v2903, 0.0009
        %v2920 = vadd.f32 %v2904, 0.0009
        %v2921 = vadd.f32 %v2905, 0.0009
        %v2922 = vadd.f32 %v2906, 0.0009
        %v2923 = vadd.f32 %v2907, 0.0009
        %v2924 = vadd.f32 %v2908, 0.0009
        %v2925 = vadd.f32 %v2909, 0.0009
        %v2926 = vadd.f32 %v2910, 0.0009
        %v2927 = vld [vmem:[#allocation3] sm:$0xff]
        %v2928 = vld [vmem:[#allocation3 + $0x8] sm:$0xff]
        %v2929 = vld [vmem:[#allocation3 + $0x10] sm:$0xff]
        %v2930 = vld [vmem:[#allocation3 + $0x18] sm:$0xff]
        %v2931 = vld [vmem:[#allocation3 + $0x20] sm:$0xff]
        %v2932 = vld [vmem:[#allocation3 + $0x28] sm:$0xff]
        %v2933 = vld [vmem:[#allocation3 + $0x30] sm:$0xff]
        %v2934 = vld [vmem:[#allocation3 + $0x38] sm:$0xff]
        %v2935 = vld [vmem:[#allocation3 + $0x40] sm:$0xff]
        %v2936 = vld [vmem:[#allocation3 + $0x48] sm:$0xff]
        %v2937 = vld [vmem:[#allocation3 + $0x50] sm:$0xff]
        %v2938 = vld [vmem:[#allocation3 + $0x58] sm:$0xff]
        %v2939 = vld [vmem:[#allocation3 + $0x60] sm:$0xff]
        %v2940 = vld [vmem:[#allocation3 + $0x68] sm:$0xff]
        %v2941 = vld [vmem:[#allocation3 + $0x70] sm:$0xff]
        %v2942 = vld [vmem:[#allocation3 + $0x78] sm:$0xff]
        %v2943 = vadd.f32 %v2927, %v2847
        %v2944 = vadd.f32 %v2928, %v2848
        %v2945 = vadd.f32 %v2929, %v2849
        %v2946 = vadd.f32 %v2930, %v2850
        %v2947 = vadd.f32 %v2931, %v2851
        %v2948 = vadd.f32 %v2932, %v2852
        %v2949 = vadd.f32 %v2933, %v2853
        %v2950 = vadd.f32 %v2934, %v2854
        %v2951 = vadd.f32 %v2935, %v2855
        %v2952 = vadd.f32 %v2936, %v2856
        %v2953 = vadd.f32 %v2937, %v2857
        %v2954 = vadd.f32 %v2938, %v2858
        %v2955 = vadd.f32 %v2939, %v2859
        %v2956 = vadd.f32 %v2940, %v2860
        %v2957 = vadd.f32 %v2941, %v2861
        %v2958 = vadd.f32 %v2942, %v2862
        %v2959 = vadd.f32 %v2943, 0.0009
        %v2960 = vadd.f32 %v2944, 0.0009
        %v2961 = vadd.f32 %v2945, 0.0009
        %v2962 = vadd.f32 %v2946, 0.0009
        %v2963 = vadd.f32 %v2947, 0.0009
        %v2964 = vadd.f32 %v2948, 0.0009
        %v2965 = vadd.f32 %v2949, 0.0009
        %v2966 = vadd.f32 %v2950, 0.0009
        %v2967 = vadd.f32 %v2951, 0.0009
        %v2968 = vadd.f32 %v2952, 0.0009
        %v2969 = vadd.f32 %v2953, 0.0009
        %v2970 = vadd.f32 %v2954, 0.0009
        %v2971 = vadd.f32 %v2955, 0.0009
        %v2972 = vadd.f32 %v2956, 0.0009
        %v2973 = vadd.f32 %v2957, 0.0009
        %v2974 = vadd.f32 %v2958, 0.0009
        %v2975 = vmax.f32 %v2959, 1e-06
        %v2976 = vmax.f32 %v2960, 1e-06
        %v2977 = vmax.f32 %v2961, 1e-06
        %v2978 = vmax.f32 %v2962, 1e-06
        %v2979 = vmax.f32 %v2963, 1e-06
        %v2980 = vmax.f32 %v2964, 1e-06
        %v2981 = vmax.f32 %v2965, 1e-06
        %v2982 = vmax.f32 %v2966, 1e-06
        %v2983 = vmax.f32 %v2967, 1e-06
        %v2984 = vmax.f32 %v2968, 1e-06
        %v2985 = vmax.f32 %v2969, 1e-06
        %v2986 = vmax.f32 %v2970, 1e-06
        %v2987 = vmax.f32 %v2971, 1e-06
        %v2988 = vmax.f32 %v2972, 1e-06
        %v2989 = vmax.f32 %v2973, 1e-06
        %v2990 = vmax.f32 %v2974, 1e-06
        %v2991 = vrcp.pop %v2975
        %v2992 = vrcp.pop %v2976
        %v2993 = vrcp.pop %v2977
        %v2994 = vrcp.pop %v2978
        %v2995 = vrcp.pop %v2979
        %v2996 = vrcp.pop %v2980
        %v2997 = vrcp.pop %v2981
        %v2998 = vrcp.pop %v2982
        %v2999 = vrcp.pop %v2983
        %v3000 = vrcp.pop %v2984
        %v3001 = vrcp.pop %v2985
        %v3002 = vrcp.pop %v2986
        %v3003 = vrcp.pop %v2987
        %v3004 = vrcp.pop %v2988
        %v3005 = vrcp.pop %v2989
        %v3006 = vrcp.pop %v2990
        %v3007 = vmul.f32 %v2911, %v2991
        %v3008 = vmul.f32 %v2912, %v2992
        %v3009 = vmul.f32 %v2913, %v2993
        %v3010 = vmul.f32 %v2914, %v2994
        %v3011 = vmul.f32 %v2915, %v2995
        %v3012 = vmul.f32 %v2916, %v2996
        %v3013 = vmul.f32 %v2917, %v2997
        %v3014 = vmul.f32 %v2918, %v2998
        %v3015 = vmul.f32 %v2919, %v2999
        %v3016 = vmul.f32 %v2920, %v3000
        %v3017 = vmul.f32 %v2921, %v3001
        %v3018 = vmul.f32 %v2922, %v3002
        %v3019 = vmul.f32 %v2923, %v3003
        %v3020 = vmul.f32 %v2924, %v3004
        %v3021 = vmul.f32 %v2925, %v3005
        %v3022 = vmul.f32 %v2926, %v3006
        %v3023 = vld [vmem:[#allocation4] sm:$0xff]
        %v3024 = vld [vmem:[#allocation4 + $0x8] sm:$0xff]
        %v3025 = vld [vmem:[#allocation4 + $0x10] sm:$0xff]
        %v3026 = vld [vmem:[#allocation4 + $0x18] sm:$0xff]
        %v3027 = vld [vmem:[#allocation4 + $0x20] sm:$0xff]
        %v3028 = vld [vmem:[#allocation4 + $0x28] sm:$0xff]
        %v3029 = vld [vmem:[#allocation4 + $0x30] sm:$0xff]
        %v3030 = vld [vmem:[#allocation4 + $0x38] sm:$0xff]
        %v3031 = vld [vmem:[#allocation4 + $0x40] sm:$0xff]
        %v3032 = vld [vmem:[#allocation4 + $0x48] sm:$0xff]
        %v3033 = vld [vmem:[#allocation4 + $0x50] sm:$0xff]
        %v3034 = vld [vmem:[#allocation4 + $0x58] sm:$0xff]
        %v3035 = vld [vmem:[#allocation4 + $0x60] sm:$0xff]
        %v3036 = vld [vmem:[#allocation4 + $0x68] sm:$0xff]
        %v3037 = vld [vmem:[#allocation4 + $0x70] sm:$0xff]
        %v3038 = vld [vmem:[#allocation4 + $0x78] sm:$0xff]
        %vm3039 = vcmp.gt.f32.partialorder %v2847, %v3023
        %vm3040 = vcmp.gt.f32.partialorder %v2848, %v3024
        %vm3041 = vcmp.gt.f32.partialorder %v2849, %v3025
        %vm3042 = vcmp.gt.f32.partialorder %v2850, %v3026
        %vm3043 = vcmp.gt.f32.partialorder %v2851, %v3027
        %vm3044 = vcmp.gt.f32.partialorder %v2852, %v3028
        %vm3045 = vcmp.gt.f32.partialorder %v2853, %v3029
        %vm3046 = vcmp.gt.f32.partialorder %v2854, %v3030
        %vm3047 = vcmp.gt.f32.partialorder %v2855, %v3031
        %vm3048 = vcmp.gt.f32.partialorder %v2856, %v3032
        %vm3049 = vcmp.gt.f32.partialorder %v2857, %v3033
        %vm3050 = vcmp.gt.f32.partialorder %v2858, %v3034
        %vm3051 = vcmp.gt.f32.partialorder %v2859, %v3035
        %vm3052 = vcmp.gt.f32.partialorder %v2860, %v3036
        %vm3053 = vcmp.gt.f32.partialorder %v2861, %v3037
        %vm3054 = vcmp.gt.f32.partialorder %v2862, %v3038
        %v3055 = vld [vmem:[#allocation5] sm:$0xff]
        %v3056 = vld [vmem:[#allocation5 + $0x8] sm:$0xff]
        %v3057 = vld [vmem:[#allocation5 + $0x10] sm:$0xff]
        %v3058 = vld [vmem:[#allocation5 + $0x18] sm:$0xff]
        %v3059 = vld [vmem:[#allocation5 + $0x20] sm:$0xff]
        %v3060 = vld [vmem:[#allocation5 + $0x28] sm:$0xff]
        %v3061 = vld [vmem:[#allocation5 + $0x30] sm:$0xff]
        %v3062 = vld [vmem:[#allocation5 + $0x38] sm:$0xff]
        %v3063 = vld [vmem:[#allocation5 + $0x40] sm:$0xff]
        %v3064 = vld [vmem:[#allocation5 + $0x48] sm:$0xff]
        %v3065 = vld [vmem:[#allocation5 + $0x50] sm:$0xff]
        %v3066 = vld [vmem:[#allocation5 + $0x58] sm:$0xff]
        %v3067 = vld [vmem:[#allocation5 + $0x60] sm:$0xff]
        %v3068 = vld [vmem:[#allocation5 + $0x68] sm:$0xff]
        %v3069 = vld [vmem:[#allocation5 + $0x70] sm:$0xff]
        %v3070 = vld [vmem:[#allocation5 + $0x78] sm:$0xff]
        %v3071 = vsel %vm3039, %v3007, %v3055
        %v3072 = vsel %vm3040, %v3008, %v3056
        %v3073 = vsel %vm3041, %v3009, %v3057
        %v3074 = vsel %vm3042, %v3010, %v3058
        %v3075 = vsel %vm3043, %v3011, %v3059
        %v3076 = vsel %vm3044, %v3012, %v3060
        %v3077 = vsel %vm3045, %v3013, %v3061
        %v3078 = vsel %vm3046, %v3014, %v3062
        %v3079 = vsel %vm3047, %v3015, %v3063
        %v3080 = vsel %vm3048, %v3016, %v3064
        %v3081 = vsel %vm3049, %v3017, %v3065
        %v3082 = vsel %vm3050, %v3018, %v3066
        %v3083 = vsel %vm3051, %v3019, %v3067
        %v3084 = vsel %vm3052, %v3020, %v3068
        %v3085 = vsel %vm3053, %v3021, %v3069
        %v3086 = vsel %vm3054, %v3022, %v3070
        %3087 = vst [vmem:[#allocation5] sm:$0xff] %v3071
        %3088 = vst [vmem:[#allocation5 + $0x8] sm:$0xff] %v3072
        %3089 = vst [vmem:[#allocation5 + $0x10] sm:$0xff] %v3073
        %3090 = vst [vmem:[#allocation5 + $0x18] sm:$0xff] %v3074
        %3091 = vst [vmem:[#allocation5 + $0x20] sm:$0xff] %v3075
        %3092 = vst [vmem:[#allocation5 + $0x28] sm:$0xff] %v3076
        %3093 = vst [vmem:[#allocation5 + $0x30] sm:$0xff] %v3077
        %3094 = vst [vmem:[#allocation5 + $0x38] sm:$0xff] %v3078
        %3095 = vst [vmem:[#allocation5 + $0x40] sm:$0xff] %v3079
        %3096 = vst [vmem:[#allocation5 + $0x48] sm:$0xff] %v3080
        %3097 = vst [vmem:[#allocation5 + $0x50] sm:$0xff] %v3081
        %3098 = vst [vmem:[#allocation5 + $0x58] sm:$0xff] %v3082
        %3099 = vst [vmem:[#allocation5 + $0x60] sm:$0xff] %v3083
        %3100 = vst [vmem:[#allocation5 + $0x68] sm:$0xff] %v3084
        %3101 = vst [vmem:[#allocation5 + $0x70] sm:$0xff] %v3085
        %3102 = vst [vmem:[#allocation5 + $0x78] sm:$0xff] %v3086
        %v3103 = vld [vmem:[#allocation4] sm:$0xff]
        %v3104 = vld [vmem:[#allocation4 + $0x8] sm:$0xff]
        %v3105 = vld [vmem:[#allocation4 + $0x10] sm:$0xff]
        %v3106 = vld [vmem:[#allocation4 + $0x18] sm:$0xff]
        %v3107 = vld [vmem:[#allocation4 + $0x20] sm:$0xff]
        %v3108 = vld [vmem:[#allocation4 + $0x28] sm:$0xff]
        %v3109 = vld [vmem:[#allocation4 + $0x30] sm:$0xff]
        %v3110 = vld [vmem:[#allocation4 + $0x38] sm:$0xff]
        %v3111 = vld [vmem:[#allocation4 + $0x40] sm:$0xff]
        %v3112 = vld [vmem:[#allocation4 + $0x48] sm:$0xff]
        %v3113 = vld [vmem:[#allocation4 + $0x50] sm:$0xff]
        %v3114 = vld [vmem:[#allocation4 + $0x58] sm:$0xff]
        %v3115 = vld [vmem:[#allocation4 + $0x60] sm:$0xff]
        %v3116 = vld [vmem:[#allocation4 + $0x68] sm:$0xff]
        %v3117 = vld [vmem:[#allocation4 + $0x70] sm:$0xff]
        %v3118 = vld [vmem:[#allocation4 + $0x78] sm:$0xff]
        %v3119 = vsel %vm3039, %v2847, %v3103
        %v3120 = vsel %vm3040, %v2848, %v3104
        %v3121 = vsel %vm3041, %v2849, %v3105
        %v3122 = vsel %vm3042, %v2850, %v3106
        %v3123 = vsel %vm3043, %v2851, %v3107
        %v3124 = vsel %vm3044, %v2852, %v3108
        %v3125 = vsel %vm3045, %v2853, %v3109
        %v3126 = vsel %vm3046, %v2854, %v3110
        %v3127 = vsel %vm3047, %v2855, %v3111
        %v3128 = vsel %vm3048, %v2856, %v3112
        %v3129 = vsel %vm3049, %v2857, %v3113
        %v3130 = vsel %vm3050, %v2858, %v3114
        %v3131 = vsel %vm3051, %v2859, %v3115
        %v3132 = vsel %vm3052, %v2860, %v3116
        %v3133 = vsel %vm3053, %v2861, %v3117
        %v3134 = vsel %vm3054, %v2862, %v3118
        %3135 = vst [vmem:[#allocation4] sm:$0xff] %v3119
        %3136 = vst [vmem:[#allocation4 + $0x8] sm:$0xff] %v3120
        %3137 = vst [vmem:[#allocation4 + $0x10] sm:$0xff] %v3121
        %3138 = vst [vmem:[#allocation4 + $0x18] sm:$0xff] %v3122
        %3139 = vst [vmem:[#allocation4 + $0x20] sm:$0xff] %v3123
        %3140 = vst [vmem:[#allocation4 + $0x28] sm:$0xff] %v3124
        %3141 = vst [vmem:[#allocation4 + $0x30] sm:$0xff] %v3125
        %3142 = vst [vmem:[#allocation4 + $0x38] sm:$0xff] %v3126
        %3143 = vst [vmem:[#allocation4 + $0x40] sm:$0xff] %v3127
        %3144 = vst [vmem:[#allocation4 + $0x48] sm:$0xff] %v3128
        %3145 = vst [vmem:[#allocation4 + $0x50] sm:$0xff] %v3129
        %3146 = vst [vmem:[#allocation4 + $0x58] sm:$0xff] %v3130
        %3147 = vst [vmem:[#allocation4 + $0x60] sm:$0xff] %v3131
        %3148 = vst [vmem:[#allocation4 + $0x68] sm:$0xff] %v3132
        %3149 = vst [vmem:[#allocation4 + $0x70] sm:$0xff] %v3133
        %3150 = vst [vmem:[#allocation4 + $0x78] sm:$0xff] %v3134
        %p3151 = scmp.eq.s32.totalorder %s36, 3
        // Predicated region
        $region77: #{tpu_custom_call.1} parent=47 // pred_check
          %p3152 = pneg %p3151
        $region78: #{tpu_custom_call.1} parent=47 // pred_check_branch
          %3154 = sbr.rel (%p3152) target = $region80
        $region79: #{tpu_custom_call.1} parent=47 // pred_region
          %v3155 = vld [vmem:[#allocation5] sm:$0xff]
          %v3156 = vld [vmem:[#allocation5 + $0x8] sm:$0xff]
          %v3157 = vld [vmem:[#allocation5 + $0x10] sm:$0xff]
          %v3158 = vld [vmem:[#allocation5 + $0x18] sm:$0xff]
          %v3159 = vld [vmem:[#allocation5 + $0x20] sm:$0xff]
          %v3160 = vld [vmem:[#allocation5 + $0x28] sm:$0xff]
          %v3161 = vld [vmem:[#allocation5 + $0x30] sm:$0xff]
          %v3162 = vld [vmem:[#allocation5 + $0x38] sm:$0xff]
          %v3163 = vld [vmem:[#allocation5 + $0x40] sm:$0xff]
          %v3164 = vld [vmem:[#allocation5 + $0x48] sm:$0xff]
          %v3165 = vld [vmem:[#allocation5 + $0x50] sm:$0xff]
          %v3166 = vld [vmem:[#allocation5 + $0x58] sm:$0xff]
          %v3167 = vld [vmem:[#allocation5 + $0x60] sm:$0xff]
          %v3168 = vld [vmem:[#allocation5 + $0x68] sm:$0xff]
          %v3169 = vld [vmem:[#allocation5 + $0x70] sm:$0xff]
          %v3170 = vld [vmem:[#allocation5 + $0x78] sm:$0xff]
          %v3171 = vadd.f32 %v3155, %v3156
          %v3172 = vadd.f32 %v3171, %v3157
          %v3173 = vadd.f32 %v3172, %v3158
          %v3174 = vadd.f32 %v3173, %v3159
          %v3175 = vadd.f32 %v3174, %v3160
          %v3176 = vadd.f32 %v3175, %v3161
          %v3177 = vadd.f32 %v3176, %v3162
          %v3178 = vadd.f32 %v3177, %v3163
          %v3179 = vadd.f32 %v3178, %v3164
          %v3180 = vadd.f32 %v3179, %v3165
          %v3181 = vadd.f32 %v3180, %v3166
          %v3182 = vadd.f32 %v3181, %v3167
          %v3183 = vadd.f32 %v3182, %v3168
          %v3184 = vadd.f32 %v3183, %v3169
          %v3185 = vadd.f32 %v3184, %v3170
          %3186 = vadd.xlane.f32.xlu0 %v3185
          %v3187 = vpop.xlane.xlu0 %3186
          %v3188 = vrot.slane %v3187, 4
          %v3189 = vadd.f32 %v3187, %v3188
          %v3190 = vrot.slane %v3189, 2
          %v3191 = vadd.f32 %v3189, %v3190
          %v3192 = vrot.slane %v3191, 1
          %v3193 = vadd.f32 %v3191, %v3192
          %s3194 = vtos %v3193
          %v3195 = vstv %s3194
          %v3196 = vadd.f32 %v3195, 0.0
          %3197 = vst [vmem:[%s512] sm:$0xff] %v3196
        $region80: #{tpu_custom_call.1} parent=47 // pred_fallthru
          _
        %s3198 = sand.u32 %s222, 1
        %s3199 = scalar_lea.sflag [#allocation8], %s3198
        %s3200 = sand.u32 %s222, 1
        %s3201 = smul.addr %s3200, 8
        %s3202 = scalar_lea.vmem [#allocation17], %s3201
        // Predicated region
        $region81: #{tpu_custom_call.1} parent=47 // pred_check
          %p3203 = pneg %p232
        $region82: #{tpu_custom_call.1} parent=47 // pred_check_branch
          %3205 = sbr.rel (%p3203) target = $region84
        $region83: #{tpu_custom_call.1} parent=47 // pred_region
          %s3207 = ssub.s32 128, 128
          %3208 = vsyncadd %s3199, %s3207
          %s3209 = smul.addr %s35, 128
          %s3210 = scalar_lea.hbm %s7, %s3209
          %s3212 = sshll.u32 %s3202, 4
          %s3213 = int_to_ptr.vmem [resolvable:$true] %s3212
          %3215 = dma.vmem_to_hbm [thread:$0]  %s3213, 128, %s3210, %s3199
        $region84: #{tpu_custom_call.1} parent=47 // pred_fallthru
          _
      $region48: #{tpu_custom_call.1} parent=5 // pred_fallthru
        _
      %p3216 = scmp.le.s32.totalorder 2, %s26
      // Predicated region
      $region85: #{tpu_custom_call.1} parent=5 // pred_check
        %p3217 = pneg %p3216
      $region86: #{tpu_custom_call.1} parent=5 // pred_check_branch
        %3219 = sbr.rel (%p3217) target = $region88
      $region87: #{tpu_custom_call.1} parent=5 // pred_region
        %s3220 = ssub.s32 %s26, 2
        // Predicated region
        $region89: #{tpu_custom_call.1} parent=87 // pred_check
          %p3221 = pneg %p238
        $region90: #{tpu_custom_call.1} parent=87 // pred_check_branch
          %3223 = sbr.rel (%p3221) target = $region92
        $region91: #{tpu_custom_call.1} parent=87 // pred_region
          %s3224 = sand.u32 %s223, 1
          %s3225 = scalar_lea.sflag [#allocation8], %s3224
          %s3226 = sand.u32 %s223, 1
          %s3227 = smul.addr %s3226, 8
          %s3228 = scalar_lea.vmem [#allocation17], %s3227
          %3229 = dma.done %s3225, 128
        $region92: #{tpu_custom_call.1} parent=87 // pred_fallthru
          _
      $region88: #{tpu_custom_call.1} parent=5 // pred_fallthru
        _
    $region6: #{tpu_custom_call.1} parent=1 // loop_footer
      %s30 = sadd.s32 1, %s26
    $region7: #{tpu_custom_call.1} parent=1 // loop_footer_branch
      %25 = sbr.rel target = $region3
    $region8: #{tpu_custom_call.1} parent=1 // loop_exit
      _
    %3230 = vsyncpa [#allocation7], 1
    %s3231 = scalar_lea.sflag [#allocation7], 1
    %3232 = vsyncpa %s3231, 1
    %3233 = vsyncpa [#allocation10], 1
    %s3234 = scalar_lea.sflag [#allocation10], 1
    %3235 = vsyncpa %s3234, 1
    %3236 = vsyncpa [#allocation13], 1
    %s3237 = scalar_lea.sflag [#allocation13], 1
    %3238 = vsyncpa %s3237, 1
    %3239 = vsyncpa [#allocation16], 1
    %3240 = vsyncpa [#allocation8], 1
    %s3241 = scalar_lea.sflag [#allocation8], 1
    %3242 = vsyncpa %s3241, 1

</llo_original>
